<compile_context>
chip_gen: v5e
topology: v5e:2x2
jax: 0.10.0
libtpu: 0.0.40
codegen_flags: <defaults>
</compile_context>

<pallas_src>
import functools

import jax
import jax.numpy as jnp
import numpy as np
from jax.experimental import pallas as pl
from jax.experimental.pallas import tpu as pltpu


def _round_up(n, m):
    return ((n + m - 1) // m) * m


def _time_chunk(T, max_chunk=8):
    """Largest divisor of T that is <= max_chunk (inner unroll factor)."""
    for c in range(min(T, max_chunk), 0, -1):
        if T % c == 0:
            return c
    return 1


def _pick_batch_tile(BP):
    """Rows per batch tile (multiple of 8); >=2 tiles once batch is large (megacore)."""
    for cand in (128, 64, 32, 16, 8):
        if BP > cand and BP % cand == 0:
            return cand
    return BP


def _vmem_limit_bytes(T, BBLK, D, HP, DP, cbytes):
    """Conservative per-core VMEM estimate for compiler_params (padded, +headroom)."""
    def padded(r, c, b):
        return _round_up(r, 8) * _round_up(c, 128) * b
    total = 0
    total += 2 * T * padded(BBLK, D, cbytes)      # x block (double-buffered)
    total += 2 * T * padded(BBLK, DP, 4)          # out block (double-buffered)
    total += padded(D, 4 * HP, cbytes)            # enc_wih
    total += 3 * padded(HP, 4 * HP, cbytes)       # enc_whh, dec_wih, dec_whh
    total += 2 * padded(1, 4 * HP, 4)             # folded biases (f32)
    total += padded(HP, DP, cbytes) + padded(1, DP, 4)   # fc
    total += T * padded(BBLK, HP, cbytes)         # hbuf scratch (bf16)
    return int(min(max(total * 3 // 2 + (4 << 20), 32 << 20), 112 << 20))


# ------------------------------------------------------------------ kernel ---

def _lstmae_kernel(x_ref, enc_wih_ref, enc_whh_ref, enc_b_ref,
                   dec_wih_ref, dec_whh_ref, dec_b_ref,
                   fc_w_ref, fc_b_ref,
                   out_ref, hbuf_ref, *, T, TC, BBLK, HP):
    """Whole LSTM-AE forward for one batch tile.

    x_ref:       (T, BBLK, D)   time-major batch tile            (compute dtype)
    *_wih/_whh:  (Din, 4*HP) / (HP, 4*HP)                        (compute dtype)
    *_b:         (1, 4*HP)      folded b_ih + b_hh               (float32)
    fc_w_ref:    (HP, DP), fc_b_ref: (1, DP)
    out_ref:     (T, BBLK, DP)  sigmoid(fc(decoder hidden))      (float32)
    hbuf_ref:    (T, BBLK, HP)  scratch: decoder hidden states   (compute dtype)
    """
    cdt = enc_wih_ref.dtype
    n_chunks = T // TC

    def gate_math(gates, c):
        # PyTorch gate order (i, f, g, o); HP % 128 == 0 -> lane-aligned slices.
        i = jax.nn.sigmoid(gates[:, 0 * HP:1 * HP])
        f = jax.nn.sigmoid(gates[:, 1 * HP:2 * HP])
        g = jnp.tanh(gates[:, 2 * HP:3 * HP])
        o = jax.nn.sigmoid(gates[:, 3 * HP:4 * HP])
        c_new = f * c + i * g
        h_new = o * jnp.tanh(c_new)
        return h_new, c_new

    h0 = jnp.zeros((BBLK, HP), jnp.float32)
    c0 = jnp.zeros((BBLK, HP), jnp.float32)

    # Hoist weight loads out of the serial loops.
    enc_wih = enc_wih_ref[...]
    enc_whh = enc_whh_ref[...]
    enc_b = enc_b_ref[...]
    dec_whh = dec_whh_ref[...]

    # --- Encoder: time-chunked input projection + serial recurrence ---------
    # Per chunk: one (TC*BBLK, D)@(D, 4HP) MXU op for TC steps of input
    # projection (held in vregs -> no full-sequence scratch), then a
    # statically unrolled TC-step recurrence on top of it.
    def enc_chunk(ci, carry):
        h, c = carry
        x_chunk = x_ref[pl.ds(ci * TC, TC)]                       # (TC, BBLK, D)
        proj = (jnp.dot(x_chunk.reshape(TC * BBLK, -1), enc_wih,
                        preferred_element_type=jnp.float32) + enc_b)
        for t in range(TC):                                       # bounded unroll
            gates = proj[t * BBLK:(t + 1) * BBLK, :] + jnp.dot(
                h.astype(cdt), enc_whh, preferred_element_type=jnp.float32)
            h, c = gate_math(gates, c)
        return h, c

    h_enc, _ = jax.lax.fori_loop(0, n_chunks, enc_chunk, (h0, c0))

    # --- Decoder -------------------------------------------------------------
    # z == h_enc at every step -> its input projection is computed exactly once.
    zp = (jnp.dot(h_enc.astype(cdt), dec_wih_ref[...],
                  preferred_element_type=jnp.float32) + dec_b_ref[...])

    def dec_chunk(ci, carry):
        h, c = carry
        base = ci * TC
        for t in range(TC):                                       # bounded unroll
            gates = zp + jnp.dot(h.astype(cdt), dec_whh,
                                 preferred_element_type=jnp.float32)
            h, c = gate_math(gates, c)
            hbuf_ref[base + t] = h.astype(hbuf_ref.dtype)         # bf16 store
        return h, c

    jax.lax.fori_loop(0, n_chunks, dec_chunk, (h0, c0))

    # --- FC + Sigmoid over all timesteps at once (single lane-dense store) ---
    hflat = hbuf_ref[...].reshape(T * BBLK, HP)                   # already bf16
    y = (jnp.dot(hflat, fc_w_ref[...], preferred_element_type=jnp.float32)
         + fc_b_ref[...])
    out_ref[...] = jax.nn.sigmoid(y).reshape(T, BBLK, -1)


# ----------------------------------------------------------------- wrapper ---

def _pad_gate_cols(w, H, HP):
    """(R, 4*H) -> (R, 4*HP): each of the 4 gate blocks zero-padded to HP."""
    R = w.shape[0]
    w4 = w.reshape(R, 4, H)
    w4 = jnp.pad(w4, ((0, 0), (0, 0), (0, HP - H)))
    return w4.reshape(R, 4 * HP)


@functools.partial(jax.jit, static_argnames=("compute_dtype",))
def lstm_ae_forward(x, params, compute_dtype=jnp.bfloat16):
    """Equivalent of LSTMAE.forward(x) with default flags (returns x_dec only)."""
    B, T, D = x.shape
    H = params["enc_whh_T"].shape[0]
    BP = _round_up(B, 8)       # sublane-aligned padded batch
    HP = _round_up(H, 128)     # lane-aligned hidden (zero padding is exact)
    DP = _round_up(D, 128)     # lane-dense FC output
    BBLK = _pick_batch_tile(BP)
    TC = _time_chunk(T)
    cdt = compute_dtype
    cbytes = jnp.dtype(cdt).itemsize

    def pad_rows(w, R):
        return jnp.pad(w, ((0, R - w.shape[0]), (0, 0)))

    enc_wih = _pad_gate_cols(params["enc_wih_T"], H, HP).astype(cdt)             # (D, 4HP)
    enc_whh = pad_rows(_pad_gate_cols(params["enc_whh_T"], H, HP), HP).astype(cdt)
    enc_b = _pad_gate_cols(params["enc_b"], H, HP)                               # (1,4HP) f32
    dec_wih = pad_rows(_pad_gate_cols(params["dec_wih_T"], H, HP), HP).astype(cdt)
    dec_whh = pad_rows(_pad_gate_cols(params["dec_whh_T"], H, HP), HP).astype(cdt)
    dec_b = _pad_gate_cols(params["dec_b"], H, HP)
    fc_w = jnp.pad(params["fc_w_T"], ((0, HP - H), (0, DP - D))).astype(cdt)     # (HP, DP)
    fc_b = jnp.pad(params["fc_b"], ((0, 0), (0, DP - D)))                        # (1, DP) f32

    # Time-major, batch padded: timestep t of batch tile b lives at x_t[t, b*BBLK:...].
    x_t = jnp.transpose(x, (1, 0, 2))                    # (T, B, D)
    x_t = jnp.pad(x_t, ((0, 0), (0, BP - B), (0, 0))).astype(cdt)   # (T, BP, D)

    vmem = pltpu.MemorySpace.VMEM
    kernel = functools.partial(_lstmae_kernel, T=T, TC=TC, BBLK=BBLK, HP=HP)

    out = pl.pallas_call(
        kernel,
        out_shape=jax.ShapeDtypeStruct((T, BP, DP), jnp.float32),
        grid_spec=pltpu.PrefetchScalarGridSpec(
            num_scalar_prefetch=0,
            grid=(BP // BBLK,),
            in_specs=[pl.BlockSpec((T, BBLK, D), lambda b: (0, b, 0))]
                     + [pl.BlockSpec(memory_space=vmem)] * 8,
            out_specs=pl.BlockSpec((T, BBLK, DP), lambda b: (0, b, 0)),
            scratch_shapes=[pltpu.VMEM((T, BBLK, HP), cdt)],
        ),
        compiler_params=pltpu.CompilerParams(
            dimension_semantics=("parallel",),
            vmem_limit_bytes=_vmem_limit_bytes(T, BBLK, D, HP, DP, cbytes),
        ),
    )(x_t, enc_wih, enc_whh, enc_b, dec_wih, dec_whh, dec_b, fc_w, fc_b)

    y = out[:, :B, :D]                                   # (T, B, D)
    return jnp.transpose(y, (1, 0, 2))                   # (B, T, D)


# --------------------------------------------------------------- reference ---

def _lstm_scan_ref(x_btd, wih_T, whh_T, b, compute_dtype):
    B, _, _ = x_btd.shape
    H = whh_T.shape[0]
    wih = wih_T.astype(compute_dtype)
    whh = whh_T.astype(compute_dtype)

    def step(carry, x_t):
        h, c = carry
        gates = (jnp.dot(x_t.astype(compute_dtype), wih,
                         preferred_element_type=jnp.float32)
                 + jnp.dot(h.astype(compute_dtype), whh,
                           preferred_element_type=jnp.float32)
                 + b)
        i = jax.nn.sigmoid(gates[:, 0 * H:1 * H])
        f = jax.nn.sigmoid(gates[:, 1 * H:2 * H])
        g = jnp.tanh(gates[:, 2 * H:3 * H])
        o = jax.nn.sigmoid(gates[:, 3 * H:4 * H])
        c = f * c + i * g
        h = o * jnp.tanh(c)
        return (h, c), h

    h0 = jnp.zeros((B, H), jnp.float32)
    c0 = jnp.zeros((B, H), jnp.float32)
    (h, _), hs = jax.lax.scan(step, (h0, c0), jnp.transpose(x_btd, (1, 0, 2)))
    return jnp.transpose(hs, (1, 0, 2)), h


def lstm_ae_reference(x, params, compute_dtype=jnp.bfloat16):
    B, T, D = x.shape
    _, h_last = _lstm_scan_ref(x, params["enc_wih_T"], params["enc_whh_T"],
                               params["enc_b"], compute_dtype)
    z = jnp.repeat(h_last[:, None, :], T, axis=1)
    dec_out, _ = _lstm_scan_ref(z, params["dec_wih_T"], params["dec_whh_T"],
                                params["dec_b"], compute_dtype)
    y = (jnp.dot(dec_out.astype(compute_dtype),
                 params["fc_w_T"].astype(compute_dtype),
                 preferred_element_type=jnp.float32) + params["fc_b"])
    return jax.nn.sigmoid(y)


# --------------------------------------------------------------------- main --

def init_params(key, input_size, hidden_size):
    k = 1.0 / np.sqrt(hidden_size)
    keys = jax.random.split(key, 8)

    def u(kk, shape):
        return jax.random.uniform(kk, shape, jnp.float32, minval=-k, maxval=k)

    H, D = hidden_size, input_size
    return {
        # encoder LSTM (input D -> hidden H); weights stored transposed
        "enc_wih_T": u(keys[0], (D, 4 * H)),
        "enc_whh_T": u(keys[1], (H, 4 * H)),
        "enc_b":     u(keys[2], (1, 4 * H)),   # b_ih + b_hh folded together
        # decoder LSTM (input H -> hidden H)
        "dec_wih_T": u(keys[3], (H, 4 * H)),
        "dec_whh_T": u(keys[4], (H, 4 * H)),
        "dec_b":     u(keys[5], (1, 4 * H)),
        # fc: hidden H -> input D
        "fc_w_T":    u(keys[6], (H, D)),
        "fc_b":      u(keys[7], (1, D)),
    }


if __name__ == "__main__":
    B, T, D, H = 2, 8, 16, 32
    key = jax.random.PRNGKey(0)
    kx, kp = jax.random.split(key)
    x = jax.random.normal(kx, (B, T, D), jnp.float32)
    params = init_params(kp, D, H)

    y = lstm_ae_forward(x, params)
    y = jax.block_until_ready(y)

    y_ref = lstm_ae_reference(x, params)
    np.testing.assert_allclose(np.asarray(y), np.asarray(y_ref),
                               rtol=2e-3, atol=2e-3)
    assert y.shape == (B, T, D)
    print("KERNEL_OK")
</pallas_src>

<mosaic_0001>
module attributes {stable_mosaic.version = 11 : i64} {
  func.func @_lstmae_kernel(%arg0: i32, %arg1: memref<8x8x16xbf16, #tpu.memory_space<vmem>>, %arg2: memref<16x512xbf16, #tpu.memory_space<vmem>>, %arg3: memref<128x512xbf16, #tpu.memory_space<vmem>>, %arg4: memref<1x512xf32, #tpu.memory_space<vmem>>, %arg5: memref<128x512xbf16, #tpu.memory_space<vmem>>, %arg6: memref<128x512xbf16, #tpu.memory_space<vmem>>, %arg7: memref<1x512xf32, #tpu.memory_space<vmem>>, %arg8: memref<128x128xbf16, #tpu.memory_space<vmem>>, %arg9: memref<1x128xf32, #tpu.memory_space<vmem>>, %arg10: memref<8x8x128xf32, #tpu.memory_space<vmem>>, %arg11: memref<8x8x128xbf16, #tpu.memory_space<vmem>>) attributes {dimension_semantics = [#tpu.dimension_semantics<parallel>], iteration_bounds = array<i64: 1>, scalar_prefetch = 0 : i64, scratch_operands = 1 : i64, tpu.core_type = #tpu.core_type<tc>, window_params = [{transform_indices = @transform_0, window_bounds = array<i64: 8, 8, 16>}, {pipeline_mode = #tpu.pipeline_mode<synchronous>, transform_indices = @transform_1, window_bounds = array<i64: 16, 512>}, {pipeline_mode = #tpu.pipeline_mode<synchronous>, transform_indices = @transform_2, window_bounds = array<i64: 128, 512>}, {pipeline_mode = #tpu.pipeline_mode<synchronous>, transform_indices = @transform_3, window_bounds = array<i64: 1, 512>}, {pipeline_mode = #tpu.pipeline_mode<synchronous>, transform_indices = @transform_4, window_bounds = array<i64: 128, 512>}, {pipeline_mode = #tpu.pipeline_mode<synchronous>, transform_indices = @transform_5, window_bounds = array<i64: 128, 512>}, {pipeline_mode = #tpu.pipeline_mode<synchronous>, transform_indices = @transform_6, window_bounds = array<i64: 1, 512>}, {pipeline_mode = #tpu.pipeline_mode<synchronous>, transform_indices = @transform_7, window_bounds = array<i64: 128, 128>}, {pipeline_mode = #tpu.pipeline_mode<synchronous>, transform_indices = @transform_8, window_bounds = array<i64: 1, 128>}, {transform_indices = @transform_9, window_bounds = array<i64: 8, 8, 128>}]} {
    %cst = arith.constant 0.000000e+00 : f32
    %0 = vector.broadcast %cst : f32 to vector<8x128xf32>
    %cst_0 = arith.constant 0.000000e+00 : f32
    %1 = vector.broadcast %cst_0 : f32 to vector<8x128xf32>
    %c0 = arith.constant 0 : index
    %c0_1 = arith.constant 0 : index
    %2 = vector.load %arg2[%c0, %c0_1] : memref<16x512xbf16, #tpu.memory_space<vmem>>, vector<16x512xbf16>
    %c0_2 = arith.constant 0 : index
    %c0_3 = arith.constant 0 : index
    %3 = vector.load %arg3[%c0_2, %c0_3] : memref<128x512xbf16, #tpu.memory_space<vmem>>, vector<128x512xbf16>
    %c0_4 = arith.constant 0 : index
    %c0_5 = arith.constant 0 : index
    %4 = vector.load %arg4[%c0_4, %c0_5] : memref<1x512xf32, #tpu.memory_space<vmem>>, vector<1x512xf32>
    %c0_6 = arith.constant 0 : index
    %c0_7 = arith.constant 0 : index
    %5 = vector.load %arg6[%c0_6, %c0_7] : memref<128x512xbf16, #tpu.memory_space<vmem>>, vector<128x512xbf16>
    %c0_i32 = arith.constant 0 : i32
    %c8_i32 = arith.constant 8 : i32
    %6 = arith.muli %c0_i32, %c8_i32 : i32
    %7 = arith.index_cast %6 : i32 to index
    %c0_8 = arith.constant 0 : index
    %c0_9 = arith.constant 0 : index
    %8 = vector.load %arg1[%7, %c0_8, %c0_9] : memref<8x8x16xbf16, #tpu.memory_space<vmem>>, vector<8x8x16xbf16>
    %9 = vector.shape_cast %8 : vector<8x8x16xbf16> to vector<64x16xbf16>
    %cst_10 = arith.constant dense<0.000000e+00> : vector<64x512xf32>
    %10 = tpu.matmul %9, %2, %cst_10 {dimension_numbers = #tpu.dot_dimension_numbers<[1], [0], [0], [1], [0, 0, 1, 1], [], []>} : vector<64x16xbf16>, vector<16x512xbf16>, vector<64x512xf32> -> vector<64x512xf32>
    %11 = vector.broadcast %4 : vector<1x512xf32> to vector<64x512xf32>
    %12 = arith.addf %10, %11 : vector<64x512xf32>
    %13 = vector.extract_strided_slice %12 {offsets = [0, 0], sizes = [8, 512], strides = [1, 1]} : vector<64x512xf32> to vector<8x512xf32>
    %14 = arith.truncf %0 : vector<8x128xf32> to vector<8x128xbf16>
    %cst_11 = arith.constant dense<0.000000e+00> : vector<8x512xf32>
    %15 = tpu.matmul %14, %3, %cst_11 {dimension_numbers = #tpu.dot_dimension_numbers<[1], [0], [0], [1], [0, 0, 1, 1], [], []>} : vector<8x128xbf16>, vector<128x512xbf16>, vector<8x512xf32> -> vector<8x512xf32>
    %16 = arith.addf %13, %15 : vector<8x512xf32>
    %17 = vector.extract_strided_slice %16 {offsets = [0, 0], sizes = [8, 128], strides = [1, 1]} : vector<8x512xf32> to vector<8x128xf32>
    %18 = arith.negf %17 : vector<8x128xf32>
    %19 = math.exp %18 : vector<8x128xf32>
    %cst_12 = arith.constant 1.000000e+00 : f32
    %20 = vector.broadcast %cst_12 : f32 to vector<8x128xf32>
    %21 = arith.addf %20, %19 : vector<8x128xf32>
    %22 = arith.divf %20, %21 : vector<8x128xf32>
    %23 = vector.extract_strided_slice %16 {offsets = [0, 128], sizes = [8, 128], strides = [1, 1]} : vector<8x512xf32> to vector<8x128xf32>
    %24 = arith.negf %23 : vector<8x128xf32>
    %25 = math.exp %24 : vector<8x128xf32>
    %cst_13 = arith.constant 1.000000e+00 : f32
    %26 = vector.broadcast %cst_13 : f32 to vector<8x128xf32>
    %27 = arith.addf %26, %25 : vector<8x128xf32>
    %28 = arith.divf %26, %27 : vector<8x128xf32>
    %29 = vector.extract_strided_slice %16 {offsets = [0, 256], sizes = [8, 128], strides = [1, 1]} : vector<8x512xf32> to vector<8x128xf32>
    %30 = math.tanh %29 : vector<8x128xf32>
    %31 = vector.extract_strided_slice %16 {offsets = [0, 384], sizes = [8, 128], strides = [1, 1]} : vector<8x512xf32> to vector<8x128xf32>
    %32 = arith.negf %31 : vector<8x128xf32>
    %33 = math.exp %32 : vector<8x128xf32>
    %cst_14 = arith.constant 1.000000e+00 : f32
    %34 = vector.broadcast %cst_14 : f32 to vector<8x128xf32>
    %35 = arith.addf %34, %33 : vector<8x128xf32>
    %36 = arith.divf %34, %35 : vector<8x128xf32>
    %37 = arith.mulf %28, %1 : vector<8x128xf32>
    %38 = arith.mulf %22, %30 : vector<8x128xf32>
    %39 = arith.addf %37, %38 : vector<8x128xf32>
    %40 = math.tanh %39 : vector<8x128xf32>
    %41 = arith.mulf %36, %40 : vector<8x128xf32>
    %42 = vector.extract_strided_slice %12 {offsets = [8, 0], sizes = [8, 512], strides = [1, 1]} : vector<64x512xf32> to vector<8x512xf32>
    %43 = arith.truncf %41 : vector<8x128xf32> to vector<8x128xbf16>
    %cst_15 = arith.constant dense<0.000000e+00> : vector<8x512xf32>
    %44 = tpu.matmul %43, %3, %cst_15 {dimension_numbers = #tpu.dot_dimension_numbers<[1], [0], [0], [1], [0, 0, 1, 1], [], []>} : vector<8x128xbf16>, vector<128x512xbf16>, vector<8x512xf32> -> vector<8x512xf32>
    %45 = arith.addf %42, %44 : vector<8x512xf32>
    %46 = vector.extract_strided_slice %45 {offsets = [0, 0], sizes = [8, 128], strides = [1, 1]} : vector<8x512xf32> to vector<8x128xf32>
    %47 = arith.negf %46 : vector<8x128xf32>
    %48 = math.exp %47 : vector<8x128xf32>
    %cst_16 = arith.constant 1.000000e+00 : f32
    %49 = vector.broadcast %cst_16 : f32 to vector<8x128xf32>
    %50 = arith.addf %49, %48 : vector<8x128xf32>
    %51 = arith.divf %49, %50 : vector<8x128xf32>
    %52 = vector.extract_strided_slice %45 {offsets = [0, 128], sizes = [8, 128], strides = [1, 1]} : vector<8x512xf32> to vector<8x128xf32>
    %53 = arith.negf %52 : vector<8x128xf32>
    %54 = math.exp %53 : vector<8x128xf32>
    %cst_17 = arith.constant 1.000000e+00 : f32
    %55 = vector.broadcast %cst_17 : f32 to vector<8x128xf32>
    %56 = arith.addf %55, %54 : vector<8x128xf32>
    %57 = arith.divf %55, %56 : vector<8x128xf32>
    %58 = vector.extract_strided_slice %45 {offsets = [0, 256], sizes = [8, 128], strides = [1, 1]} : vector<8x512xf32> to vector<8x128xf32>
    %59 = math.tanh %58 : vector<8x128xf32>
    %60 = vector.extract_strided_slice %45 {offsets = [0, 384], sizes = [8, 128], strides = [1, 1]} : vector<8x512xf32> to vector<8x128xf32>
    %61 = arith.negf %60 : vector<8x128xf32>
    %62 = math.exp %61 : vector<8x128xf32>
    %cst_18 = arith.constant 1.000000e+00 : f32
    %63 = vector.broadcast %cst_18 : f32 to vector<8x128xf32>
    %64 = arith.addf %63, %62 : vector<8x128xf32>
    %65 = arith.divf %63, %64 : vector<8x128xf32>
    %66 = arith.mulf %57, %39 : vector<8x128xf32>
    %67 = arith.mulf %51, %59 : vector<8x128xf32>
    %68 = arith.addf %66, %67 : vector<8x128xf32>
    %69 = math.tanh %68 : vector<8x128xf32>
    %70 = arith.mulf %65, %69 : vector<8x128xf32>
    %71 = vector.extract_strided_slice %12 {offsets = [16, 0], sizes = [8, 512], strides = [1, 1]} : vector<64x512xf32> to vector<8x512xf32>
    %72 = arith.truncf %70 : vector<8x128xf32> to vector<8x128xbf16>
    %cst_19 = arith.constant dense<0.000000e+00> : vector<8x512xf32>
    %73 = tpu.matmul %72, %3, %cst_19 {dimension_numbers = #tpu.dot_dimension_numbers<[1], [0], [0], [1], [0, 0, 1, 1], [], []>} : vector<8x128xbf16>, vector<128x512xbf16>, vector<8x512xf32> -> vector<8x512xf32>
    %74 = arith.addf %71, %73 : vector<8x512xf32>
    %75 = vector.extract_strided_slice %74 {offsets = [0, 0], sizes = [8, 128], strides = [1, 1]} : vector<8x512xf32> to vector<8x128xf32>
    %76 = arith.negf %75 : vector<8x128xf32>
    %77 = math.exp %76 : vector<8x128xf32>
    %cst_20 = arith.constant 1.000000e+00 : f32
    %78 = vector.broadcast %cst_20 : f32 to vector<8x128xf32>
    %79 = arith.addf %78, %77 : vector<8x128xf32>
    %80 = arith.divf %78, %79 : vector<8x128xf32>
    %81 = vector.extract_strided_slice %74 {offsets = [0, 128], sizes = [8, 128], strides = [1, 1]} : vector<8x512xf32> to vector<8x128xf32>
    %82 = arith.negf %81 : vector<8x128xf32>
    %83 = math.exp %82 : vector<8x128xf32>
    %cst_21 = arith.constant 1.000000e+00 : f32
    %84 = vector.broadcast %cst_21 : f32 to vector<8x128xf32>
    %85 = arith.addf %84, %83 : vector<8x128xf32>
    %86 = arith.divf %84, %85 : vector<8x128xf32>
    %87 = vector.extract_strided_slice %74 {offsets = [0, 256], sizes = [8, 128], strides = [1, 1]} : vector<8x512xf32> to vector<8x128xf32>
    %88 = math.tanh %87 : vector<8x128xf32>
    %89 = vector.extract_strided_slice %74 {offsets = [0, 384], sizes = [8, 128], strides = [1, 1]} : vector<8x512xf32> to vector<8x128xf32>
    %90 = arith.negf %89 : vector<8x128xf32>
    %91 = math.exp %90 : vector<8x128xf32>
    %cst_22 = arith.constant 1.000000e+00 : f32
    %92 = vector.broadcast %cst_22 : f32 to vector<8x128xf32>
    %93 = arith.addf %92, %91 : vector<8x128xf32>
    %94 = arith.divf %92, %93 : vector<8x128xf32>
    %95 = arith.mulf %86, %68 : vector<8x128xf32>
    %96 = arith.mulf %80, %88 : vector<8x128xf32>
    %97 = arith.addf %95, %96 : vector<8x128xf32>
    %98 = math.tanh %97 : vector<8x128xf32>
    %99 = arith.mulf %94, %98 : vector<8x128xf32>
    %100 = vector.extract_strided_slice %12 {offsets = [24, 0], sizes = [8, 512], strides = [1, 1]} : vector<64x512xf32> to vector<8x512xf32>
    %101 = arith.truncf %99 : vector<8x128xf32> to vector<8x128xbf16>
    %cst_23 = arith.constant dense<0.000000e+00> : vector<8x512xf32>
    %102 = tpu.matmul %101, %3, %cst_23 {dimension_numbers = #tpu.dot_dimension_numbers<[1], [0], [0], [1], [0, 0, 1, 1], [], []>} : vector<8x128xbf16>, vector<128x512xbf16>, vector<8x512xf32> -> vector<8x512xf32>
    %103 = arith.addf %100, %102 : vector<8x512xf32>
    %104 = vector.extract_strided_slice %103 {offsets = [0, 0], sizes = [8, 128], strides = [1, 1]} : vector<8x512xf32> to vector<8x128xf32>
    %105 = arith.negf %104 : vector<8x128xf32>
    %106 = math.exp %105 : vector<8x128xf32>
    %cst_24 = arith.constant 1.000000e+00 : f32
    %107 = vector.broadcast %cst_24 : f32 to vector<8x128xf32>
    %108 = arith.addf %107, %106 : vector<8x128xf32>
    %109 = arith.divf %107, %108 : vector<8x128xf32>
    %110 = vector.extract_strided_slice %103 {offsets = [0, 128], sizes = [8, 128], strides = [1, 1]} : vector<8x512xf32> to vector<8x128xf32>
    %111 = arith.negf %110 : vector<8x128xf32>
    %112 = math.exp %111 : vector<8x128xf32>
    %cst_25 = arith.constant 1.000000e+00 : f32
    %113 = vector.broadcast %cst_25 : f32 to vector<8x128xf32>
    %114 = arith.addf %113, %112 : vector<8x128xf32>
    %115 = arith.divf %113, %114 : vector<8x128xf32>
    %116 = vector.extract_strided_slice %103 {offsets = [0, 256], sizes = [8, 128], strides = [1, 1]} : vector<8x512xf32> to vector<8x128xf32>
    %117 = math.tanh %116 : vector<8x128xf32>
    %118 = vector.extract_strided_slice %103 {offsets = [0, 384], sizes = [8, 128], strides = [1, 1]} : vector<8x512xf32> to vector<8x128xf32>
    %119 = arith.negf %118 : vector<8x128xf32>
    %120 = math.exp %119 : vector<8x128xf32>
    %cst_26 = arith.constant 1.000000e+00 : f32
    %121 = vector.broadcast %cst_26 : f32 to vector<8x128xf32>
    %122 = arith.addf %121, %120 : vector<8x128xf32>
    %123 = arith.divf %121, %122 : vector<8x128xf32>
    %124 = arith.mulf %115, %97 : vector<8x128xf32>
    %125 = arith.mulf %109, %117 : vector<8x128xf32>
    %126 = arith.addf %124, %125 : vector<8x128xf32>
    %127 = math.tanh %126 : vector<8x128xf32>
    %128 = arith.mulf %123, %127 : vector<8x128xf32>
    %129 = vector.extract_strided_slice %12 {offsets = [32, 0], sizes = [8, 512], strides = [1, 1]} : vector<64x512xf32> to vector<8x512xf32>
    %130 = arith.truncf %128 : vector<8x128xf32> to vector<8x128xbf16>
    %cst_27 = arith.constant dense<0.000000e+00> : vector<8x512xf32>
    %131 = tpu.matmul %130, %3, %cst_27 {dimension_numbers = #tpu.dot_dimension_numbers<[1], [0], [0], [1], [0, 0, 1, 1], [], []>} : vector<8x128xbf16>, vector<128x512xbf16>, vector<8x512xf32> -> vector<8x512xf32>
    %132 = arith.addf %129, %131 : vector<8x512xf32>
    %133 = vector.extract_strided_slice %132 {offsets = [0, 0], sizes = [8, 128], strides = [1, 1]} : vector<8x512xf32> to vector<8x128xf32>
    %134 = arith.negf %133 : vector<8x128xf32>
    %135 = math.exp %134 : vector<8x128xf32>
    %cst_28 = arith.constant 1.000000e+00 : f32
    %136 = vector.broadcast %cst_28 : f32 to vector<8x128xf32>
    %137 = arith.addf %136, %135 : vector<8x128xf32>
    %138 = arith.divf %136, %137 : vector<8x128xf32>
    %139 = vector.extract_strided_slice %132 {offsets = [0, 128], sizes = [8, 128], strides = [1, 1]} : vector<8x512xf32> to vector<8x128xf32>
    %140 = arith.negf %139 : vector<8x128xf32>
    %141 = math.exp %140 : vector<8x128xf32>
    %cst_29 = arith.constant 1.000000e+00 : f32
    %142 = vector.broadcast %cst_29 : f32 to vector<8x128xf32>
    %143 = arith.addf %142, %141 : vector<8x128xf32>
    %144 = arith.divf %142, %143 : vector<8x128xf32>
    %145 = vector.extract_strided_slice %132 {offsets = [0, 256], sizes = [8, 128], strides = [1, 1]} : vector<8x512xf32> to vector<8x128xf32>
    %146 = math.tanh %145 : vector<8x128xf32>
    %147 = vector.extract_strided_slice %132 {offsets = [0, 384], sizes = [8, 128], strides = [1, 1]} : vector<8x512xf32> to vector<8x128xf32>
    %148 = arith.negf %147 : vector<8x128xf32>
    %149 = math.exp %148 : vector<8x128xf32>
    %cst_30 = arith.constant 1.000000e+00 : f32
    %150 = vector.broadcast %cst_30 : f32 to vector<8x128xf32>
    %151 = arith.addf %150, %149 : vector<8x128xf32>
    %152 = arith.divf %150, %151 : vector<8x128xf32>
    %153 = arith.mulf %144, %126 : vector<8x128xf32>
    %154 = arith.mulf %138, %146 : vector<8x128xf32>
    %155 = arith.addf %153, %154 : vector<8x128xf32>
    %156 = math.tanh %155 : vector<8x128xf32>
    %157 = arith.mulf %152, %156 : vector<8x128xf32>
    %158 = vector.extract_strided_slice %12 {offsets = [40, 0], sizes = [8, 512], strides = [1, 1]} : vector<64x512xf32> to vector<8x512xf32>
    %159 = arith.truncf %157 : vector<8x128xf32> to vector<8x128xbf16>
    %cst_31 = arith.constant dense<0.000000e+00> : vector<8x512xf32>
    %160 = tpu.matmul %159, %3, %cst_31 {dimension_numbers = #tpu.dot_dimension_numbers<[1], [0], [0], [1], [0, 0, 1, 1], [], []>} : vector<8x128xbf16>, vector<128x512xbf16>, vector<8x512xf32> -> vector<8x512xf32>
    %161 = arith.addf %158, %160 : vector<8x512xf32>
    %162 = vector.extract_strided_slice %161 {offsets = [0, 0], sizes = [8, 128], strides = [1, 1]} : vector<8x512xf32> to vector<8x128xf32>
    %163 = arith.negf %162 : vector<8x128xf32>
    %164 = math.exp %163 : vector<8x128xf32>
    %cst_32 = arith.constant 1.000000e+00 : f32
    %165 = vector.broadcast %cst_32 : f32 to vector<8x128xf32>
    %166 = arith.addf %165, %164 : vector<8x128xf32>
    %167 = arith.divf %165, %166 : vector<8x128xf32>
    %168 = vector.extract_strided_slice %161 {offsets = [0, 128], sizes = [8, 128], strides = [1, 1]} : vector<8x512xf32> to vector<8x128xf32>
    %169 = arith.negf %168 : vector<8x128xf32>
    %170 = math.exp %169 : vector<8x128xf32>
    %cst_33 = arith.constant 1.000000e+00 : f32
    %171 = vector.broadcast %cst_33 : f32 to vector<8x128xf32>
    %172 = arith.addf %171, %170 : vector<8x128xf32>
    %173 = arith.divf %171, %172 : vector<8x128xf32>
    %174 = vector.extract_strided_slice %161 {offsets = [0, 256], sizes = [8, 128], strides = [1, 1]} : vector<8x512xf32> to vector<8x128xf32>
    %175 = math.tanh %174 : vector<8x128xf32>
    %176 = vector.extract_strided_slice %161 {offsets = [0, 384], sizes = [8, 128], strides = [1, 1]} : vector<8x512xf32> to vector<8x128xf32>
    %177 = arith.negf %176 : vector<8x128xf32>
    %178 = math.exp %177 : vector<8x128xf32>
    %cst_34 = arith.constant 1.000000e+00 : f32
    %179 = vector.broadcast %cst_34 : f32 to vector<8x128xf32>
    %180 = arith.addf %179, %178 : vector<8x128xf32>
    %181 = arith.divf %179, %180 : vector<8x128xf32>
    %182 = arith.mulf %173, %155 : vector<8x128xf32>
    %183 = arith.mulf %167, %175 : vector<8x128xf32>
    %184 = arith.addf %182, %183 : vector<8x128xf32>
    %185 = math.tanh %184 : vector<8x128xf32>
    %186 = arith.mulf %181, %185 : vector<8x128xf32>
    %187 = vector.extract_strided_slice %12 {offsets = [48, 0], sizes = [8, 512], strides = [1, 1]} : vector<64x512xf32> to vector<8x512xf32>
    %188 = arith.truncf %186 : vector<8x128xf32> to vector<8x128xbf16>
    %cst_35 = arith.constant dense<0.000000e+00> : vector<8x512xf32>
    %189 = tpu.matmul %188, %3, %cst_35 {dimension_numbers = #tpu.dot_dimension_numbers<[1], [0], [0], [1], [0, 0, 1, 1], [], []>} : vector<8x128xbf16>, vector<128x512xbf16>, vector<8x512xf32> -> vector<8x512xf32>
    %190 = arith.addf %187, %189 : vector<8x512xf32>
    %191 = vector.extract_strided_slice %190 {offsets = [0, 0], sizes = [8, 128], strides = [1, 1]} : vector<8x512xf32> to vector<8x128xf32>
    %192 = arith.negf %191 : vector<8x128xf32>
    %193 = math.exp %192 : vector<8x128xf32>
    %cst_36 = arith.constant 1.000000e+00 : f32
    %194 = vector.broadcast %cst_36 : f32 to vector<8x128xf32>
    %195 = arith.addf %194, %193 : vector<8x128xf32>
    %196 = arith.divf %194, %195 : vector<8x128xf32>
    %197 = vector.extract_strided_slice %190 {offsets = [0, 128], sizes = [8, 128], strides = [1, 1]} : vector<8x512xf32> to vector<8x128xf32>
    %198 = arith.negf %197 : vector<8x128xf32>
    %199 = math.exp %198 : vector<8x128xf32>
    %cst_37 = arith.constant 1.000000e+00 : f32
    %200 = vector.broadcast %cst_37 : f32 to vector<8x128xf32>
    %201 = arith.addf %200, %199 : vector<8x128xf32>
    %202 = arith.divf %200, %201 : vector<8x128xf32>
    %203 = vector.extract_strided_slice %190 {offsets = [0, 256], sizes = [8, 128], strides = [1, 1]} : vector<8x512xf32> to vector<8x128xf32>
    %204 = math.tanh %203 : vector<8x128xf32>
    %205 = vector.extract_strided_slice %190 {offsets = [0, 384], sizes = [8, 128], strides = [1, 1]} : vector<8x512xf32> to vector<8x128xf32>
    %206 = arith.negf %205 : vector<8x128xf32>
    %207 = math.exp %206 : vector<8x128xf32>
    %cst_38 = arith.constant 1.000000e+00 : f32
    %208 = vector.broadcast %cst_38 : f32 to vector<8x128xf32>
    %209 = arith.addf %208, %207 : vector<8x128xf32>
    %210 = arith.divf %208, %209 : vector<8x128xf32>
    %211 = arith.mulf %202, %184 : vector<8x128xf32>
    %212 = arith.mulf %196, %204 : vector<8x128xf32>
    %213 = arith.addf %211, %212 : vector<8x128xf32>
    %214 = math.tanh %213 : vector<8x128xf32>
    %215 = arith.mulf %210, %214 : vector<8x128xf32>
    %216 = vector.extract_strided_slice %12 {offsets = [56, 0], sizes = [8, 512], strides = [1, 1]} : vector<64x512xf32> to vector<8x512xf32>
    %217 = arith.truncf %215 : vector<8x128xf32> to vector<8x128xbf16>
    %cst_39 = arith.constant dense<0.000000e+00> : vector<8x512xf32>
    %218 = tpu.matmul %217, %3, %cst_39 {dimension_numbers = #tpu.dot_dimension_numbers<[1], [0], [0], [1], [0, 0, 1, 1], [], []>} : vector<8x128xbf16>, vector<128x512xbf16>, vector<8x512xf32> -> vector<8x512xf32>
    %219 = arith.addf %216, %218 : vector<8x512xf32>
    %220 = vector.extract_strided_slice %219 {offsets = [0, 0], sizes = [8, 128], strides = [1, 1]} : vector<8x512xf32> to vector<8x128xf32>
    %221 = arith.negf %220 : vector<8x128xf32>
    %222 = math.exp %221 : vector<8x128xf32>
    %cst_40 = arith.constant 1.000000e+00 : f32
    %223 = vector.broadcast %cst_40 : f32 to vector<8x128xf32>
    %224 = arith.addf %223, %222 : vector<8x128xf32>
    %225 = arith.divf %223, %224 : vector<8x128xf32>
    %226 = vector.extract_strided_slice %219 {offsets = [0, 128], sizes = [8, 128], strides = [1, 1]} : vector<8x512xf32> to vector<8x128xf32>
    %227 = arith.negf %226 : vector<8x128xf32>
    %228 = math.exp %227 : vector<8x128xf32>
    %cst_41 = arith.constant 1.000000e+00 : f32
    %229 = vector.broadcast %cst_41 : f32 to vector<8x128xf32>
    %230 = arith.addf %229, %228 : vector<8x128xf32>
    %231 = arith.divf %229, %230 : vector<8x128xf32>
    %232 = vector.extract_strided_slice %219 {offsets = [0, 256], sizes = [8, 128], strides = [1, 1]} : vector<8x512xf32> to vector<8x128xf32>
    %233 = math.tanh %232 : vector<8x128xf32>
    %234 = vector.extract_strided_slice %219 {offsets = [0, 384], sizes = [8, 128], strides = [1, 1]} : vector<8x512xf32> to vector<8x128xf32>
    %235 = arith.negf %234 : vector<8x128xf32>
    %236 = math.exp %235 : vector<8x128xf32>
    %cst_42 = arith.constant 1.000000e+00 : f32
    %237 = vector.broadcast %cst_42 : f32 to vector<8x128xf32>
    %238 = arith.addf %237, %236 : vector<8x128xf32>
    %239 = arith.divf %237, %238 : vector<8x128xf32>
    %240 = arith.mulf %231, %213 : vector<8x128xf32>
    %241 = arith.mulf %225, %233 : vector<8x128xf32>
    %242 = arith.addf %240, %241 : vector<8x128xf32>
    %243 = math.tanh %242 : vector<8x128xf32>
    %244 = arith.mulf %239, %243 : vector<8x128xf32>
    %c1_i32 = arith.constant 1 : i32
    %245 = arith.truncf %244 : vector<8x128xf32> to vector<8x128xbf16>
    %c0_43 = arith.constant 0 : index
    %c0_44 = arith.constant 0 : index
    %246 = vector.load %arg5[%c0_43, %c0_44] : memref<128x512xbf16, #tpu.memory_space<vmem>>, vector<128x512xbf16>
    %cst_45 = arith.constant dense<0.000000e+00> : vector<8x512xf32>
    %247 = tpu.matmul %245, %246, %cst_45 {dimension_numbers = #tpu.dot_dimension_numbers<[1], [0], [0], [1], [0, 0, 1, 1], [], []>} : vector<8x128xbf16>, vector<128x512xbf16>, vector<8x512xf32> -> vector<8x512xf32>
    %c0_46 = arith.constant 0 : index
    %c0_47 = arith.constant 0 : index
    %248 = vector.load %arg7[%c0_46, %c0_47] : memref<1x512xf32, #tpu.memory_space<vmem>>, vector<1x512xf32>
    %249 = vector.broadcast %248 : vector<1x512xf32> to vector<8x512xf32>
    %250 = arith.addf %247, %249 : vector<8x512xf32>
    %c0_i32_48 = arith.constant 0 : i32
    %c8_i32_49 = arith.constant 8 : i32
    %251 = arith.muli %c0_i32_48, %c8_i32_49 : i32
    %252 = arith.truncf %0 : vector<8x128xf32> to vector<8x128xbf16>
    %cst_50 = arith.constant dense<0.000000e+00> : vector<8x512xf32>
    %253 = tpu.matmul %252, %5, %cst_50 {dimension_numbers = #tpu.dot_dimension_numbers<[1], [0], [0], [1], [0, 0, 1, 1], [], []>} : vector<8x128xbf16>, vector<128x512xbf16>, vector<8x512xf32> -> vector<8x512xf32>
    %254 = arith.addf %250, %253 : vector<8x512xf32>
    %255 = vector.extract_strided_slice %254 {offsets = [0, 0], sizes = [8, 128], strides = [1, 1]} : vector<8x512xf32> to vector<8x128xf32>
    %256 = arith.negf %255 : vector<8x128xf32>
    %257 = math.exp %256 : vector<8x128xf32>
    %cst_51 = arith.constant 1.000000e+00 : f32
    %258 = vector.broadcast %cst_51 : f32 to vector<8x128xf32>
    %259 = arith.addf %258, %257 : vector<8x128xf32>
    %260 = arith.divf %258, %259 : vector<8x128xf32>
    %261 = vector.extract_strided_slice %254 {offsets = [0, 128], sizes = [8, 128], strides = [1, 1]} : vector<8x512xf32> to vector<8x128xf32>
    %262 = arith.negf %261 : vector<8x128xf32>
    %263 = math.exp %262 : vector<8x128xf32>
    %cst_52 = arith.constant 1.000000e+00 : f32
    %264 = vector.broadcast %cst_52 : f32 to vector<8x128xf32>
    %265 = arith.addf %264, %263 : vector<8x128xf32>
    %266 = arith.divf %264, %265 : vector<8x128xf32>
    %267 = vector.extract_strided_slice %254 {offsets = [0, 256], sizes = [8, 128], strides = [1, 1]} : vector<8x512xf32> to vector<8x128xf32>
    %268 = math.tanh %267 : vector<8x128xf32>
    %269 = vector.extract_strided_slice %254 {offsets = [0, 384], sizes = [8, 128], strides = [1, 1]} : vector<8x512xf32> to vector<8x128xf32>
    %270 = arith.negf %269 : vector<8x128xf32>
    %271 = math.exp %270 : vector<8x128xf32>
    %cst_53 = arith.constant 1.000000e+00 : f32
    %272 = vector.broadcast %cst_53 : f32 to vector<8x128xf32>
    %273 = arith.addf %272, %271 : vector<8x128xf32>
    %274 = arith.divf %272, %273 : vector<8x128xf32>
    %275 = arith.mulf %266, %1 : vector<8x128xf32>
    %276 = arith.mulf %260, %268 : vector<8x128xf32>
    %277 = arith.addf %275, %276 : vector<8x128xf32>
    %278 = math.tanh %277 : vector<8x128xf32>
    %279 = arith.mulf %274, %278 : vector<8x128xf32>
    %280 = arith.truncf %279 : vector<8x128xf32> to vector<8x128xbf16>
    %c0_i32_54 = arith.constant 0 : i32
    %281 = arith.addi %251, %c0_i32_54 : i32
    %282 = arith.index_cast %281 : i32 to index
    %c0_55 = arith.constant 0 : index
    %c0_56 = arith.constant 0 : index
    %283 = vector.load %arg11[%282, %c0_55, %c0_56] : memref<8x8x128xbf16, #tpu.memory_space<vmem>>, vector<1x8x128xbf16>
    %284 = vector.shape_cast %283 : vector<1x8x128xbf16> to vector<8x128xbf16>
    %285 = vector.shape_cast %280 : vector<8x128xbf16> to vector<1x8x128xbf16>
    tpu.vector_store %arg11[%282, %c0_55, %c0_56], %285 {strides = array<i32>} : memref<8x8x128xbf16, #tpu.memory_space<vmem>>, vector<1x8x128xbf16>,
    %286 = arith.truncf %279 : vector<8x128xf32> to vector<8x128xbf16>
    %cst_57 = arith.constant dense<0.000000e+00> : vector<8x512xf32>
    %287 = tpu.matmul %286, %5, %cst_57 {dimension_numbers = #tpu.dot_dimension_numbers<[1], [0], [0], [1], [0, 0, 1, 1], [], []>} : vector<8x128xbf16>, vector<128x512xbf16>, vector<8x512xf32> -> vector<8x512xf32>
    %288 = arith.addf %250, %287 : vector<8x512xf32>
    %289 = vector.extract_strided_slice %288 {offsets = [0, 0], sizes = [8, 128], strides = [1, 1]} : vector<8x512xf32> to vector<8x128xf32>
    %290 = arith.negf %289 : vector<8x128xf32>
    %291 = math.exp %290 : vector<8x128xf32>
    %cst_58 = arith.constant 1.000000e+00 : f32
    %292 = vector.broadcast %cst_58 : f32 to vector<8x128xf32>
    %293 = arith.addf %292, %291 : vector<8x128xf32>
    %294 = arith.divf %292, %293 : vector<8x128xf32>
    %295 = vector.extract_strided_slice %288 {offsets = [0, 128], sizes = [8, 128], strides = [1, 1]} : vector<8x512xf32> to vector<8x128xf32>
    %296 = arith.negf %295 : vector<8x128xf32>
    %297 = math.exp %296 : vector<8x128xf32>
    %cst_59 = arith.constant 1.000000e+00 : f32
    %298 = vector.broadcast %cst_59 : f32 to vector<8x128xf32>
    %299 = arith.addf %298, %297 : vector<8x128xf32>
    %300 = arith.divf %298, %299 : vector<8x128xf32>
    %301 = vector.extract_strided_slice %288 {offsets = [0, 256], sizes = [8, 128], strides = [1, 1]} : vector<8x512xf32> to vector<8x128xf32>
    %302 = math.tanh %301 : vector<8x128xf32>
    %303 = vector.extract_strided_slice %288 {offsets = [0, 384], sizes = [8, 128], strides = [1, 1]} : vector<8x512xf32> to vector<8x128xf32>
    %304 = arith.negf %303 : vector<8x128xf32>
    %305 = math.exp %304 : vector<8x128xf32>
    %cst_60 = arith.constant 1.000000e+00 : f32
    %306 = vector.broadcast %cst_60 : f32 to vector<8x128xf32>
    %307 = arith.addf %306, %305 : vector<8x128xf32>
    %308 = arith.divf %306, %307 : vector<8x128xf32>
    %309 = arith.mulf %300, %277 : vector<8x128xf32>
    %310 = arith.mulf %294, %302 : vector<8x128xf32>
    %311 = arith.addf %309, %310 : vector<8x128xf32>
    %312 = math.tanh %311 : vector<8x128xf32>
    %313 = arith.mulf %308, %312 : vector<8x128xf32>
    %314 = arith.truncf %313 : vector<8x128xf32> to vector<8x128xbf16>
    %c1_i32_61 = arith.constant 1 : i32
    %315 = arith.addi %251, %c1_i32_61 : i32
    %316 = arith.index_cast %315 : i32 to index
    %c0_62 = arith.constant 0 : index
    %c0_63 = arith.constant 0 : index
    %317 = vector.load %arg11[%316, %c0_62, %c0_63] : memref<8x8x128xbf16, #tpu.memory_space<vmem>>, vector<1x8x128xbf16>
    %318 = vector.shape_cast %317 : vector<1x8x128xbf16> to vector<8x128xbf16>
    %319 = vector.shape_cast %314 : vector<8x128xbf16> to vector<1x8x128xbf16>
    tpu.vector_store %arg11[%316, %c0_62, %c0_63], %319 {strides = array<i32>} : memref<8x8x128xbf16, #tpu.memory_space<vmem>>, vector<1x8x128xbf16>,
    %320 = arith.truncf %313 : vector<8x128xf32> to vector<8x128xbf16>
    %cst_64 = arith.constant dense<0.000000e+00> : vector<8x512xf32>
    %321 = tpu.matmul %320, %5, %cst_64 {dimension_numbers = #tpu.dot_dimension_numbers<[1], [0], [0], [1], [0, 0, 1, 1], [], []>} : vector<8x128xbf16>, vector<128x512xbf16>, vector<8x512xf32> -> vector<8x512xf32>
    %322 = arith.addf %250, %321 : vector<8x512xf32>
    %323 = vector.extract_strided_slice %322 {offsets = [0, 0], sizes = [8, 128], strides = [1, 1]} : vector<8x512xf32> to vector<8x128xf32>
    %324 = arith.negf %323 : vector<8x128xf32>
    %325 = math.exp %324 : vector<8x128xf32>
    %cst_65 = arith.constant 1.000000e+00 : f32
    %326 = vector.broadcast %cst_65 : f32 to vector<8x128xf32>
    %327 = arith.addf %326, %325 : vector<8x128xf32>
    %328 = arith.divf %326, %327 : vector<8x128xf32>
    %329 = vector.extract_strided_slice %322 {offsets = [0, 128], sizes = [8, 128], strides = [1, 1]} : vector<8x512xf32> to vector<8x128xf32>
    %330 = arith.negf %329 : vector<8x128xf32>
    %331 = math.exp %330 : vector<8x128xf32>
    %cst_66 = arith.constant 1.000000e+00 : f32
    %332 = vector.broadcast %cst_66 : f32 to vector<8x128xf32>
    %333 = arith.addf %332, %331 : vector<8x128xf32>
    %334 = arith.divf %332, %333 : vector<8x128xf32>
    %335 = vector.extract_strided_slice %322 {offsets = [0, 256], sizes = [8, 128], strides = [1, 1]} : vector<8x512xf32> to vector<8x128xf32>
    %336 = math.tanh %335 : vector<8x128xf32>
    %337 = vector.extract_strided_slice %322 {offsets = [0, 384], sizes = [8, 128], strides = [1, 1]} : vector<8x512xf32> to vector<8x128xf32>
    %338 = arith.negf %337 : vector<8x128xf32>
    %339 = math.exp %338 : vector<8x128xf32>
    %cst_67 = arith.constant 1.000000e+00 : f32
    %340 = vector.broadcast %cst_67 : f32 to vector<8x128xf32>
    %341 = arith.addf %340, %339 : vector<8x128xf32>
    %342 = arith.divf %340, %341 : vector<8x128xf32>
    %343 = arith.mulf %334, %311 : vector<8x128xf32>
    %344 = arith.mulf %328, %336 : vector<8x128xf32>
    %345 = arith.addf %343, %344 : vector<8x128xf32>
    %346 = math.tanh %345 : vector<8x128xf32>
    %347 = arith.mulf %342, %346 : vector<8x128xf32>
    %348 = arith.truncf %347 : vector<8x128xf32> to vector<8x128xbf16>
    %c2_i32 = arith.constant 2 : i32
    %349 = arith.addi %251, %c2_i32 : i32
    %350 = arith.index_cast %349 : i32 to index
    %c0_68 = arith.constant 0 : index
    %c0_69 = arith.constant 0 : index
    %351 = vector.load %arg11[%350, %c0_68, %c0_69] : memref<8x8x128xbf16, #tpu.memory_space<vmem>>, vector<1x8x128xbf16>
    %352 = vector.shape_cast %351 : vector<1x8x128xbf16> to vector<8x128xbf16>
    %353 = vector.shape_cast %348 : vector<8x128xbf16> to vector<1x8x128xbf16>
    tpu.vector_store %arg11[%350, %c0_68, %c0_69], %353 {strides = array<i32>} : memref<8x8x128xbf16, #tpu.memory_space<vmem>>, vector<1x8x128xbf16>,
    %354 = arith.truncf %347 : vector<8x128xf32> to vector<8x128xbf16>
    %cst_70 = arith.constant dense<0.000000e+00> : vector<8x512xf32>
    %355 = tpu.matmul %354, %5, %cst_70 {dimension_numbers = #tpu.dot_dimension_numbers<[1], [0], [0], [1], [0, 0, 1, 1], [], []>} : vector<8x128xbf16>, vector<128x512xbf16>, vector<8x512xf32> -> vector<8x512xf32>
    %356 = arith.addf %250, %355 : vector<8x512xf32>
    %357 = vector.extract_strided_slice %356 {offsets = [0, 0], sizes = [8, 128], strides = [1, 1]} : vector<8x512xf32> to vector<8x128xf32>
    %358 = arith.negf %357 : vector<8x128xf32>
    %359 = math.exp %358 : vector<8x128xf32>
    %cst_71 = arith.constant 1.000000e+00 : f32
    %360 = vector.broadcast %cst_71 : f32 to vector<8x128xf32>
    %361 = arith.addf %360, %359 : vector<8x128xf32>
    %362 = arith.divf %360, %361 : vector<8x128xf32>
    %363 = vector.extract_strided_slice %356 {offsets = [0, 128], sizes = [8, 128], strides = [1, 1]} : vector<8x512xf32> to vector<8x128xf32>
    %364 = arith.negf %363 : vector<8x128xf32>
    %365 = math.exp %364 : vector<8x128xf32>
    %cst_72 = arith.constant 1.000000e+00 : f32
    %366 = vector.broadcast %cst_72 : f32 to vector<8x128xf32>
    %367 = arith.addf %366, %365 : vector<8x128xf32>
    %368 = arith.divf %366, %367 : vector<8x128xf32>
    %369 = vector.extract_strided_slice %356 {offsets = [0, 256], sizes = [8, 128], strides = [1, 1]} : vector<8x512xf32> to vector<8x128xf32>
    %370 = math.tanh %369 : vector<8x128xf32>
    %371 = vector.extract_strided_slice %356 {offsets = [0, 384], sizes = [8, 128], strides = [1, 1]} : vector<8x512xf32> to vector<8x128xf32>
    %372 = arith.negf %371 : vector<8x128xf32>
    %373 = math.exp %372 : vector<8x128xf32>
    %cst_73 = arith.constant 1.000000e+00 : f32
    %374 = vector.broadcast %cst_73 : f32 to vector<8x128xf32>
    %375 = arith.addf %374, %373 : vector<8x128xf32>
    %376 = arith.divf %374, %375 : vector<8x128xf32>
    %377 = arith.mulf %368, %345 : vector<8x128xf32>
    %378 = arith.mulf %362, %370 : vector<8x128xf32>
    %379 = arith.addf %377, %378 : vector<8x128xf32>
    %380 = math.tanh %379 : vector<8x128xf32>
    %381 = arith.mulf %376, %380 : vector<8x128xf32>
    %382 = arith.truncf %381 : vector<8x128xf32> to vector<8x128xbf16>
    %c3_i32 = arith.constant 3 : i32
    %383 = arith.addi %251, %c3_i32 : i32
    %384 = arith.index_cast %383 : i32 to index
    %c0_74 = arith.constant 0 : index
    %c0_75 = arith.constant 0 : index
    %385 = vector.load %arg11[%384, %c0_74, %c0_75] : memref<8x8x128xbf16, #tpu.memory_space<vmem>>, vector<1x8x128xbf16>
    %386 = vector.shape_cast %385 : vector<1x8x128xbf16> to vector<8x128xbf16>
    %387 = vector.shape_cast %382 : vector<8x128xbf16> to vector<1x8x128xbf16>
    tpu.vector_store %arg11[%384, %c0_74, %c0_75], %387 {strides = array<i32>} : memref<8x8x128xbf16, #tpu.memory_space<vmem>>, vector<1x8x128xbf16>,
    %388 = arith.truncf %381 : vector<8x128xf32> to vector<8x128xbf16>
    %cst_76 = arith.constant dense<0.000000e+00> : vector<8x512xf32>
    %389 = tpu.matmul %388, %5, %cst_76 {dimension_numbers = #tpu.dot_dimension_numbers<[1], [0], [0], [1], [0, 0, 1, 1], [], []>} : vector<8x128xbf16>, vector<128x512xbf16>, vector<8x512xf32> -> vector<8x512xf32>
    %390 = arith.addf %250, %389 : vector<8x512xf32>
    %391 = vector.extract_strided_slice %390 {offsets = [0, 0], sizes = [8, 128], strides = [1, 1]} : vector<8x512xf32> to vector<8x128xf32>
    %392 = arith.negf %391 : vector<8x128xf32>
    %393 = math.exp %392 : vector<8x128xf32>
    %cst_77 = arith.constant 1.000000e+00 : f32
    %394 = vector.broadcast %cst_77 : f32 to vector<8x128xf32>
    %395 = arith.addf %394, %393 : vector<8x128xf32>
    %396 = arith.divf %394, %395 : vector<8x128xf32>
    %397 = vector.extract_strided_slice %390 {offsets = [0, 128], sizes = [8, 128], strides = [1, 1]} : vector<8x512xf32> to vector<8x128xf32>
    %398 = arith.negf %397 : vector<8x128xf32>
    %399 = math.exp %398 : vector<8x128xf32>
    %cst_78 = arith.constant 1.000000e+00 : f32
    %400 = vector.broadcast %cst_78 : f32 to vector<8x128xf32>
    %401 = arith.addf %400, %399 : vector<8x128xf32>
    %402 = arith.divf %400, %401 : vector<8x128xf32>
    %403 = vector.extract_strided_slice %390 {offsets = [0, 256], sizes = [8, 128], strides = [1, 1]} : vector<8x512xf32> to vector<8x128xf32>
    %404 = math.tanh %403 : vector<8x128xf32>
    %405 = vector.extract_strided_slice %390 {offsets = [0, 384], sizes = [8, 128], strides = [1, 1]} : vector<8x512xf32> to vector<8x128xf32>
    %406 = arith.negf %405 : vector<8x128xf32>
    %407 = math.exp %406 : vector<8x128xf32>
    %cst_79 = arith.constant 1.000000e+00 : f32
    %408 = vector.broadcast %cst_79 : f32 to vector<8x128xf32>
    %409 = arith.addf %408, %407 : vector<8x128xf32>
    %410 = arith.divf %408, %409 : vector<8x128xf32>
    %411 = arith.mulf %402, %379 : vector<8x128xf32>
    %412 = arith.mulf %396, %404 : vector<8x128xf32>
    %413 = arith.addf %411, %412 : vector<8x128xf32>
    %414 = math.tanh %413 : vector<8x128xf32>
    %415 = arith.mulf %410, %414 : vector<8x128xf32>
    %416 = arith.truncf %415 : vector<8x128xf32> to vector<8x128xbf16>
    %c4_i32 = arith.constant 4 : i32
    %417 = arith.addi %251, %c4_i32 : i32
    %418 = arith.index_cast %417 : i32 to index
    %c0_80 = arith.constant 0 : index
    %c0_81 = arith.constant 0 : index
    %419 = vector.load %arg11[%418, %c0_80, %c0_81] : memref<8x8x128xbf16, #tpu.memory_space<vmem>>, vector<1x8x128xbf16>
    %420 = vector.shape_cast %419 : vector<1x8x128xbf16> to vector<8x128xbf16>
    %421 = vector.shape_cast %416 : vector<8x128xbf16> to vector<1x8x128xbf16>
    tpu.vector_store %arg11[%418, %c0_80, %c0_81], %421 {strides = array<i32>} : memref<8x8x128xbf16, #tpu.memory_space<vmem>>, vector<1x8x128xbf16>,
    %422 = arith.truncf %415 : vector<8x128xf32> to vector<8x128xbf16>
    %cst_82 = arith.constant dense<0.000000e+00> : vector<8x512xf32>
    %423 = tpu.matmul %422, %5, %cst_82 {dimension_numbers = #tpu.dot_dimension_numbers<[1], [0], [0], [1], [0, 0, 1, 1], [], []>} : vector<8x128xbf16>, vector<128x512xbf16>, vector<8x512xf32> -> vector<8x512xf32>
    %424 = arith.addf %250, %423 : vector<8x512xf32>
    %425 = vector.extract_strided_slice %424 {offsets = [0, 0], sizes = [8, 128], strides = [1, 1]} : vector<8x512xf32> to vector<8x128xf32>
    %426 = arith.negf %425 : vector<8x128xf32>
    %427 = math.exp %426 : vector<8x128xf32>
    %cst_83 = arith.constant 1.000000e+00 : f32
    %428 = vector.broadcast %cst_83 : f32 to vector<8x128xf32>
    %429 = arith.addf %428, %427 : vector<8x128xf32>
    %430 = arith.divf %428, %429 : vector<8x128xf32>
    %431 = vector.extract_strided_slice %424 {offsets = [0, 128], sizes = [8, 128], strides = [1, 1]} : vector<8x512xf32> to vector<8x128xf32>
    %432 = arith.negf %431 : vector<8x128xf32>
    %433 = math.exp %432 : vector<8x128xf32>
    %cst_84 = arith.constant 1.000000e+00 : f32
    %434 = vector.broadcast %cst_84 : f32 to vector<8x128xf32>
    %435 = arith.addf %434, %433 : vector<8x128xf32>
    %436 = arith.divf %434, %435 : vector<8x128xf32>
    %437 = vector.extract_strided_slice %424 {offsets = [0, 256], sizes = [8, 128], strides = [1, 1]} : vector<8x512xf32> to vector<8x128xf32>
    %438 = math.tanh %437 : vector<8x128xf32>
    %439 = vector.extract_strided_slice %424 {offsets = [0, 384], sizes = [8, 128], strides = [1, 1]} : vector<8x512xf32> to vector<8x128xf32>
    %440 = arith.negf %439 : vector<8x128xf32>
    %441 = math.exp %440 : vector<8x128xf32>
    %cst_85 = arith.constant 1.000000e+00 : f32
    %442 = vector.broadcast %cst_85 : f32 to vector<8x128xf32>
    %443 = arith.addf %442, %441 : vector<8x128xf32>
    %444 = arith.divf %442, %443 : vector<8x128xf32>
    %445 = arith.mulf %436, %413 : vector<8x128xf32>
    %446 = arith.mulf %430, %438 : vector<8x128xf32>
    %447 = arith.addf %445, %446 : vector<8x128xf32>
    %448 = math.tanh %447 : vector<8x128xf32>
    %449 = arith.mulf %444, %448 : vector<8x128xf32>
    %450 = arith.truncf %449 : vector<8x128xf32> to vector<8x128xbf16>
    %c5_i32 = arith.constant 5 : i32
    %451 = arith.addi %251, %c5_i32 : i32
    %452 = arith.index_cast %451 : i32 to index
    %c0_86 = arith.constant 0 : index
    %c0_87 = arith.constant 0 : index
    %453 = vector.load %arg11[%452, %c0_86, %c0_87] : memref<8x8x128xbf16, #tpu.memory_space<vmem>>, vector<1x8x128xbf16>
    %454 = vector.shape_cast %453 : vector<1x8x128xbf16> to vector<8x128xbf16>
    %455 = vector.shape_cast %450 : vector<8x128xbf16> to vector<1x8x128xbf16>
    tpu.vector_store %arg11[%452, %c0_86, %c0_87], %455 {strides = array<i32>} : memref<8x8x128xbf16, #tpu.memory_space<vmem>>, vector<1x8x128xbf16>,
    %456 = arith.truncf %449 : vector<8x128xf32> to vector<8x128xbf16>
    %cst_88 = arith.constant dense<0.000000e+00> : vector<8x512xf32>
    %457 = tpu.matmul %456, %5, %cst_88 {dimension_numbers = #tpu.dot_dimension_numbers<[1], [0], [0], [1], [0, 0, 1, 1], [], []>} : vector<8x128xbf16>, vector<128x512xbf16>, vector<8x512xf32> -> vector<8x512xf32>
    %458 = arith.addf %250, %457 : vector<8x512xf32>
    %459 = vector.extract_strided_slice %458 {offsets = [0, 0], sizes = [8, 128], strides = [1, 1]} : vector<8x512xf32> to vector<8x128xf32>
    %460 = arith.negf %459 : vector<8x128xf32>
    %461 = math.exp %460 : vector<8x128xf32>
    %cst_89 = arith.constant 1.000000e+00 : f32
    %462 = vector.broadcast %cst_89 : f32 to vector<8x128xf32>
    %463 = arith.addf %462, %461 : vector<8x128xf32>
    %464 = arith.divf %462, %463 : vector<8x128xf32>
    %465 = vector.extract_strided_slice %458 {offsets = [0, 128], sizes = [8, 128], strides = [1, 1]} : vector<8x512xf32> to vector<8x128xf32>
    %466 = arith.negf %465 : vector<8x128xf32>
    %467 = math.exp %466 : vector<8x128xf32>
    %cst_90 = arith.constant 1.000000e+00 : f32
    %468 = vector.broadcast %cst_90 : f32 to vector<8x128xf32>
    %469 = arith.addf %468, %467 : vector<8x128xf32>
    %470 = arith.divf %468, %469 : vector<8x128xf32>
    %471 = vector.extract_strided_slice %458 {offsets = [0, 256], sizes = [8, 128], strides = [1, 1]} : vector<8x512xf32> to vector<8x128xf32>
    %472 = math.tanh %471 : vector<8x128xf32>
    %473 = vector.extract_strided_slice %458 {offsets = [0, 384], sizes = [8, 128], strides = [1, 1]} : vector<8x512xf32> to vector<8x128xf32>
    %474 = arith.negf %473 : vector<8x128xf32>
    %475 = math.exp %474 : vector<8x128xf32>
    %cst_91 = arith.constant 1.000000e+00 : f32
    %476 = vector.broadcast %cst_91 : f32 to vector<8x128xf32>
    %477 = arith.addf %476, %475 : vector<8x128xf32>
    %478 = arith.divf %476, %477 : vector<8x128xf32>
    %479 = arith.mulf %470, %447 : vector<8x128xf32>
    %480 = arith.mulf %464, %472 : vector<8x128xf32>
    %481 = arith.addf %479, %480 : vector<8x128xf32>
    %482 = math.tanh %481 : vector<8x128xf32>
    %483 = arith.mulf %478, %482 : vector<8x128xf32>
    %484 = arith.truncf %483 : vector<8x128xf32> to vector<8x128xbf16>
    %c6_i32 = arith.constant 6 : i32
    %485 = arith.addi %251, %c6_i32 : i32
    %486 = arith.index_cast %485 : i32 to index
    %c0_92 = arith.constant 0 : index
    %c0_93 = arith.constant 0 : index
    %487 = vector.load %arg11[%486, %c0_92, %c0_93] : memref<8x8x128xbf16, #tpu.memory_space<vmem>>, vector<1x8x128xbf16>
    %488 = vector.shape_cast %487 : vector<1x8x128xbf16> to vector<8x128xbf16>
    %489 = vector.shape_cast %484 : vector<8x128xbf16> to vector<1x8x128xbf16>
    tpu.vector_store %arg11[%486, %c0_92, %c0_93], %489 {strides = array<i32>} : memref<8x8x128xbf16, #tpu.memory_space<vmem>>, vector<1x8x128xbf16>,
    %490 = arith.truncf %483 : vector<8x128xf32> to vector<8x128xbf16>
    %cst_94 = arith.constant dense<0.000000e+00> : vector<8x512xf32>
    %491 = tpu.matmul %490, %5, %cst_94 {dimension_numbers = #tpu.dot_dimension_numbers<[1], [0], [0], [1], [0, 0, 1, 1], [], []>} : vector<8x128xbf16>, vector<128x512xbf16>, vector<8x512xf32> -> vector<8x512xf32>
    %492 = arith.addf %250, %491 : vector<8x512xf32>
    %493 = vector.extract_strided_slice %492 {offsets = [0, 0], sizes = [8, 128], strides = [1, 1]} : vector<8x512xf32> to vector<8x128xf32>
    %494 = arith.negf %493 : vector<8x128xf32>
    %495 = math.exp %494 : vector<8x128xf32>
    %cst_95 = arith.constant 1.000000e+00 : f32
    %496 = vector.broadcast %cst_95 : f32 to vector<8x128xf32>
    %497 = arith.addf %496, %495 : vector<8x128xf32>
    %498 = arith.divf %496, %497 : vector<8x128xf32>
    %499 = vector.extract_strided_slice %492 {offsets = [0, 128], sizes = [8, 128], strides = [1, 1]} : vector<8x512xf32> to vector<8x128xf32>
    %500 = arith.negf %499 : vector<8x128xf32>
    %501 = math.exp %500 : vector<8x128xf32>
    %cst_96 = arith.constant 1.000000e+00 : f32
    %502 = vector.broadcast %cst_96 : f32 to vector<8x128xf32>
    %503 = arith.addf %502, %501 : vector<8x128xf32>
    %504 = arith.divf %502, %503 : vector<8x128xf32>
    %505 = vector.extract_strided_slice %492 {offsets = [0, 256], sizes = [8, 128], strides = [1, 1]} : vector<8x512xf32> to vector<8x128xf32>
    %506 = math.tanh %505 : vector<8x128xf32>
    %507 = vector.extract_strided_slice %492 {offsets = [0, 384], sizes = [8, 128], strides = [1, 1]} : vector<8x512xf32> to vector<8x128xf32>
    %508 = arith.negf %507 : vector<8x128xf32>
    %509 = math.exp %508 : vector<8x128xf32>
    %cst_97 = arith.constant 1.000000e+00 : f32
    %510 = vector.broadcast %cst_97 : f32 to vector<8x128xf32>
    %511 = arith.addf %510, %509 : vector<8x128xf32>
    %512 = arith.divf %510, %511 : vector<8x128xf32>
    %513 = arith.mulf %504, %481 : vector<8x128xf32>
    %514 = arith.mulf %498, %506 : vector<8x128xf32>
    %515 = arith.addf %513, %514 : vector<8x128xf32>
    %516 = math.tanh %515 : vector<8x128xf32>
    %517 = arith.mulf %512, %516 : vector<8x128xf32>
    %518 = arith.truncf %517 : vector<8x128xf32> to vector<8x128xbf16>
    %c7_i32 = arith.constant 7 : i32
    %519 = arith.addi %251, %c7_i32 : i32
    %520 = arith.index_cast %519 : i32 to index
    %c0_98 = arith.constant 0 : index
    %c0_99 = arith.constant 0 : index
    %521 = vector.load %arg11[%520, %c0_98, %c0_99] : memref<8x8x128xbf16, #tpu.memory_space<vmem>>, vector<1x8x128xbf16>
    %522 = vector.shape_cast %521 : vector<1x8x128xbf16> to vector<8x128xbf16>
    %523 = vector.shape_cast %518 : vector<8x128xbf16> to vector<1x8x128xbf16>
    tpu.vector_store %arg11[%520, %c0_98, %c0_99], %523 {strides = array<i32>} : memref<8x8x128xbf16, #tpu.memory_space<vmem>>, vector<1x8x128xbf16>,
    %c1_i32_100 = arith.constant 1 : i32
    %c0_101 = arith.constant 0 : index
    %c0_102 = arith.constant 0 : index
    %c0_103 = arith.constant 0 : index
    %524 = vector.load %arg11[%c0_101, %c0_102, %c0_103] : memref<8x8x128xbf16, #tpu.memory_space<vmem>>, vector<8x8x128xbf16>
    %525 = vector.shape_cast %524 : vector<8x8x128xbf16> to vector<64x128xbf16>
    %c0_104 = arith.constant 0 : index
    %c0_105 = arith.constant 0 : index
    %526 = vector.load %arg8[%c0_104, %c0_105] : memref<128x128xbf16, #tpu.memory_space<vmem>>, vector<128x128xbf16>
    %cst_106 = arith.constant dense<0.000000e+00> : vector<64x128xf32>
    %527 = tpu.matmul %525, %526, %cst_106 {dimension_numbers = #tpu.dot_dimension_numbers<[1], [0], [0], [1], [0, 0, 1, 1], [], []>} : vector<64x128xbf16>, vector<128x128xbf16>, vector<64x128xf32> -> vector<64x128xf32>
    %c0_107 = arith.constant 0 : index
    %c0_108 = arith.constant 0 : index
    %528 = vector.load %arg9[%c0_107, %c0_108] : memref<1x128xf32, #tpu.memory_space<vmem>>, vector<1x128xf32>
    %529 = vector.broadcast %528 : vector<1x128xf32> to vector<64x128xf32>
    %530 = arith.addf %527, %529 : vector<64x128xf32>
    %531 = arith.negf %530 : vector<64x128xf32>
    %532 = math.exp %531 : vector<64x128xf32>
    %cst_109 = arith.constant 1.000000e+00 : f32
    %533 = vector.broadcast %cst_109 : f32 to vector<64x128xf32>
    %534 = arith.addf %533, %532 : vector<64x128xf32>
    %535 = arith.divf %533, %534 : vector<64x128xf32>
    %536 = vector.shape_cast %535 : vector<64x128xf32> to vector<8x8x128xf32>
    %c0_110 = arith.constant 0 : index
    %c0_111 = arith.constant 0 : index
    %c0_112 = arith.constant 0 : index
    %537 = vector.load %arg10[%c0_110, %c0_111, %c0_112] : memref<8x8x128xf32, #tpu.memory_space<vmem>>, vector<8x8x128xf32>
    tpu.vector_store %arg10[%c0_110, %c0_111, %c0_112], %536 {strides = array<i32>} : memref<8x8x128xf32, #tpu.memory_space<vmem>>, vector<8x8x128xf32>,
    return
  }
  func.func @transform_0(%arg0: i32) -> (i32, i32, i32) {
    %c0_i32 = arith.constant 0 : i32
    %c0_i32_0 = arith.constant 0 : i32
    %c0_i32_1 = arith.constant 0 : i32
    return %c0_i32, %arg0, %c0_i32_0 : i32, i32, i32
  }
  func.func @transform_1(%arg0: i32) -> (i32, i32) {
    %c0_i32 = arith.constant 0 : i32
    %c0_i32_0 = arith.constant 0 : i32
    %c0_i32_1 = arith.constant 0 : i32
    return %c0_i32, %c0_i32_0 : i32, i32
  }
  func.func @transform_2(%arg0: i32) -> (i32, i32) {
    %c0_i32 = arith.constant 0 : i32
    %c0_i32_0 = arith.constant 0 : i32
    %c0_i32_1 = arith.constant 0 : i32
    return %c0_i32, %c0_i32_0 : i32, i32
  }
  func.func @transform_3(%arg0: i32) -> (i32, i32) {
    %c0_i32 = arith.constant 0 : i32
    %c0_i32_0 = arith.constant 0 : i32
    %c0_i32_1 = arith.constant 0 : i32
    return %c0_i32, %c0_i32_0 : i32, i32
  }
  func.func @transform_4(%arg0: i32) -> (i32, i32) {
    %c0_i32 = arith.constant 0 : i32
    %c0_i32_0 = arith.constant 0 : i32
    %c0_i32_1 = arith.constant 0 : i32
    return %c0_i32, %c0_i32_0 : i32, i32
  }
  func.func @transform_5(%arg0: i32) -> (i32, i32) {
    %c0_i32 = arith.constant 0 : i32
    %c0_i32_0 = arith.constant 0 : i32
    %c0_i32_1 = arith.constant 0 : i32
    return %c0_i32, %c0_i32_0 : i32, i32
  }
  func.func @transform_6(%arg0: i32) -> (i32, i32) {
    %c0_i32 = arith.constant 0 : i32
    %c0_i32_0 = arith.constant 0 : i32
    %c0_i32_1 = arith.constant 0 : i32
    return %c0_i32, %c0_i32_0 : i32, i32
  }
  func.func @transform_7(%arg0: i32) -> (i32, i32) {
    %c0_i32 = arith.constant 0 : i32
    %c0_i32_0 = arith.constant 0 : i32
    %c0_i32_1 = arith.constant 0 : i32
    return %c0_i32, %c0_i32_0 : i32, i32
  }
  func.func @transform_8(%arg0: i32) -> (i32, i32) {
    %c0_i32 = arith.constant 0 : i32
    %c0_i32_0 = arith.constant 0 : i32
    %c0_i32_1 = arith.constant 0 : i32
    return %c0_i32, %c0_i32_0 : i32, i32
  }
  func.func @transform_9(%arg0: i32) -> (i32, i32, i32) {
    %c0_i32 = arith.constant 0 : i32
    %c0_i32_0 = arith.constant 0 : i32
    %c0_i32_1 = arith.constant 0 : i32
    return %c0_i32, %arg0, %c0_i32_0 : i32, i32, i32
  }
}

</mosaic_0001>

<llo_original>
// kernel: lstm_ae_forward.1
$region0: #{lstm_ae_forward.1}
  #allocation0 [shape = 'u32[]', space=smem, size = 0x4, offset = 0x4, fixed_abs, tag = 'smem constant byte address 0x4 - core index']
  #allocation1 [shape = 'u32[72,128]{1,0:T(1,128)}', space=vmem, size = 0x9000, scoped, tag = 'internal scratch']
  #allocation2 [shape = 'bf16[8,8,128]{2,1,0:T(8,128)(2,1)}', space=vmem, size = 0x4000, scoped, tag = 'scratch operand']
  %s0 = inlined_call_operand.vmem [shape: bf16[8,8,16], index: 0, kind: input, shape index: {}]
  %s1 = inlined_call_operand.vmem [shape: bf16[16,512], index: 1, kind: input, shape index: {}]
  %s2 = inlined_call_operand.vmem [shape: bf16[128,512], index: 2, kind: input, shape index: {}]
  %s3 = inlined_call_operand.vmem [shape: f32[1,512], index: 3, kind: input, shape index: {}]
  %s4 = inlined_call_operand.vmem [shape: bf16[128,512], index: 4, kind: input, shape index: {}]
  %s5 = inlined_call_operand.vmem [shape: bf16[128,512], index: 5, kind: input, shape index: {}]
  %s6 = inlined_call_operand.vmem [shape: f32[1,512], index: 6, kind: input, shape index: {}]
  %s7 = inlined_call_operand.vmem [shape: bf16[128,128], index: 7, kind: input, shape index: {}]
  %s8 = inlined_call_operand.vmem [shape: f32[1,128], index: 8, kind: input, shape index: {}]
  %s9 = inlined_call_operand.vmem [shape: f32[8,8,128], index: 9, kind: output, shape index: {}]
  %s10 = sld [smem:[#allocation0]]
  $region46: #{lstm_ae_forward.1} parent=0
    _
  %s12 = ssub.s32 1, %s10
  %s13 = scalar_select 0, %s12, %s10
  // Predicated region
  $region2: #{lstm_ae_forward.1} parent=0 // pred_check
    _
  $region3: #{lstm_ae_forward.1} parent=0 // pred_check_branch
    %15 = sbr.rel (0) target = $region5
  $region4: #{lstm_ae_forward.1} parent=0 // pred_region
    _
  $region5: #{lstm_ae_forward.1} parent=0 // pred_fallthru
    _
  // Predicated region
  $region6: #{lstm_ae_forward.1} parent=0 // pred_check
    _
  $region7: #{lstm_ae_forward.1} parent=0 // pred_check_branch
    %17 = sbr.rel (0) target = $region9
  $region8: #{lstm_ae_forward.1} parent=0 // pred_region
    _
  $region9: #{lstm_ae_forward.1} parent=0 // pred_fallthru
    _
  // Predicated region
  $region10: #{lstm_ae_forward.1} parent=0 // pred_check
    _
  $region11: #{lstm_ae_forward.1} parent=0 // pred_check_branch
    %19 = sbr.rel (0) target = $region13
  $region12: #{lstm_ae_forward.1} parent=0 // pred_region
    _
  $region13: #{lstm_ae_forward.1} parent=0 // pred_fallthru
    _
  // Predicated region
  $region14: #{lstm_ae_forward.1} parent=0 // pred_check
    _
  $region15: #{lstm_ae_forward.1} parent=0 // pred_check_branch
    %21 = sbr.rel (0) target = $region17
  $region16: #{lstm_ae_forward.1} parent=0 // pred_region
    _
  $region17: #{lstm_ae_forward.1} parent=0 // pred_fallthru
    _
  // Predicated region
  $region18: #{lstm_ae_forward.1} parent=0 // pred_check
    _
  $region19: #{lstm_ae_forward.1} parent=0 // pred_check_branch
    %23 = sbr.rel (0) target = $region21
  $region20: #{lstm_ae_forward.1} parent=0 // pred_region
    _
  $region21: #{lstm_ae_forward.1} parent=0 // pred_fallthru
    _
  // Predicated region
  $region22: #{lstm_ae_forward.1} parent=0 // pred_check
    _
  $region23: #{lstm_ae_forward.1} parent=0 // pred_check_branch
    %25 = sbr.rel (0) target = $region25
  $region24: #{lstm_ae_forward.1} parent=0 // pred_region
    _
  $region25: #{lstm_ae_forward.1} parent=0 // pred_fallthru
    _
  // Predicated region
  $region26: #{lstm_ae_forward.1} parent=0 // pred_check
    _
  $region27: #{lstm_ae_forward.1} parent=0 // pred_check_branch
    %27 = sbr.rel (0) target = $region29
  $region28: #{lstm_ae_forward.1} parent=0 // pred_region
    _
  $region29: #{lstm_ae_forward.1} parent=0 // pred_fallthru
    _
  // Predicated region
  $region30: #{lstm_ae_forward.1} parent=0 // pred_check
    _
  $region31: #{lstm_ae_forward.1} parent=0 // pred_check_branch
    %29 = sbr.rel (0) target = $region33
  $region32: #{lstm_ae_forward.1} parent=0 // pred_region
    _
  $region33: #{lstm_ae_forward.1} parent=0 // pred_fallthru
    _
  // Predicated region
  $region34: #{lstm_ae_forward.1} parent=0 // pred_check
    _
  $region35: #{lstm_ae_forward.1} parent=0 // pred_check_branch
    %31 = sbr.rel (0) target = $region37
  $region36: #{lstm_ae_forward.1} parent=0 // pred_region
    _
  $region37: #{lstm_ae_forward.1} parent=0 // pred_fallthru
    _
  %v33 = vld [vmem:[%s1] sm:$0xff]
  %v34 = vld [vmem:[%s1 + $0x8] sm:$0xff]
  %v35 = vld [vmem:[%s1 + $0x10] sm:$0xff]
  %v36 = vld [vmem:[%s1 + $0x18] sm:$0xff]
  %v37 = vld [vmem:[%s2] sm:$0xff]
  %v38 = vld [vmem:[%s2 + $0x8] sm:$0xff]
  %v39 = vld [vmem:[%s2 + $0x10] sm:$0xff]
  %v40 = vld [vmem:[%s2 + $0x18] sm:$0xff]
  %v41 = vld [vmem:[%s2 + $0x20] sm:$0xff]
  %v42 = vld [vmem:[%s2 + $0x28] sm:$0xff]
  %v43 = vld [vmem:[%s2 + $0x30] sm:$0xff]
  %v44 = vld [vmem:[%s2 + $0x38] sm:$0xff]
  %v45 = vld [vmem:[%s2 + $0x40] sm:$0xff]
  %v46 = vld [vmem:[%s2 + $0x48] sm:$0xff]
  %v47 = vld [vmem:[%s2 + $0x50] sm:$0xff]
  %v48 = vld [vmem:[%s2 + $0x58] sm:$0xff]
  %v49 = vld [vmem:[%s2 + $0x60] sm:$0xff]
  %v50 = vld [vmem:[%s2 + $0x68] sm:$0xff]
  %v51 = vld [vmem:[%s2 + $0x70] sm:$0xff]
  %v52 = vld [vmem:[%s2 + $0x78] sm:$0xff]
  %v53 = vld [vmem:[%s2 + $0x80] sm:$0xff]
  %v54 = vld [vmem:[%s2 + $0x88] sm:$0xff]
  %v55 = vld [vmem:[%s2 + $0x90] sm:$0xff]
  %v56 = vld [vmem:[%s2 + $0x98] sm:$0xff]
  %v57 = vld [vmem:[%s2 + $0xa0] sm:$0xff]
  %v58 = vld [vmem:[%s2 + $0xa8] sm:$0xff]
  %v59 = vld [vmem:[%s2 + $0xb0] sm:$0xff]
  %v60 = vld [vmem:[%s2 + $0xb8] sm:$0xff]
  %v61 = vld [vmem:[%s2 + $0xc0] sm:$0xff]
  %v62 = vld [vmem:[%s2 + $0xc8] sm:$0xff]
  %v63 = vld [vmem:[%s2 + $0xd0] sm:$0xff]
  %v64 = vld [vmem:[%s2 + $0xd8] sm:$0xff]
  %v65 = vld [vmem:[%s2 + $0xe0] sm:$0xff]
  %v66 = vld [vmem:[%s2 + $0xe8] sm:$0xff]
  %v67 = vld [vmem:[%s2 + $0xf0] sm:$0xff]
  %v68 = vld [vmem:[%s2 + $0xf8] sm:$0xff]
  %v69 = vld [vmem:[%s3] sm:$0xf]
  %v70 = vld [vmem:[%s5] sm:$0xff]
  %v71 = vld [vmem:[%s5 + $0x8] sm:$0xff]
  %v72 = vld [vmem:[%s5 + $0x10] sm:$0xff]
  %v73 = vld [vmem:[%s5 + $0x18] sm:$0xff]
  %v74 = vld [vmem:[%s5 + $0x20] sm:$0xff]
  %v75 = vld [vmem:[%s5 + $0x28] sm:$0xff]
  %v76 = vld [vmem:[%s5 + $0x30] sm:$0xff]
  %v77 = vld [vmem:[%s5 + $0x38] sm:$0xff]
  %v78 = vld [vmem:[%s5 + $0x40] sm:$0xff]
  %v79 = vld [vmem:[%s5 + $0x48] sm:$0xff]
  %v80 = vld [vmem:[%s5 + $0x50] sm:$0xff]
  %v81 = vld [vmem:[%s5 + $0x58] sm:$0xff]
  %v82 = vld [vmem:[%s5 + $0x60] sm:$0xff]
  %v83 = vld [vmem:[%s5 + $0x68] sm:$0xff]
  %v84 = vld [vmem:[%s5 + $0x70] sm:$0xff]
  %v85 = vld [vmem:[%s5 + $0x78] sm:$0xff]
  %v86 = vld [vmem:[%s5 + $0x80] sm:$0xff]
  %v87 = vld [vmem:[%s5 + $0x88] sm:$0xff]
  %v88 = vld [vmem:[%s5 + $0x90] sm:$0xff]
  %v89 = vld [vmem:[%s5 + $0x98] sm:$0xff]
  %v90 = vld [vmem:[%s5 + $0xa0] sm:$0xff]
  %v91 = vld [vmem:[%s5 + $0xa8] sm:$0xff]
  %v92 = vld [vmem:[%s5 + $0xb0] sm:$0xff]
  %v93 = vld [vmem:[%s5 + $0xb8] sm:$0xff]
  %v94 = vld [vmem:[%s5 + $0xc0] sm:$0xff]
  %v95 = vld [vmem:[%s5 + $0xc8] sm:$0xff]
  %v96 = vld [vmem:[%s5 + $0xd0] sm:$0xff]
  %v97 = vld [vmem:[%s5 + $0xd8] sm:$0xff]
  %v98 = vld [vmem:[%s5 + $0xe0] sm:$0xff]
  %v99 = vld [vmem:[%s5 + $0xe8] sm:$0xff]
  %v100 = vld [vmem:[%s5 + $0xf0] sm:$0xff]
  %v101 = vld [vmem:[%s5 + $0xf8] sm:$0xff]
  %v102 = vld [vmem:[%s0] sm:$0xf]
  %v103 = vld [vmem:[%s0 + $0x4] sm:$0xf]
  %v104 = vld [vmem:[%s0 + $0x8] sm:$0xf]
  %v105 = vld [vmem:[%s0 + $0xc] sm:$0xf]
  %v106 = vld [vmem:[%s0 + $0x10] sm:$0xf]
  %v107 = vld [vmem:[%s0 + $0x14] sm:$0xf]
  %v108 = vld [vmem:[%s0 + $0x18] sm:$0xf]
  %v109 = vld [vmem:[%s0 + $0x1c] sm:$0xf]
  %v111 = vperm.slane %v69, 0
  %v112 = vperm.slane %v69, 1
  %v113 = vperm.slane %v69, 2
  %v114 = vperm.slane %v69, 3
  %v127 = vunpack.c.l.b16 %v102
  %v128 = vunpack.c.l.b16 %v103
  %v129 = vunpack.c.l.b16 %v104
  %v130 = vunpack.c.l.b16 %v105
  %v131 = vunpack.c.l.b16 %v106
  %v132 = vunpack.c.l.b16 %v107
  %v133 = vunpack.c.l.b16 %v108
  %v134 = vunpack.c.l.b16 %v109
  %v135 = vpack.c.b16 %v128, %v127
  %v136 = vpack.c.b16 %v130, %v129
  %v137 = vpack.c.b16 %v132, %v131
  %v138 = vpack.c.b16 %v134, %v133
  %v143 = vunpack.c.l.b16 %v33
  %v144 = vunpack.c.h.b16 %v33
  %v145 = vunpack.c.l.b16 %v34
  %v146 = vunpack.c.h.b16 %v34
  %v147 = vunpack.c.l.b16 %v35
  %v148 = vunpack.c.h.b16 %v35
  %v149 = vunpack.c.l.b16 %v36
  %v150 = vunpack.c.h.b16 %v36
  %v151 = vpack.c.b16 %v147, %v143
  %v152 = vpack.c.b16 %v148, %v144
  %v153 = vpack.c.b16 %v149, %v145
  %v154 = vpack.c.b16 %v150, %v146
  %vm159 = vcmask 130048
  %v161 = vsel %vm159, %v135, 0
  %v164 = vsel %vm159, %v136, 0
  %v167 = vsel %vm159, %v137, 0
  %v170 = vsel %vm159, %v138, 0
  %172 = vmatpush.bf16.msra.mxu0 0
  %173 = vmatpush.bf16.msra.mxu0 0
  %174 = vmatpush.bf16.msra.mxu0 0
  %175 = vmatpush.bf16.msra.mxu0 0
  %176 = vmatpush.bf16.msra.mxu0 0
  %177 = vmatpush.bf16.msra.mxu0 0
  %178 = vmatpush.bf16.msra.mxu0 0
  %179 = vmatpush.bf16.msra.mxu0 %v151
  %180 = vmatmul.bf16.gmra.mxu0 %v161
  %v181 = vpop.f32.mrf.mxu0
  %v182 = vadd.f32 %v111, %v181
  %v183 = vpop.f32.mrf.mxu0
  %v184 = vadd.f32 %v111, %v183
  %185 = vmatmul.bf16.gmra.mxu0 %v164
  %v186 = vpop.f32.mrf.mxu0
  %v187 = vadd.f32 %v111, %v186
  %v188 = vpop.f32.mrf.mxu0
  %v189 = vadd.f32 %v111, %v188
  %190 = vmatmul.bf16.gmra.mxu0 %v167
  %v191 = vpop.f32.mrf.mxu0
  %v192 = vadd.f32 %v111, %v191
  %v193 = vpop.f32.mrf.mxu0
  %v194 = vadd.f32 %v111, %v193
  %195 = vmatmul.bf16.gmra.mxu0 %v170
  %v196 = vpop.f32.mrf.mxu0
  %v197 = vadd.f32 %v111, %v196
  %v198 = vpop.f32.mrf.mxu0
  %v199 = vadd.f32 %v111, %v198
  %200 = vdwg.mxu0
  %201 = vmatpush.bf16.msra.mxu0 0
  %202 = vmatpush.bf16.msra.mxu0 0
  %203 = vmatpush.bf16.msra.mxu0 0
  %204 = vmatpush.bf16.msra.mxu0 0
  %205 = vmatpush.bf16.msra.mxu0 0
  %206 = vmatpush.bf16.msra.mxu0 0
  %207 = vmatpush.bf16.msra.mxu0 0
  %208 = vmatpush.bf16.msra.mxu0 %v152
  %209 = vmatmul.bf16.gmra.mxu0 %v161
  %v210 = vpop.f32.mrf.mxu0
  %v211 = vadd.f32 %v112, %v210
  %v212 = vpop.f32.mrf.mxu0
  %v213 = vadd.f32 %v112, %v212
  %214 = vmatmul.bf16.gmra.mxu0 %v164
  %v215 = vpop.f32.mrf.mxu0
  %v216 = vadd.f32 %v112, %v215
  %v217 = vpop.f32.mrf.mxu0
  %v218 = vadd.f32 %v112, %v217
  %219 = vmatmul.bf16.gmra.mxu0 %v167
  %v220 = vpop.f32.mrf.mxu0
  %v221 = vadd.f32 %v112, %v220
  %v222 = vpop.f32.mrf.mxu0
  %v223 = vadd.f32 %v112, %v222
  %224 = vmatmul.bf16.gmra.mxu0 %v170
  %v225 = vpop.f32.mrf.mxu0
  %v226 = vadd.f32 %v112, %v225
  %v227 = vpop.f32.mrf.mxu0
  %v228 = vadd.f32 %v112, %v227
  %229 = vdwg.mxu0
  %230 = vmatpush.bf16.msra.mxu0 0
  %231 = vmatpush.bf16.msra.mxu0 0
  %232 = vmatpush.bf16.msra.mxu0 0
  %233 = vmatpush.bf16.msra.mxu0 0
  %234 = vmatpush.bf16.msra.mxu0 0
  %235 = vmatpush.bf16.msra.mxu0 0
  %236 = vmatpush.bf16.msra.mxu0 0
  %237 = vmatpush.bf16.msra.mxu0 %v153
  %238 = vmatmul.bf16.gmra.mxu0 %v161
  %v239 = vpop.f32.mrf.mxu0
  %v240 = vadd.f32 %v113, %v239
  %v241 = vpop.f32.mrf.mxu0
  %v242 = vadd.f32 %v113, %v241
  %243 = vmatmul.bf16.gmra.mxu0 %v164
  %v244 = vpop.f32.mrf.mxu0
  %v245 = vadd.f32 %v113, %v244
  %v246 = vpop.f32.mrf.mxu0
  %v247 = vadd.f32 %v113, %v246
  %248 = vmatmul.bf16.gmra.mxu0 %v167
  %v249 = vpop.f32.mrf.mxu0
  %v250 = vadd.f32 %v113, %v249
  %v251 = vpop.f32.mrf.mxu0
  %v252 = vadd.f32 %v113, %v251
  %253 = vmatmul.bf16.gmra.mxu0 %v170
  %v254 = vpop.f32.mrf.mxu0
  %v255 = vadd.f32 %v113, %v254
  %v256 = vpop.f32.mrf.mxu0
  %v257 = vadd.f32 %v113, %v256
  %258 = vdwg.mxu0
  %259 = vmatpush.bf16.msra.mxu0 0
  %260 = vmatpush.bf16.msra.mxu0 0
  %261 = vmatpush.bf16.msra.mxu0 0
  %262 = vmatpush.bf16.msra.mxu0 0
  %263 = vmatpush.bf16.msra.mxu0 0
  %264 = vmatpush.bf16.msra.mxu0 0
  %265 = vmatpush.bf16.msra.mxu0 0
  %266 = vmatpush.bf16.msra.mxu0 %v154
  %267 = vmatmul.bf16.gmra.mxu0 %v161
  %v268 = vpop.f32.mrf.mxu0
  %v269 = vadd.f32 %v114, %v268
  %v270 = vpop.f32.mrf.mxu0
  %v271 = vadd.f32 %v114, %v270
  %272 = vmatmul.bf16.gmra.mxu0 %v164
  %v273 = vpop.f32.mrf.mxu0
  %v274 = vadd.f32 %v114, %v273
  %v275 = vpop.f32.mrf.mxu0
  %v276 = vadd.f32 %v114, %v275
  %277 = vmatmul.bf16.gmra.mxu0 %v167
  %v278 = vpop.f32.mrf.mxu0
  %v279 = vadd.f32 %v114, %v278
  %v280 = vpop.f32.mrf.mxu0
  %v281 = vadd.f32 %v114, %v280
  %282 = vmatmul.bf16.gmra.mxu0 %v170
  %v283 = vpop.f32.mrf.mxu0
  %v284 = vadd.f32 %v114, %v283
  %v285 = vpop.f32.mrf.mxu0
  %v286 = vadd.f32 %v114, %v285
  %287 = vdwg.mxu0
  %v320 = vunpack.c.l.b16 %v37
  %v321 = vunpack.c.h.b16 %v37
  %v322 = vunpack.c.l.b16 %v38
  %v323 = vunpack.c.h.b16 %v38
  %v324 = vunpack.c.l.b16 %v39
  %v325 = vunpack.c.h.b16 %v39
  %v326 = vunpack.c.l.b16 %v40
  %v327 = vunpack.c.h.b16 %v40
  %v328 = vunpack.c.l.b16 %v41
  %v329 = vunpack.c.h.b16 %v41
  %v330 = vunpack.c.l.b16 %v42
  %v331 = vunpack.c.h.b16 %v42
  %v332 = vunpack.c.l.b16 %v43
  %v333 = vunpack.c.h.b16 %v43
  %v334 = vunpack.c.l.b16 %v44
  %v335 = vunpack.c.h.b16 %v44
  %v336 = vunpack.c.l.b16 %v45
  %v337 = vunpack.c.h.b16 %v45
  %v338 = vunpack.c.l.b16 %v46
  %v339 = vunpack.c.h.b16 %v46
  %v340 = vunpack.c.l.b16 %v47
  %v341 = vunpack.c.h.b16 %v47
  %v342 = vunpack.c.l.b16 %v48
  %v343 = vunpack.c.h.b16 %v48
  %v344 = vunpack.c.l.b16 %v49
  %v345 = vunpack.c.h.b16 %v49
  %v346 = vunpack.c.l.b16 %v50
  %v347 = vunpack.c.h.b16 %v50
  %v348 = vunpack.c.l.b16 %v51
  %v349 = vunpack.c.h.b16 %v51
  %v350 = vunpack.c.l.b16 %v52
  %v351 = vunpack.c.h.b16 %v52
  %v352 = vunpack.c.l.b16 %v53
  %v353 = vunpack.c.h.b16 %v53
  %v354 = vunpack.c.l.b16 %v54
  %v355 = vunpack.c.h.b16 %v54
  %v356 = vunpack.c.l.b16 %v55
  %v357 = vunpack.c.h.b16 %v55
  %v358 = vunpack.c.l.b16 %v56
  %v359 = vunpack.c.h.b16 %v56
  %v360 = vunpack.c.l.b16 %v57
  %v361 = vunpack.c.h.b16 %v57
  %v362 = vunpack.c.l.b16 %v58
  %v363 = vunpack.c.h.b16 %v58
  %v364 = vunpack.c.l.b16 %v59
  %v365 = vunpack.c.h.b16 %v59
  %v366 = vunpack.c.l.b16 %v60
  %v367 = vunpack.c.h.b16 %v60
  %v368 = vunpack.c.l.b16 %v61
  %v369 = vunpack.c.h.b16 %v61
  %v370 = vunpack.c.l.b16 %v62
  %v371 = vunpack.c.h.b16 %v62
  %v372 = vunpack.c.l.b16 %v63
  %v373 = vunpack.c.h.b16 %v63
  %v374 = vunpack.c.l.b16 %v64
  %v375 = vunpack.c.h.b16 %v64
  %v376 = vunpack.c.l.b16 %v65
  %v377 = vunpack.c.h.b16 %v65
  %v378 = vunpack.c.l.b16 %v66
  %v379 = vunpack.c.h.b16 %v66
  %v380 = vunpack.c.l.b16 %v67
  %v381 = vunpack.c.h.b16 %v67
  %v382 = vunpack.c.l.b16 %v68
  %v383 = vunpack.c.h.b16 %v68
  %v384 = vpack.c.b16 %v324, %v320
  %v385 = vpack.c.b16 %v325, %v321
  %v386 = vpack.c.b16 %v326, %v322
  %v387 = vpack.c.b16 %v327, %v323
  %v388 = vpack.c.b16 %v332, %v328
  %v389 = vpack.c.b16 %v333, %v329
  %v390 = vpack.c.b16 %v334, %v330
  %v391 = vpack.c.b16 %v335, %v331
  %v392 = vpack.c.b16 %v340, %v336
  %v393 = vpack.c.b16 %v341, %v337
  %v394 = vpack.c.b16 %v342, %v338
  %v395 = vpack.c.b16 %v343, %v339
  %v396 = vpack.c.b16 %v348, %v344
  %v397 = vpack.c.b16 %v349, %v345
  %v398 = vpack.c.b16 %v350, %v346
  %v399 = vpack.c.b16 %v351, %v347
  %v400 = vpack.c.b16 %v356, %v352
  %v401 = vpack.c.b16 %v357, %v353
  %v402 = vpack.c.b16 %v358, %v354
  %v403 = vpack.c.b16 %v359, %v355
  %v404 = vpack.c.b16 %v364, %v360
  %v405 = vpack.c.b16 %v365, %v361
  %v406 = vpack.c.b16 %v366, %v362
  %v407 = vpack.c.b16 %v367, %v363
  %v408 = vpack.c.b16 %v372, %v368
  %v409 = vpack.c.b16 %v373, %v369
  %v410 = vpack.c.b16 %v374, %v370
  %v411 = vpack.c.b16 %v375, %v371
  %v412 = vpack.c.b16 %v380, %v376
  %v413 = vpack.c.b16 %v381, %v377
  %v414 = vpack.c.b16 %v382, %v378
  %v415 = vpack.c.b16 %v383, %v379
  %448 = vmatpush.bf16.msra.mxu0 %v412
  %449 = vmatpush.bf16.msra.mxu0 %v408
  %450 = vmatpush.bf16.msra.mxu0 %v404
  %451 = vmatpush.bf16.msra.mxu0 %v400
  %452 = vmatpush.bf16.msra.mxu0 %v396
  %453 = vmatpush.bf16.msra.mxu0 %v392
  %454 = vmatpush.bf16.msra.mxu0 %v388
  %455 = vmatpush.bf16.msra.mxu0 %v384
  %456 = vmatmul.bf16.gmra.mxu0 0
  %v457 = vpop.f32.mrf.mxu0
  %v458 = vadd.f32 0.0, %v457
  %v459 = vpop.f32.mrf.mxu0
  %460 = vdwg.mxu0
  %461 = vmatpush.bf16.msra.mxu0 %v413
  %462 = vmatpush.bf16.msra.mxu0 %v409
  %463 = vmatpush.bf16.msra.mxu0 %v405
  %464 = vmatpush.bf16.msra.mxu0 %v401
  %465 = vmatpush.bf16.msra.mxu0 %v397
  %466 = vmatpush.bf16.msra.mxu0 %v393
  %467 = vmatpush.bf16.msra.mxu0 %v389
  %468 = vmatpush.bf16.msra.mxu0 %v385
  %469 = vmatmul.bf16.gmra.mxu0 0
  %v470 = vpop.f32.mrf.mxu0
  %v471 = vadd.f32 0.0, %v470
  %v472 = vpop.f32.mrf.mxu0
  %473 = vdwg.mxu0
  %474 = vmatpush.bf16.msra.mxu0 %v414
  %475 = vmatpush.bf16.msra.mxu0 %v410
  %476 = vmatpush.bf16.msra.mxu0 %v406
  %477 = vmatpush.bf16.msra.mxu0 %v402
  %478 = vmatpush.bf16.msra.mxu0 %v398
  %479 = vmatpush.bf16.msra.mxu0 %v394
  %480 = vmatpush.bf16.msra.mxu0 %v390
  %481 = vmatpush.bf16.msra.mxu0 %v386
  %482 = vmatmul.bf16.gmra.mxu0 0
  %v483 = vpop.f32.mrf.mxu0
  %v484 = vadd.f32 0.0, %v483
  %v485 = vpop.f32.mrf.mxu0
  %486 = vdwg.mxu0
  %487 = vmatpush.bf16.msra.mxu0 %v415
  %488 = vmatpush.bf16.msra.mxu0 %v411
  %489 = vmatpush.bf16.msra.mxu0 %v407
  %490 = vmatpush.bf16.msra.mxu0 %v403
  %491 = vmatpush.bf16.msra.mxu0 %v399
  %492 = vmatpush.bf16.msra.mxu0 %v395
  %493 = vmatpush.bf16.msra.mxu0 %v391
  %494 = vmatpush.bf16.msra.mxu0 %v387
  %495 = vmatmul.bf16.gmra.mxu0 0
  %v496 = vpop.f32.mrf.mxu0
  %v497 = vadd.f32 0.0, %v496
  %v498 = vpop.f32.mrf.mxu0
  %499 = vdwg.mxu0
  %v500 = vadd.f32 %v182, %v458
  %v501 = vadd.f32 %v211, %v471
  %v502 = vadd.f32 %v240, %v484
  %v503 = vadd.f32 %v269, %v497
  %v504 = vxor.u32 %v500, 2147483648
  %v505 = vmul.f32 %v504, 1.442695
  %v506 = vpow.pop %v505
  %v507 = vadd.f32 %v506, 1.0
  %v508 = vrcp.pop %v507
  %v509 = vmul.f32 %v507, %v508
  %v510 = vsub.f32 1.0, %v509
  %v511 = vmul.f32 %v508, %v510
  %v512 = vadd.f32 %v508, %v511
  %vm513 = vweird.f32 %v507
  %vm514 = vweird.f32 %v508
  %vm515 = vmor %vm513, %vm514
  %v516 = vsel %vm515, %v508, %v512
  %v517 = vand.u32 2147483647, %v507
  %vm518 = vcmp.eq.f32.partialorder %v517, 8.507059e+37
  %v519 = vand.u32 %v507, 2147483648
  %v520 = vor.u32 1.1754944e-38, %v519
  %v521 = vsel %vm518, %v520, %v516
  %v522 = vmul.f32 1.0, %v521
  %v523 = vxor.u32 %v501, 2147483648
  %v524 = vmul.f32 %v523, 1.442695
  %v525 = vpow.pop %v524
  %v526 = vadd.f32 %v525, 1.0
  %v527 = vrcp.pop %v526
  %v528 = vmul.f32 %v526, %v527
  %v529 = vsub.f32 1.0, %v528
  %v530 = vmul.f32 %v527, %v529
  %v531 = vadd.f32 %v527, %v530
  %vm532 = vweird.f32 %v526
  %vm533 = vweird.f32 %v527
  %vm534 = vmor %vm532, %vm533
  %v535 = vsel %vm534, %v527, %v531
  %v536 = vand.u32 2147483647, %v526
  %vm537 = vcmp.eq.f32.partialorder %v536, 8.507059e+37
  %v538 = vand.u32 %v526, 2147483648
  %v539 = vor.u32 1.1754944e-38, %v538
  %v540 = vsel %vm537, %v539, %v535
  %v541 = vmul.f32 1.0, %v540
  %v542 = vtanh.pop %v502
  %v543 = vxor.u32 %v503, 2147483648
  %v544 = vmul.f32 %v543, 1.442695
  %v545 = vpow.pop %v544
  %v546 = vadd.f32 %v545, 1.0
  %v547 = vrcp.pop %v546
  %v548 = vmul.f32 %v546, %v547
  %v549 = vsub.f32 1.0, %v548
  %v550 = vmul.f32 %v547, %v549
  %v551 = vadd.f32 %v547, %v550
  %vm552 = vweird.f32 %v546
  %vm553 = vweird.f32 %v547
  %vm554 = vmor %vm552, %vm553
  %v555 = vsel %vm554, %v547, %v551
  %v556 = vand.u32 2147483647, %v546
  %vm557 = vcmp.eq.f32.partialorder %v556, 8.507059e+37
  %v558 = vand.u32 %v546, 2147483648
  %v559 = vor.u32 1.1754944e-38, %v558
  %v560 = vsel %vm557, %v559, %v555
  %v561 = vmul.f32 1.0, %v560
  %v562 = vmul.f32 %v541, 0.0
  %v563 = vmul.f32 %v522, %v542
  %v564 = vadd.f32 %v562, %v563
  %v565 = vtanh.pop %v564
  %v566 = vmul.f32 %v561, %v565
  %v567 = vpack.c.bf16 %v566, %v566
  %568 = vmatpush.bf16.msra.mxu0 %v412
  %569 = vmatpush.bf16.msra.mxu0 %v408
  %570 = vmatpush.bf16.msra.mxu0 %v404
  %571 = vmatpush.bf16.msra.mxu0 %v400
  %572 = vmatpush.bf16.msra.mxu0 %v396
  %573 = vmatpush.bf16.msra.mxu0 %v392
  %574 = vmatpush.bf16.msra.mxu0 %v388
  %575 = vmatpush.bf16.msra.mxu0 %v384
  %576 = vmatmul.bf16.gmra.mxu0 %v567
  %v577 = vpop.f32.mrf.mxu0
  %v578 = vadd.f32 0.0, %v577
  %v579 = vpop.f32.mrf.mxu0
  %580 = vdwg.mxu0
  %581 = vmatpush.bf16.msra.mxu0 %v413
  %582 = vmatpush.bf16.msra.mxu0 %v409
  %583 = vmatpush.bf16.msra.mxu0 %v405
  %584 = vmatpush.bf16.msra.mxu0 %v401
  %585 = vmatpush.bf16.msra.mxu0 %v397
  %586 = vmatpush.bf16.msra.mxu0 %v393
  %587 = vmatpush.bf16.msra.mxu0 %v389
  %588 = vmatpush.bf16.msra.mxu0 %v385
  %589 = vmatmul.bf16.gmra.mxu0 %v567
  %v590 = vpop.f32.mrf.mxu0
  %v591 = vadd.f32 0.0, %v590
  %v592 = vpop.f32.mrf.mxu0
  %593 = vdwg.mxu0
  %594 = vmatpush.bf16.msra.mxu0 %v414
  %595 = vmatpush.bf16.msra.mxu0 %v410
  %596 = vmatpush.bf16.msra.mxu0 %v406
  %597 = vmatpush.bf16.msra.mxu0 %v402
  %598 = vmatpush.bf16.msra.mxu0 %v398
  %599 = vmatpush.bf16.msra.mxu0 %v394
  %600 = vmatpush.bf16.msra.mxu0 %v390
  %601 = vmatpush.bf16.msra.mxu0 %v386
  %602 = vmatmul.bf16.gmra.mxu0 %v567
  %v603 = vpop.f32.mrf.mxu0
  %v604 = vadd.f32 0.0, %v603
  %v605 = vpop.f32.mrf.mxu0
  %606 = vdwg.mxu0
  %607 = vmatpush.bf16.msra.mxu0 %v415
  %608 = vmatpush.bf16.msra.mxu0 %v411
  %609 = vmatpush.bf16.msra.mxu0 %v407
  %610 = vmatpush.bf16.msra.mxu0 %v403
  %611 = vmatpush.bf16.msra.mxu0 %v399
  %612 = vmatpush.bf16.msra.mxu0 %v395
  %613 = vmatpush.bf16.msra.mxu0 %v391
  %614 = vmatpush.bf16.msra.mxu0 %v387
  %615 = vmatmul.bf16.gmra.mxu0 %v567
  %v616 = vpop.f32.mrf.mxu0
  %v617 = vadd.f32 0.0, %v616
  %v618 = vpop.f32.mrf.mxu0
  %619 = vdwg.mxu0
  %v620 = vadd.f32 %v184, %v578
  %v621 = vadd.f32 %v213, %v591
  %v622 = vadd.f32 %v242, %v604
  %v623 = vadd.f32 %v271, %v617
  %v624 = vxor.u32 %v620, 2147483648
  %v625 = vmul.f32 %v624, 1.442695
  %v626 = vpow.pop %v625
  %v627 = vadd.f32 %v626, 1.0
  %v628 = vrcp.pop %v627
  %v629 = vmul.f32 %v627, %v628
  %v630 = vsub.f32 1.0, %v629
  %v631 = vmul.f32 %v628, %v630
  %v632 = vadd.f32 %v628, %v631
  %vm633 = vweird.f32 %v627
  %vm634 = vweird.f32 %v628
  %vm635 = vmor %vm633, %vm634
  %v636 = vsel %vm635, %v628, %v632
  %v637 = vand.u32 2147483647, %v627
  %vm638 = vcmp.eq.f32.partialorder %v637, 8.507059e+37
  %v639 = vand.u32 %v627, 2147483648
  %v640 = vor.u32 1.1754944e-38, %v639
  %v641 = vsel %vm638, %v640, %v636
  %v642 = vmul.f32 1.0, %v641
  %v643 = vxor.u32 %v621, 2147483648
  %v644 = vmul.f32 %v643, 1.442695
  %v645 = vpow.pop %v644
  %v646 = vadd.f32 %v645, 1.0
  %v647 = vrcp.pop %v646
  %v648 = vmul.f32 %v646, %v647
  %v649 = vsub.f32 1.0, %v648
  %v650 = vmul.f32 %v647, %v649
  %v651 = vadd.f32 %v647, %v650
  %vm652 = vweird.f32 %v646
  %vm653 = vweird.f32 %v647
  %vm654 = vmor %vm652, %vm653
  %v655 = vsel %vm654, %v647, %v651
  %v656 = vand.u32 2147483647, %v646
  %vm657 = vcmp.eq.f32.partialorder %v656, 8.507059e+37
  %v658 = vand.u32 %v646, 2147483648
  %v659 = vor.u32 1.1754944e-38, %v658
  %v660 = vsel %vm657, %v659, %v655
  %v661 = vmul.f32 1.0, %v660
  %v662 = vtanh.pop %v622
  %v663 = vxor.u32 %v623, 2147483648
  %v664 = vmul.f32 %v663, 1.442695
  %v665 = vpow.pop %v664
  %v666 = vadd.f32 %v665, 1.0
  %v667 = vrcp.pop %v666
  %v668 = vmul.f32 %v666, %v667
  %v669 = vsub.f32 1.0, %v668
  %v670 = vmul.f32 %v667, %v669
  %v671 = vadd.f32 %v667, %v670
  %vm672 = vweird.f32 %v666
  %vm673 = vweird.f32 %v667
  %vm674 = vmor %vm672, %vm673
  %v675 = vsel %vm674, %v667, %v671
  %v676 = vand.u32 2147483647, %v666
  %vm677 = vcmp.eq.f32.partialorder %v676, 8.507059e+37
  %v678 = vand.u32 %v666, 2147483648
  %v679 = vor.u32 1.1754944e-38, %v678
  %v680 = vsel %vm677, %v679, %v675
  %v681 = vmul.f32 1.0, %v680
  %v682 = vmul.f32 %v661, %v564
  %v683 = vmul.f32 %v642, %v662
  %v684 = vadd.f32 %v682, %v683
  %v685 = vtanh.pop %v684
  %v686 = vmul.f32 %v681, %v685
  %v687 = vpack.c.bf16 %v686, %v686
  %688 = vmatpush.bf16.msra.mxu0 %v412
  %689 = vmatpush.bf16.msra.mxu0 %v408
  %690 = vmatpush.bf16.msra.mxu0 %v404
  %691 = vmatpush.bf16.msra.mxu0 %v400
  %692 = vmatpush.bf16.msra.mxu0 %v396
  %693 = vmatpush.bf16.msra.mxu0 %v392
  %694 = vmatpush.bf16.msra.mxu0 %v388
  %695 = vmatpush.bf16.msra.mxu0 %v384
  %696 = vmatmul.bf16.gmra.mxu0 %v687
  %v697 = vpop.f32.mrf.mxu0
  %v698 = vadd.f32 0.0, %v697
  %v699 = vpop.f32.mrf.mxu0
  %700 = vdwg.mxu0
  %701 = vmatpush.bf16.msra.mxu0 %v413
  %702 = vmatpush.bf16.msra.mxu0 %v409
  %703 = vmatpush.bf16.msra.mxu0 %v405
  %704 = vmatpush.bf16.msra.mxu0 %v401
  %705 = vmatpush.bf16.msra.mxu0 %v397
  %706 = vmatpush.bf16.msra.mxu0 %v393
  %707 = vmatpush.bf16.msra.mxu0 %v389
  %708 = vmatpush.bf16.msra.mxu0 %v385
  %709 = vmatmul.bf16.gmra.mxu0 %v687
  %v710 = vpop.f32.mrf.mxu0
  %v711 = vadd.f32 0.0, %v710
  %v712 = vpop.f32.mrf.mxu0
  %713 = vdwg.mxu0
  %714 = vmatpush.bf16.msra.mxu0 %v414
  %715 = vmatpush.bf16.msra.mxu0 %v410
  %716 = vmatpush.bf16.msra.mxu0 %v406
  %717 = vmatpush.bf16.msra.mxu0 %v402
  %718 = vmatpush.bf16.msra.mxu0 %v398
  %719 = vmatpush.bf16.msra.mxu0 %v394
  %720 = vmatpush.bf16.msra.mxu0 %v390
  %721 = vmatpush.bf16.msra.mxu0 %v386
  %722 = vmatmul.bf16.gmra.mxu0 %v687
  %v723 = vpop.f32.mrf.mxu0
  %v724 = vadd.f32 0.0, %v723
  %v725 = vpop.f32.mrf.mxu0
  %726 = vdwg.mxu0
  %727 = vmatpush.bf16.msra.mxu0 %v415
  %728 = vmatpush.bf16.msra.mxu0 %v411
  %729 = vmatpush.bf16.msra.mxu0 %v407
  %730 = vmatpush.bf16.msra.mxu0 %v403
  %731 = vmatpush.bf16.msra.mxu0 %v399
  %732 = vmatpush.bf16.msra.mxu0 %v395
  %733 = vmatpush.bf16.msra.mxu0 %v391
  %734 = vmatpush.bf16.msra.mxu0 %v387
  %735 = vmatmul.bf16.gmra.mxu0 %v687
  %v736 = vpop.f32.mrf.mxu0
  %v737 = vadd.f32 0.0, %v736
  %v738 = vpop.f32.mrf.mxu0
  %739 = vdwg.mxu0
  %v740 = vadd.f32 %v187, %v698
  %v741 = vadd.f32 %v216, %v711
  %v742 = vadd.f32 %v245, %v724
  %v743 = vadd.f32 %v274, %v737
  %v744 = vxor.u32 %v740, 2147483648
  %v745 = vmul.f32 %v744, 1.442695
  %v746 = vpow.pop %v745
  %v747 = vadd.f32 %v746, 1.0
  %v748 = vrcp.pop %v747
  %v749 = vmul.f32 %v747, %v748
  %v750 = vsub.f32 1.0, %v749
  %v751 = vmul.f32 %v748, %v750
  %v752 = vadd.f32 %v748, %v751
  %vm753 = vweird.f32 %v747
  %vm754 = vweird.f32 %v748
  %vm755 = vmor %vm753, %vm754
  %v756 = vsel %vm755, %v748, %v752
  %v757 = vand.u32 2147483647, %v747
  %vm758 = vcmp.eq.f32.partialorder %v757, 8.507059e+37
  %v759 = vand.u32 %v747, 2147483648
  %v760 = vor.u32 1.1754944e-38, %v759
  %v761 = vsel %vm758, %v760, %v756
  %v762 = vmul.f32 1.0, %v761
  %v763 = vxor.u32 %v741, 2147483648
  %v764 = vmul.f32 %v763, 1.442695
  %v765 = vpow.pop %v764
  %v766 = vadd.f32 %v765, 1.0
  %v767 = vrcp.pop %v766
  %v768 = vmul.f32 %v766, %v767
  %v769 = vsub.f32 1.0, %v768
  %v770 = vmul.f32 %v767, %v769
  %v771 = vadd.f32 %v767, %v770
  %vm772 = vweird.f32 %v766
  %vm773 = vweird.f32 %v767
  %vm774 = vmor %vm772, %vm773
  %v775 = vsel %vm774, %v767, %v771
  %v776 = vand.u32 2147483647, %v766
  %vm777 = vcmp.eq.f32.partialorder %v776, 8.507059e+37
  %v778 = vand.u32 %v766, 2147483648
  %v779 = vor.u32 1.1754944e-38, %v778
  %v780 = vsel %vm777, %v779, %v775
  %v781 = vmul.f32 1.0, %v780
  %v782 = vtanh.pop %v742
  %v783 = vxor.u32 %v743, 2147483648
  %v784 = vmul.f32 %v783, 1.442695
  %v785 = vpow.pop %v784
  %v786 = vadd.f32 %v785, 1.0
  %v787 = vrcp.pop %v786
  %v788 = vmul.f32 %v786, %v787
  %v789 = vsub.f32 1.0, %v788
  %v790 = vmul.f32 %v787, %v789
  %v791 = vadd.f32 %v787, %v790
  %vm792 = vweird.f32 %v786
  %vm793 = vweird.f32 %v787
  %vm794 = vmor %vm792, %vm793
  %v795 = vsel %vm794, %v787, %v791
  %v796 = vand.u32 2147483647, %v786
  %vm797 = vcmp.eq.f32.partialorder %v796, 8.507059e+37
  %v798 = vand.u32 %v786, 2147483648
  %v799 = vor.u32 1.1754944e-38, %v798
  %v800 = vsel %vm797, %v799, %v795
  %v801 = vmul.f32 1.0, %v800
  %v802 = vmul.f32 %v781, %v684
  %v803 = vmul.f32 %v762, %v782
  %v804 = vadd.f32 %v802, %v803
  %v805 = vtanh.pop %v804
  %v806 = vmul.f32 %v801, %v805
  %v807 = vpack.c.bf16 %v806, %v806
  %808 = vmatpush.bf16.msra.mxu0 %v412
  %809 = vmatpush.bf16.msra.mxu0 %v408
  %810 = vmatpush.bf16.msra.mxu0 %v404
  %811 = vmatpush.bf16.msra.mxu0 %v400
  %812 = vmatpush.bf16.msra.mxu0 %v396
  %813 = vmatpush.bf16.msra.mxu0 %v392
  %814 = vmatpush.bf16.msra.mxu0 %v388
  %815 = vmatpush.bf16.msra.mxu0 %v384
  %816 = vmatmul.bf16.gmra.mxu0 %v807
  %v817 = vpop.f32.mrf.mxu0
  %v818 = vadd.f32 0.0, %v817
  %v819 = vpop.f32.mrf.mxu0
  %820 = vdwg.mxu0
  %821 = vmatpush.bf16.msra.mxu0 %v413
  %822 = vmatpush.bf16.msra.mxu0 %v409
  %823 = vmatpush.bf16.msra.mxu0 %v405
  %824 = vmatpush.bf16.msra.mxu0 %v401
  %825 = vmatpush.bf16.msra.mxu0 %v397
  %826 = vmatpush.bf16.msra.mxu0 %v393
  %827 = vmatpush.bf16.msra.mxu0 %v389
  %828 = vmatpush.bf16.msra.mxu0 %v385
  %829 = vmatmul.bf16.gmra.mxu0 %v807
  %v830 = vpop.f32.mrf.mxu0
  %v831 = vadd.f32 0.0, %v830
  %v832 = vpop.f32.mrf.mxu0
  %833 = vdwg.mxu0
  %834 = vmatpush.bf16.msra.mxu0 %v414
  %835 = vmatpush.bf16.msra.mxu0 %v410
  %836 = vmatpush.bf16.msra.mxu0 %v406
  %837 = vmatpush.bf16.msra.mxu0 %v402
  %838 = vmatpush.bf16.msra.mxu0 %v398
  %839 = vmatpush.bf16.msra.mxu0 %v394
  %840 = vmatpush.bf16.msra.mxu0 %v390
  %841 = vmatpush.bf16.msra.mxu0 %v386
  %842 = vmatmul.bf16.gmra.mxu0 %v807
  %v843 = vpop.f32.mrf.mxu0
  %v844 = vadd.f32 0.0, %v843
  %v845 = vpop.f32.mrf.mxu0
  %846 = vdwg.mxu0
  %847 = vmatpush.bf16.msra.mxu0 %v415
  %848 = vmatpush.bf16.msra.mxu0 %v411
  %849 = vmatpush.bf16.msra.mxu0 %v407
  %850 = vmatpush.bf16.msra.mxu0 %v403
  %851 = vmatpush.bf16.msra.mxu0 %v399
  %852 = vmatpush.bf16.msra.mxu0 %v395
  %853 = vmatpush.bf16.msra.mxu0 %v391
  %854 = vmatpush.bf16.msra.mxu0 %v387
  %855 = vmatmul.bf16.gmra.mxu0 %v807
  %v856 = vpop.f32.mrf.mxu0
  %v857 = vadd.f32 0.0, %v856
  %v858 = vpop.f32.mrf.mxu0
  %859 = vdwg.mxu0
  %v860 = vadd.f32 %v189, %v818
  %v861 = vadd.f32 %v218, %v831
  %v862 = vadd.f32 %v247, %v844
  %v863 = vadd.f32 %v276, %v857
  %v864 = vxor.u32 %v860, 2147483648
  %v865 = vmul.f32 %v864, 1.442695
  %v866 = vpow.pop %v865
  %v867 = vadd.f32 %v866, 1.0
  %v868 = vrcp.pop %v867
  %v869 = vmul.f32 %v867, %v868
  %v870 = vsub.f32 1.0, %v869
  %v871 = vmul.f32 %v868, %v870
  %v872 = vadd.f32 %v868, %v871
  %vm873 = vweird.f32 %v867
  %vm874 = vweird.f32 %v868
  %vm875 = vmor %vm873, %vm874
  %v876 = vsel %vm875, %v868, %v872
  %v877 = vand.u32 2147483647, %v867
  %vm878 = vcmp.eq.f32.partialorder %v877, 8.507059e+37
  %v879 = vand.u32 %v867, 2147483648
  %v880 = vor.u32 1.1754944e-38, %v879
  %v881 = vsel %vm878, %v880, %v876
  %v882 = vmul.f32 1.0, %v881
  %v883 = vxor.u32 %v861, 2147483648
  %v884 = vmul.f32 %v883, 1.442695
  %v885 = vpow.pop %v884
  %v886 = vadd.f32 %v885, 1.0
  %v887 = vrcp.pop %v886
  %v888 = vmul.f32 %v886, %v887
  %v889 = vsub.f32 1.0, %v888
  %v890 = vmul.f32 %v887, %v889
  %v891 = vadd.f32 %v887, %v890
  %vm892 = vweird.f32 %v886
  %vm893 = vweird.f32 %v887
  %vm894 = vmor %vm892, %vm893
  %v895 = vsel %vm894, %v887, %v891
  %v896 = vand.u32 2147483647, %v886
  %vm897 = vcmp.eq.f32.partialorder %v896, 8.507059e+37
  %v898 = vand.u32 %v886, 2147483648
  %v899 = vor.u32 1.1754944e-38, %v898
  %v900 = vsel %vm897, %v899, %v895
  %v901 = vmul.f32 1.0, %v900
  %v902 = vtanh.pop %v862
  %v903 = vxor.u32 %v863, 2147483648
  %v904 = vmul.f32 %v903, 1.442695
  %v905 = vpow.pop %v904
  %v906 = vadd.f32 %v905, 1.0
  %v907 = vrcp.pop %v906
  %v908 = vmul.f32 %v906, %v907
  %v909 = vsub.f32 1.0, %v908
  %v910 = vmul.f32 %v907, %v909
  %v911 = vadd.f32 %v907, %v910
  %vm912 = vweird.f32 %v906
  %vm913 = vweird.f32 %v907
  %vm914 = vmor %vm912, %vm913
  %v915 = vsel %vm914, %v907, %v911
  %v916 = vand.u32 2147483647, %v906
  %vm917 = vcmp.eq.f32.partialorder %v916, 8.507059e+37
  %v918 = vand.u32 %v906, 2147483648
  %v919 = vor.u32 1.1754944e-38, %v918
  %v920 = vsel %vm917, %v919, %v915
  %v921 = vmul.f32 1.0, %v920
  %v922 = vmul.f32 %v901, %v804
  %v923 = vmul.f32 %v882, %v902
  %v924 = vadd.f32 %v922, %v923
  %v925 = vtanh.pop %v924
  %v926 = vmul.f32 %v921, %v925
  %v927 = vpack.c.bf16 %v926, %v926
  %928 = vmatpush.bf16.msra.mxu0 %v412
  %929 = vmatpush.bf16.msra.mxu0 %v408
  %930 = vmatpush.bf16.msra.mxu0 %v404
  %931 = vmatpush.bf16.msra.mxu0 %v400
  %932 = vmatpush.bf16.msra.mxu0 %v396
  %933 = vmatpush.bf16.msra.mxu0 %v392
  %934 = vmatpush.bf16.msra.mxu0 %v388
  %935 = vmatpush.bf16.msra.mxu0 %v384
  %936 = vmatmul.bf16.gmra.mxu0 %v927
  %v937 = vpop.f32.mrf.mxu0
  %v938 = vadd.f32 0.0, %v937
  %v939 = vpop.f32.mrf.mxu0
  %940 = vdwg.mxu0
  %941 = vmatpush.bf16.msra.mxu0 %v413
  %942 = vmatpush.bf16.msra.mxu0 %v409
  %943 = vmatpush.bf16.msra.mxu0 %v405
  %944 = vmatpush.bf16.msra.mxu0 %v401
  %945 = vmatpush.bf16.msra.mxu0 %v397
  %946 = vmatpush.bf16.msra.mxu0 %v393
  %947 = vmatpush.bf16.msra.mxu0 %v389
  %948 = vmatpush.bf16.msra.mxu0 %v385
  %949 = vmatmul.bf16.gmra.mxu0 %v927
  %v950 = vpop.f32.mrf.mxu0
  %v951 = vadd.f32 0.0, %v950
  %v952 = vpop.f32.mrf.mxu0
  %953 = vdwg.mxu0
  %954 = vmatpush.bf16.msra.mxu0 %v414
  %955 = vmatpush.bf16.msra.mxu0 %v410
  %956 = vmatpush.bf16.msra.mxu0 %v406
  %957 = vmatpush.bf16.msra.mxu0 %v402
  %958 = vmatpush.bf16.msra.mxu0 %v398
  %959 = vmatpush.bf16.msra.mxu0 %v394
  %960 = vmatpush.bf16.msra.mxu0 %v390
  %961 = vmatpush.bf16.msra.mxu0 %v386
  %962 = vmatmul.bf16.gmra.mxu0 %v927
  %v963 = vpop.f32.mrf.mxu0
  %v964 = vadd.f32 0.0, %v963
  %v965 = vpop.f32.mrf.mxu0
  %966 = vdwg.mxu0
  %967 = vmatpush.bf16.msra.mxu0 %v415
  %968 = vmatpush.bf16.msra.mxu0 %v411
  %969 = vmatpush.bf16.msra.mxu0 %v407
  %970 = vmatpush.bf16.msra.mxu0 %v403
  %971 = vmatpush.bf16.msra.mxu0 %v399
  %972 = vmatpush.bf16.msra.mxu0 %v395
  %973 = vmatpush.bf16.msra.mxu0 %v391
  %974 = vmatpush.bf16.msra.mxu0 %v387
  %975 = vmatmul.bf16.gmra.mxu0 %v927
  %v976 = vpop.f32.mrf.mxu0
  %v977 = vadd.f32 0.0, %v976
  %v978 = vpop.f32.mrf.mxu0
  %979 = vdwg.mxu0
  %v980 = vadd.f32 %v192, %v938
  %v981 = vadd.f32 %v221, %v951
  %v982 = vadd.f32 %v250, %v964
  %v983 = vadd.f32 %v279, %v977
  %v984 = vxor.u32 %v980, 2147483648
  %v985 = vmul.f32 %v984, 1.442695
  %v986 = vpow.pop %v985
  %v987 = vadd.f32 %v986, 1.0
  %v988 = vrcp.pop %v987
  %v989 = vmul.f32 %v987, %v988
  %v990 = vsub.f32 1.0, %v989
  %v991 = vmul.f32 %v988, %v990
  %v992 = vadd.f32 %v988, %v991
  %vm993 = vweird.f32 %v987
  %vm994 = vweird.f32 %v988
  %vm995 = vmor %vm993, %vm994
  %v996 = vsel %vm995, %v988, %v992
  %v997 = vand.u32 2147483647, %v987
  %vm998 = vcmp.eq.f32.partialorder %v997, 8.507059e+37
  %v999 = vand.u32 %v987, 2147483648
  %v1000 = vor.u32 1.1754944e-38, %v999
  %v1001 = vsel %vm998, %v1000, %v996
  %v1002 = vmul.f32 1.0, %v1001
  %v1003 = vxor.u32 %v981, 2147483648
  %v1004 = vmul.f32 %v1003, 1.442695
  %v1005 = vpow.pop %v1004
  %v1006 = vadd.f32 %v1005, 1.0
  %v1007 = vrcp.pop %v1006
  %v1008 = vmul.f32 %v1006, %v1007
  %v1009 = vsub.f32 1.0, %v1008
  %v1010 = vmul.f32 %v1007, %v1009
  %v1011 = vadd.f32 %v1007, %v1010
  %vm1012 = vweird.f32 %v1006
  %vm1013 = vweird.f32 %v1007
  %vm1014 = vmor %vm1012, %vm1013
  %v1015 = vsel %vm1014, %v1007, %v1011
  %v1016 = vand.u32 2147483647, %v1006
  %vm1017 = vcmp.eq.f32.partialorder %v1016, 8.507059e+37
  %v1018 = vand.u32 %v1006, 2147483648
  %v1019 = vor.u32 1.1754944e-38, %v1018
  %v1020 = vsel %vm1017, %v1019, %v1015
  %v1021 = vmul.f32 1.0, %v1020
  %v1022 = vtanh.pop %v982
  %v1023 = vxor.u32 %v983, 2147483648
  %v1024 = vmul.f32 %v1023, 1.442695
  %v1025 = vpow.pop %v1024
  %v1026 = vadd.f32 %v1025, 1.0
  %v1027 = vrcp.pop %v1026
  %v1028 = vmul.f32 %v1026, %v1027
  %v1029 = vsub.f32 1.0, %v1028
  %v1030 = vmul.f32 %v1027, %v1029
  %v1031 = vadd.f32 %v1027, %v1030
  %vm1032 = vweird.f32 %v1026
  %vm1033 = vweird.f32 %v1027
  %vm1034 = vmor %vm1032, %vm1033
  %v1035 = vsel %vm1034, %v1027, %v1031
  %v1036 = vand.u32 2147483647, %v1026
  %vm1037 = vcmp.eq.f32.partialorder %v1036, 8.507059e+37
  %v1038 = vand.u32 %v1026, 2147483648
  %v1039 = vor.u32 1.1754944e-38, %v1038
  %v1040 = vsel %vm1037, %v1039, %v1035
  %v1041 = vmul.f32 1.0, %v1040
  %v1042 = vmul.f32 %v1021, %v924
  %v1043 = vmul.f32 %v1002, %v1022
  %v1044 = vadd.f32 %v1042, %v1043
  %v1045 = vtanh.pop %v1044
  %v1046 = vmul.f32 %v1041, %v1045
  %v1047 = vpack.c.bf16 %v1046, %v1046
  %1048 = vmatpush.bf16.msra.mxu0 %v412
  %1049 = vmatpush.bf16.msra.mxu0 %v408
  %1050 = vmatpush.bf16.msra.mxu0 %v404
  %1051 = vmatpush.bf16.msra.mxu0 %v400
  %1052 = vmatpush.bf16.msra.mxu0 %v396
  %1053 = vmatpush.bf16.msra.mxu0 %v392
  %1054 = vmatpush.bf16.msra.mxu0 %v388
  %1055 = vmatpush.bf16.msra.mxu0 %v384
  %1056 = vmatmul.bf16.gmra.mxu0 %v1047
  %v1057 = vpop.f32.mrf.mxu0
  %v1058 = vadd.f32 0.0, %v1057
  %v1059 = vpop.f32.mrf.mxu0
  %1060 = vdwg.mxu0
  %1061 = vmatpush.bf16.msra.mxu0 %v413
  %1062 = vmatpush.bf16.msra.mxu0 %v409
  %1063 = vmatpush.bf16.msra.mxu0 %v405
  %1064 = vmatpush.bf16.msra.mxu0 %v401
  %1065 = vmatpush.bf16.msra.mxu0 %v397
  %1066 = vmatpush.bf16.msra.mxu0 %v393
  %1067 = vmatpush.bf16.msra.mxu0 %v389
  %1068 = vmatpush.bf16.msra.mxu0 %v385
  %1069 = vmatmul.bf16.gmra.mxu0 %v1047
  %v1070 = vpop.f32.mrf.mxu0
  %v1071 = vadd.f32 0.0, %v1070
  %v1072 = vpop.f32.mrf.mxu0
  %1073 = vdwg.mxu0
  %1074 = vmatpush.bf16.msra.mxu0 %v414
  %1075 = vmatpush.bf16.msra.mxu0 %v410
  %1076 = vmatpush.bf16.msra.mxu0 %v406
  %1077 = vmatpush.bf16.msra.mxu0 %v402
  %1078 = vmatpush.bf16.msra.mxu0 %v398
  %1079 = vmatpush.bf16.msra.mxu0 %v394
  %1080 = vmatpush.bf16.msra.mxu0 %v390
  %1081 = vmatpush.bf16.msra.mxu0 %v386
  %1082 = vmatmul.bf16.gmra.mxu0 %v1047
  %v1083 = vpop.f32.mrf.mxu0
  %v1084 = vadd.f32 0.0, %v1083
  %v1085 = vpop.f32.mrf.mxu0
  %1086 = vdwg.mxu0
  %1087 = vmatpush.bf16.msra.mxu0 %v415
  %1088 = vmatpush.bf16.msra.mxu0 %v411
  %1089 = vmatpush.bf16.msra.mxu0 %v407
  %1090 = vmatpush.bf16.msra.mxu0 %v403
  %1091 = vmatpush.bf16.msra.mxu0 %v399
  %1092 = vmatpush.bf16.msra.mxu0 %v395
  %1093 = vmatpush.bf16.msra.mxu0 %v391
  %1094 = vmatpush.bf16.msra.mxu0 %v387
  %1095 = vmatmul.bf16.gmra.mxu0 %v1047
  %v1096 = vpop.f32.mrf.mxu0
  %v1097 = vadd.f32 0.0, %v1096
  %v1098 = vpop.f32.mrf.mxu0
  %1099 = vdwg.mxu0
  %v1100 = vadd.f32 %v194, %v1058
  %v1101 = vadd.f32 %v223, %v1071
  %v1102 = vadd.f32 %v252, %v1084
  %v1103 = vadd.f32 %v281, %v1097
  %v1104 = vxor.u32 %v1100, 2147483648
  %v1105 = vmul.f32 %v1104, 1.442695
  %v1106 = vpow.pop %v1105
  %v1107 = vadd.f32 %v1106, 1.0
  %v1108 = vrcp.pop %v1107
  %v1109 = vmul.f32 %v1107, %v1108
  %v1110 = vsub.f32 1.0, %v1109
  %v1111 = vmul.f32 %v1108, %v1110
  %v1112 = vadd.f32 %v1108, %v1111
  %vm1113 = vweird.f32 %v1107
  %vm1114 = vweird.f32 %v1108
  %vm1115 = vmor %vm1113, %vm1114
  %v1116 = vsel %vm1115, %v1108, %v1112
  %v1117 = vand.u32 2147483647, %v1107
  %vm1118 = vcmp.eq.f32.partialorder %v1117, 8.507059e+37
  %v1119 = vand.u32 %v1107, 2147483648
  %v1120 = vor.u32 1.1754944e-38, %v1119
  %v1121 = vsel %vm1118, %v1120, %v1116
  %v1122 = vmul.f32 1.0, %v1121
  %v1123 = vxor.u32 %v1101, 2147483648
  %v1124 = vmul.f32 %v1123, 1.442695
  %v1125 = vpow.pop %v1124
  %v1126 = vadd.f32 %v1125, 1.0
  %v1127 = vrcp.pop %v1126
  %v1128 = vmul.f32 %v1126, %v1127
  %v1129 = vsub.f32 1.0, %v1128
  %v1130 = vmul.f32 %v1127, %v1129
  %v1131 = vadd.f32 %v1127, %v1130
  %vm1132 = vweird.f32 %v1126
  %vm1133 = vweird.f32 %v1127
  %vm1134 = vmor %vm1132, %vm1133
  %v1135 = vsel %vm1134, %v1127, %v1131
  %v1136 = vand.u32 2147483647, %v1126
  %vm1137 = vcmp.eq.f32.partialorder %v1136, 8.507059e+37
  %v1138 = vand.u32 %v1126, 2147483648
  %v1139 = vor.u32 1.1754944e-38, %v1138
  %v1140 = vsel %vm1137, %v1139, %v1135
  %v1141 = vmul.f32 1.0, %v1140
  %v1142 = vtanh.pop %v1102
  %v1143 = vxor.u32 %v1103, 2147483648
  %v1144 = vmul.f32 %v1143, 1.442695
  %v1145 = vpow.pop %v1144
  %v1146 = vadd.f32 %v1145, 1.0
  %v1147 = vrcp.pop %v1146
  %v1148 = vmul.f32 %v1146, %v1147
  %v1149 = vsub.f32 1.0, %v1148
  %v1150 = vmul.f32 %v1147, %v1149
  %v1151 = vadd.f32 %v1147, %v1150
  %vm1152 = vweird.f32 %v1146
  %vm1153 = vweird.f32 %v1147
  %vm1154 = vmor %vm1152, %vm1153
  %v1155 = vsel %vm1154, %v1147, %v1151
  %v1156 = vand.u32 2147483647, %v1146
  %vm1157 = vcmp.eq.f32.partialorder %v1156, 8.507059e+37
  %v1158 = vand.u32 %v1146, 2147483648
  %v1159 = vor.u32 1.1754944e-38, %v1158
  %v1160 = vsel %vm1157, %v1159, %v1155
  %v1161 = vmul.f32 1.0, %v1160
  %v1162 = vmul.f32 %v1141, %v1044
  %v1163 = vmul.f32 %v1122, %v1142
  %v1164 = vadd.f32 %v1162, %v1163
  %v1165 = vtanh.pop %v1164
  %v1166 = vmul.f32 %v1161, %v1165
  %v1167 = vpack.c.bf16 %v1166, %v1166
  %1168 = vmatpush.bf16.msra.mxu0 %v412
  %1169 = vmatpush.bf16.msra.mxu0 %v408
  %1170 = vmatpush.bf16.msra.mxu0 %v404
  %1171 = vmatpush.bf16.msra.mxu0 %v400
  %1172 = vmatpush.bf16.msra.mxu0 %v396
  %1173 = vmatpush.bf16.msra.mxu0 %v392
  %1174 = vmatpush.bf16.msra.mxu0 %v388
  %1175 = vmatpush.bf16.msra.mxu0 %v384
  %1176 = vmatmul.bf16.gmra.mxu0 %v1167
  %v1177 = vpop.f32.mrf.mxu0
  %v1178 = vadd.f32 0.0, %v1177
  %v1179 = vpop.f32.mrf.mxu0
  %1180 = vdwg.mxu0
  %1181 = vmatpush.bf16.msra.mxu0 %v413
  %1182 = vmatpush.bf16.msra.mxu0 %v409
  %1183 = vmatpush.bf16.msra.mxu0 %v405
  %1184 = vmatpush.bf16.msra.mxu0 %v401
  %1185 = vmatpush.bf16.msra.mxu0 %v397
  %1186 = vmatpush.bf16.msra.mxu0 %v393
  %1187 = vmatpush.bf16.msra.mxu0 %v389
  %1188 = vmatpush.bf16.msra.mxu0 %v385
  %1189 = vmatmul.bf16.gmra.mxu0 %v1167
  %v1190 = vpop.f32.mrf.mxu0
  %v1191 = vadd.f32 0.0, %v1190
  %v1192 = vpop.f32.mrf.mxu0
  %1193 = vdwg.mxu0
  %1194 = vmatpush.bf16.msra.mxu0 %v414
  %1195 = vmatpush.bf16.msra.mxu0 %v410
  %1196 = vmatpush.bf16.msra.mxu0 %v406
  %1197 = vmatpush.bf16.msra.mxu0 %v402
  %1198 = vmatpush.bf16.msra.mxu0 %v398
  %1199 = vmatpush.bf16.msra.mxu0 %v394
  %1200 = vmatpush.bf16.msra.mxu0 %v390
  %1201 = vmatpush.bf16.msra.mxu0 %v386
  %1202 = vmatmul.bf16.gmra.mxu0 %v1167
  %v1203 = vpop.f32.mrf.mxu0
  %v1204 = vadd.f32 0.0, %v1203
  %v1205 = vpop.f32.mrf.mxu0
  %1206 = vdwg.mxu0
  %1207 = vmatpush.bf16.msra.mxu0 %v415
  %1208 = vmatpush.bf16.msra.mxu0 %v411
  %1209 = vmatpush.bf16.msra.mxu0 %v407
  %1210 = vmatpush.bf16.msra.mxu0 %v403
  %1211 = vmatpush.bf16.msra.mxu0 %v399
  %1212 = vmatpush.bf16.msra.mxu0 %v395
  %1213 = vmatpush.bf16.msra.mxu0 %v391
  %1214 = vmatpush.bf16.msra.mxu0 %v387
  %1215 = vmatmul.bf16.gmra.mxu0 %v1167
  %v1216 = vpop.f32.mrf.mxu0
  %v1217 = vadd.f32 0.0, %v1216
  %v1218 = vpop.f32.mrf.mxu0
  %1219 = vdwg.mxu0
  %v1220 = vadd.f32 %v197, %v1178
  %v1221 = vadd.f32 %v226, %v1191
  %v1222 = vadd.f32 %v255, %v1204
  %v1223 = vadd.f32 %v284, %v1217
  %v1224 = vxor.u32 %v1220, 2147483648
  %v1225 = vmul.f32 %v1224, 1.442695
  %v1226 = vpow.pop %v1225
  %v1227 = vadd.f32 %v1226, 1.0
  %v1228 = vrcp.pop %v1227
  %v1229 = vmul.f32 %v1227, %v1228
  %v1230 = vsub.f32 1.0, %v1229
  %v1231 = vmul.f32 %v1228, %v1230
  %v1232 = vadd.f32 %v1228, %v1231
  %vm1233 = vweird.f32 %v1227
  %vm1234 = vweird.f32 %v1228
  %vm1235 = vmor %vm1233, %vm1234
  %v1236 = vsel %vm1235, %v1228, %v1232
  %v1237 = vand.u32 2147483647, %v1227
  %vm1238 = vcmp.eq.f32.partialorder %v1237, 8.507059e+37
  %v1239 = vand.u32 %v1227, 2147483648
  %v1240 = vor.u32 1.1754944e-38, %v1239
  %v1241 = vsel %vm1238, %v1240, %v1236
  %v1242 = vmul.f32 1.0, %v1241
  %v1243 = vxor.u32 %v1221, 2147483648
  %v1244 = vmul.f32 %v1243, 1.442695
  %v1245 = vpow.pop %v1244
  %v1246 = vadd.f32 %v1245, 1.0
  %v1247 = vrcp.pop %v1246
  %v1248 = vmul.f32 %v1246, %v1247
  %v1249 = vsub.f32 1.0, %v1248
  %v1250 = vmul.f32 %v1247, %v1249
  %v1251 = vadd.f32 %v1247, %v1250
  %vm1252 = vweird.f32 %v1246
  %vm1253 = vweird.f32 %v1247
  %vm1254 = vmor %vm1252, %vm1253
  %v1255 = vsel %vm1254, %v1247, %v1251
  %v1256 = vand.u32 2147483647, %v1246
  %vm1257 = vcmp.eq.f32.partialorder %v1256, 8.507059e+37
  %v1258 = vand.u32 %v1246, 2147483648
  %v1259 = vor.u32 1.1754944e-38, %v1258
  %v1260 = vsel %vm1257, %v1259, %v1255
  %v1261 = vmul.f32 1.0, %v1260
  %v1262 = vtanh.pop %v1222
  %v1263 = vxor.u32 %v1223, 2147483648
  %v1264 = vmul.f32 %v1263, 1.442695
  %v1265 = vpow.pop %v1264
  %v1266 = vadd.f32 %v1265, 1.0
  %v1267 = vrcp.pop %v1266
  %v1268 = vmul.f32 %v1266, %v1267
  %v1269 = vsub.f32 1.0, %v1268
  %v1270 = vmul.f32 %v1267, %v1269
  %v1271 = vadd.f32 %v1267, %v1270
  %vm1272 = vweird.f32 %v1266
  %vm1273 = vweird.f32 %v1267
  %vm1274 = vmor %vm1272, %vm1273
  %v1275 = vsel %vm1274, %v1267, %v1271
  %v1276 = vand.u32 2147483647, %v1266
  %vm1277 = vcmp.eq.f32.partialorder %v1276, 8.507059e+37
  %v1278 = vand.u32 %v1266, 2147483648
  %v1279 = vor.u32 1.1754944e-38, %v1278
  %v1280 = vsel %vm1277, %v1279, %v1275
  %v1281 = vmul.f32 1.0, %v1280
  %v1282 = vmul.f32 %v1261, %v1164
  %v1283 = vmul.f32 %v1242, %v1262
  %v1284 = vadd.f32 %v1282, %v1283
  %v1285 = vtanh.pop %v1284
  %v1286 = vmul.f32 %v1281, %v1285
  %v1287 = vpack.c.bf16 %v1286, %v1286
  %1288 = vmatpush.bf16.msra.mxu0 %v412
  %1289 = vmatpush.bf16.msra.mxu0 %v408
  %1290 = vmatpush.bf16.msra.mxu0 %v404
  %1291 = vmatpush.bf16.msra.mxu0 %v400
  %1292 = vmatpush.bf16.msra.mxu0 %v396
  %1293 = vmatpush.bf16.msra.mxu0 %v392
  %1294 = vmatpush.bf16.msra.mxu0 %v388
  %1295 = vmatpush.bf16.msra.mxu0 %v384
  %1296 = vmatmul.bf16.gmra.mxu0 %v1287
  %v1297 = vpop.f32.mrf.mxu0
  %v1298 = vadd.f32 0.0, %v1297
  %v1299 = vpop.f32.mrf.mxu0
  %1300 = vdwg.mxu0
  %1301 = vmatpush.bf16.msra.mxu0 %v413
  %1302 = vmatpush.bf16.msra.mxu0 %v409
  %1303 = vmatpush.bf16.msra.mxu0 %v405
  %1304 = vmatpush.bf16.msra.mxu0 %v401
  %1305 = vmatpush.bf16.msra.mxu0 %v397
  %1306 = vmatpush.bf16.msra.mxu0 %v393
  %1307 = vmatpush.bf16.msra.mxu0 %v389
  %1308 = vmatpush.bf16.msra.mxu0 %v385
  %1309 = vmatmul.bf16.gmra.mxu0 %v1287
  %v1310 = vpop.f32.mrf.mxu0
  %v1311 = vadd.f32 0.0, %v1310
  %v1312 = vpop.f32.mrf.mxu0
  %1313 = vdwg.mxu0
  %1314 = vmatpush.bf16.msra.mxu0 %v414
  %1315 = vmatpush.bf16.msra.mxu0 %v410
  %1316 = vmatpush.bf16.msra.mxu0 %v406
  %1317 = vmatpush.bf16.msra.mxu0 %v402
  %1318 = vmatpush.bf16.msra.mxu0 %v398
  %1319 = vmatpush.bf16.msra.mxu0 %v394
  %1320 = vmatpush.bf16.msra.mxu0 %v390
  %1321 = vmatpush.bf16.msra.mxu0 %v386
  %1322 = vmatmul.bf16.gmra.mxu0 %v1287
  %v1323 = vpop.f32.mrf.mxu0
  %v1324 = vadd.f32 0.0, %v1323
  %v1325 = vpop.f32.mrf.mxu0
  %1326 = vdwg.mxu0
  %1327 = vmatpush.bf16.msra.mxu0 %v415
  %1328 = vmatpush.bf16.msra.mxu0 %v411
  %1329 = vmatpush.bf16.msra.mxu0 %v407
  %1330 = vmatpush.bf16.msra.mxu0 %v403
  %1331 = vmatpush.bf16.msra.mxu0 %v399
  %1332 = vmatpush.bf16.msra.mxu0 %v395
  %1333 = vmatpush.bf16.msra.mxu0 %v391
  %1334 = vmatpush.bf16.msra.mxu0 %v387
  %1335 = vmatmul.bf16.gmra.mxu0 %v1287
  %v1336 = vpop.f32.mrf.mxu0
  %v1337 = vadd.f32 0.0, %v1336
  %v1338 = vpop.f32.mrf.mxu0
  %1339 = vdwg.mxu0
  %v1340 = vadd.f32 %v199, %v1298
  %v1341 = vadd.f32 %v228, %v1311
  %v1342 = vadd.f32 %v257, %v1324
  %v1343 = vadd.f32 %v286, %v1337
  %v1344 = vxor.u32 %v1340, 2147483648
  %v1345 = vmul.f32 %v1344, 1.442695
  %v1346 = vpow.pop %v1345
  %v1347 = vadd.f32 %v1346, 1.0
  %v1348 = vrcp.pop %v1347
  %v1349 = vmul.f32 %v1347, %v1348
  %v1350 = vsub.f32 1.0, %v1349
  %v1351 = vmul.f32 %v1348, %v1350
  %v1352 = vadd.f32 %v1348, %v1351
  %vm1353 = vweird.f32 %v1347
  %vm1354 = vweird.f32 %v1348
  %vm1355 = vmor %vm1353, %vm1354
  %v1356 = vsel %vm1355, %v1348, %v1352
  %v1357 = vand.u32 2147483647, %v1347
  %vm1358 = vcmp.eq.f32.partialorder %v1357, 8.507059e+37
  %v1359 = vand.u32 %v1347, 2147483648
  %v1360 = vor.u32 1.1754944e-38, %v1359
  %v1361 = vsel %vm1358, %v1360, %v1356
  %v1362 = vmul.f32 1.0, %v1361
  %v1363 = vxor.u32 %v1341, 2147483648
  %v1364 = vmul.f32 %v1363, 1.442695
  %v1365 = vpow.pop %v1364
  %v1366 = vadd.f32 %v1365, 1.0
  %v1367 = vrcp.pop %v1366
  %v1368 = vmul.f32 %v1366, %v1367
  %v1369 = vsub.f32 1.0, %v1368
  %v1370 = vmul.f32 %v1367, %v1369
  %v1371 = vadd.f32 %v1367, %v1370
  %vm1372 = vweird.f32 %v1366
  %vm1373 = vweird.f32 %v1367
  %vm1374 = vmor %vm1372, %vm1373
  %v1375 = vsel %vm1374, %v1367, %v1371
  %v1376 = vand.u32 2147483647, %v1366
  %vm1377 = vcmp.eq.f32.partialorder %v1376, 8.507059e+37
  %v1378 = vand.u32 %v1366, 2147483648
  %v1379 = vor.u32 1.1754944e-38, %v1378
  %v1380 = vsel %vm1377, %v1379, %v1375
  %v1381 = vmul.f32 1.0, %v1380
  %v1382 = vtanh.pop %v1342
  %v1383 = vxor.u32 %v1343, 2147483648
  %v1384 = vmul.f32 %v1383, 1.442695
  %v1385 = vpow.pop %v1384
  %v1386 = vadd.f32 %v1385, 1.0
  %v1387 = vrcp.pop %v1386
  %v1388 = vmul.f32 %v1386, %v1387
  %v1389 = vsub.f32 1.0, %v1388
  %v1390 = vmul.f32 %v1387, %v1389
  %v1391 = vadd.f32 %v1387, %v1390
  %vm1392 = vweird.f32 %v1386
  %vm1393 = vweird.f32 %v1387
  %vm1394 = vmor %vm1392, %vm1393
  %v1395 = vsel %vm1394, %v1387, %v1391
  %v1396 = vand.u32 2147483647, %v1386
  %vm1397 = vcmp.eq.f32.partialorder %v1396, 8.507059e+37
  %v1398 = vand.u32 %v1386, 2147483648
  %v1399 = vor.u32 1.1754944e-38, %v1398
  %v1400 = vsel %vm1397, %v1399, %v1395
  %v1401 = vmul.f32 1.0, %v1400
  %v1402 = vmul.f32 %v1381, %v1284
  %v1403 = vmul.f32 %v1362, %v1382
  %v1404 = vadd.f32 %v1402, %v1403
  %v1405 = vtanh.pop %v1404
  %v1406 = vmul.f32 %v1401, %v1405
  %v1407 = vpack.c.bf16 %v1406, %v1406
  %v1408 = vld [vmem:[%s4] sm:$0xff]
  %v1409 = vld [vmem:[%s4 + $0x8] sm:$0xff]
  %v1410 = vld [vmem:[%s4 + $0x10] sm:$0xff]
  %v1411 = vld [vmem:[%s4 + $0x18] sm:$0xff]
  %v1412 = vld [vmem:[%s4 + $0x20] sm:$0xff]
  %v1413 = vld [vmem:[%s4 + $0x28] sm:$0xff]
  %v1414 = vld [vmem:[%s4 + $0x30] sm:$0xff]
  %v1415 = vld [vmem:[%s4 + $0x38] sm:$0xff]
  %v1416 = vld [vmem:[%s4 + $0x40] sm:$0xff]
  %v1417 = vld [vmem:[%s4 + $0x48] sm:$0xff]
  %v1418 = vld [vmem:[%s4 + $0x50] sm:$0xff]
  %v1419 = vld [vmem:[%s4 + $0x58] sm:$0xff]
  %v1420 = vld [vmem:[%s4 + $0x60] sm:$0xff]
  %v1421 = vld [vmem:[%s4 + $0x68] sm:$0xff]
  %v1422 = vld [vmem:[%s4 + $0x70] sm:$0xff]
  %v1423 = vld [vmem:[%s4 + $0x78] sm:$0xff]
  %v1424 = vld [vmem:[%s4 + $0x80] sm:$0xff]
  %v1425 = vld [vmem:[%s4 + $0x88] sm:$0xff]
  %v1426 = vld [vmem:[%s4 + $0x90] sm:$0xff]
  %v1427 = vld [vmem:[%s4 + $0x98] sm:$0xff]
  %v1428 = vld [vmem:[%s4 + $0xa0] sm:$0xff]
  %v1429 = vld [vmem:[%s4 + $0xa8] sm:$0xff]
  %v1430 = vld [vmem:[%s4 + $0xb0] sm:$0xff]
  %v1431 = vld [vmem:[%s4 + $0xb8] sm:$0xff]
  %v1432 = vld [vmem:[%s4 + $0xc0] sm:$0xff]
  %v1433 = vld [vmem:[%s4 + $0xc8] sm:$0xff]
  %v1434 = vld [vmem:[%s4 + $0xd0] sm:$0xff]
  %v1435 = vld [vmem:[%s4 + $0xd8] sm:$0xff]
  %v1436 = vld [vmem:[%s4 + $0xe0] sm:$0xff]
  %v1437 = vld [vmem:[%s4 + $0xe8] sm:$0xff]
  %v1438 = vld [vmem:[%s4 + $0xf0] sm:$0xff]
  %v1439 = vld [vmem:[%s4 + $0xf8] sm:$0xff]
  %v1440 = vld [vmem:[%s6] sm:$0xf]
  %v1442 = vperm.slane %v1440, 0
  %v1443 = vperm.slane %v1440, 1
  %v1444 = vperm.slane %v1440, 2
  %v1445 = vperm.slane %v1440, 3
  %v1482 = vunpack.c.l.b16 %v1408
  %v1483 = vunpack.c.h.b16 %v1408
  %v1484 = vunpack.c.l.b16 %v1409
  %v1485 = vunpack.c.h.b16 %v1409
  %v1486 = vunpack.c.l.b16 %v1410
  %v1487 = vunpack.c.h.b16 %v1410
  %v1488 = vunpack.c.l.b16 %v1411
  %v1489 = vunpack.c.h.b16 %v1411
  %v1490 = vunpack.c.l.b16 %v1412
  %v1491 = vunpack.c.h.b16 %v1412
  %v1492 = vunpack.c.l.b16 %v1413
  %v1493 = vunpack.c.h.b16 %v1413
  %v1494 = vunpack.c.l.b16 %v1414
  %v1495 = vunpack.c.h.b16 %v1414
  %v1496 = vunpack.c.l.b16 %v1415
  %v1497 = vunpack.c.h.b16 %v1415
  %v1498 = vunpack.c.l.b16 %v1416
  %v1499 = vunpack.c.h.b16 %v1416
  %v1500 = vunpack.c.l.b16 %v1417
  %v1501 = vunpack.c.h.b16 %v1417
  %v1502 = vunpack.c.l.b16 %v1418
  %v1503 = vunpack.c.h.b16 %v1418
  %v1504 = vunpack.c.l.b16 %v1419
  %v1505 = vunpack.c.h.b16 %v1419
  %v1506 = vunpack.c.l.b16 %v1420
  %v1507 = vunpack.c.h.b16 %v1420
  %v1508 = vunpack.c.l.b16 %v1421
  %v1509 = vunpack.c.h.b16 %v1421
  %v1510 = vunpack.c.l.b16 %v1422
  %v1511 = vunpack.c.h.b16 %v1422
  %v1512 = vunpack.c.l.b16 %v1423
  %v1513 = vunpack.c.h.b16 %v1423
  %v1514 = vunpack.c.l.b16 %v1424
  %v1515 = vunpack.c.h.b16 %v1424
  %v1516 = vunpack.c.l.b16 %v1425
  %v1517 = vunpack.c.h.b16 %v1425
  %v1518 = vunpack.c.l.b16 %v1426
  %v1519 = vunpack.c.h.b16 %v1426
  %v1520 = vunpack.c.l.b16 %v1427
  %v1521 = vunpack.c.h.b16 %v1427
  %v1522 = vunpack.c.l.b16 %v1428
  %v1523 = vunpack.c.h.b16 %v1428
  %v1524 = vunpack.c.l.b16 %v1429
  %v1525 = vunpack.c.h.b16 %v1429
  %v1526 = vunpack.c.l.b16 %v1430
  %v1527 = vunpack.c.h.b16 %v1430
  %v1528 = vunpack.c.l.b16 %v1431
  %v1529 = vunpack.c.h.b16 %v1431
  %v1530 = vunpack.c.l.b16 %v1432
  %v1531 = vunpack.c.h.b16 %v1432
  %v1532 = vunpack.c.l.b16 %v1433
  %v1533 = vunpack.c.h.b16 %v1433
  %v1534 = vunpack.c.l.b16 %v1434
  %v1535 = vunpack.c.h.b16 %v1434
  %v1536 = vunpack.c.l.b16 %v1435
  %v1537 = vunpack.c.h.b16 %v1435
  %v1538 = vunpack.c.l.b16 %v1436
  %v1539 = vunpack.c.h.b16 %v1436
  %v1540 = vunpack.c.l.b16 %v1437
  %v1541 = vunpack.c.h.b16 %v1437
  %v1542 = vunpack.c.l.b16 %v1438
  %v1543 = vunpack.c.h.b16 %v1438
  %v1544 = vunpack.c.l.b16 %v1439
  %v1545 = vunpack.c.h.b16 %v1439
  %v1546 = vpack.c.b16 %v1486, %v1482
  %v1547 = vpack.c.b16 %v1487, %v1483
  %v1548 = vpack.c.b16 %v1488, %v1484
  %v1549 = vpack.c.b16 %v1489, %v1485
  %v1550 = vpack.c.b16 %v1494, %v1490
  %v1551 = vpack.c.b16 %v1495, %v1491
  %v1552 = vpack.c.b16 %v1496, %v1492
  %v1553 = vpack.c.b16 %v1497, %v1493
  %v1554 = vpack.c.b16 %v1502, %v1498
  %v1555 = vpack.c.b16 %v1503, %v1499
  %v1556 = vpack.c.b16 %v1504, %v1500
  %v1557 = vpack.c.b16 %v1505, %v1501
  %v1558 = vpack.c.b16 %v1510, %v1506
  %v1559 = vpack.c.b16 %v1511, %v1507
  %v1560 = vpack.c.b16 %v1512, %v1508
  %v1561 = vpack.c.b16 %v1513, %v1509
  %v1562 = vpack.c.b16 %v1518, %v1514
  %v1563 = vpack.c.b16 %v1519, %v1515
  %v1564 = vpack.c.b16 %v1520, %v1516
  %v1565 = vpack.c.b16 %v1521, %v1517
  %v1566 = vpack.c.b16 %v1526, %v1522
  %v1567 = vpack.c.b16 %v1527, %v1523
  %v1568 = vpack.c.b16 %v1528, %v1524
  %v1569 = vpack.c.b16 %v1529, %v1525
  %v1570 = vpack.c.b16 %v1534, %v1530
  %v1571 = vpack.c.b16 %v1535, %v1531
  %v1572 = vpack.c.b16 %v1536, %v1532
  %v1573 = vpack.c.b16 %v1537, %v1533
  %v1574 = vpack.c.b16 %v1542, %v1538
  %v1575 = vpack.c.b16 %v1543, %v1539
  %v1576 = vpack.c.b16 %v1544, %v1540
  %v1577 = vpack.c.b16 %v1545, %v1541
  %1610 = vmatpush.bf16.msra.mxu0 %v1574
  %1611 = vmatpush.bf16.msra.mxu0 %v1570
  %1612 = vmatpush.bf16.msra.mxu0 %v1566
  %1613 = vmatpush.bf16.msra.mxu0 %v1562
  %1614 = vmatpush.bf16.msra.mxu0 %v1558
  %1615 = vmatpush.bf16.msra.mxu0 %v1554
  %1616 = vmatpush.bf16.msra.mxu0 %v1550
  %1617 = vmatpush.bf16.msra.mxu0 %v1546
  %1618 = vmatmul.bf16.gmra.mxu0 %v1407
  %v1619 = vpop.f32.mrf.mxu0
  %v1620 = vadd.f32 %v1442, %v1619
  %v1621 = vpop.f32.mrf.mxu0
  %1622 = vdwg.mxu0
  %1623 = vmatpush.bf16.msra.mxu0 %v1575
  %1624 = vmatpush.bf16.msra.mxu0 %v1571
  %1625 = vmatpush.bf16.msra.mxu0 %v1567
  %1626 = vmatpush.bf16.msra.mxu0 %v1563
  %1627 = vmatpush.bf16.msra.mxu0 %v1559
  %1628 = vmatpush.bf16.msra.mxu0 %v1555
  %1629 = vmatpush.bf16.msra.mxu0 %v1551
  %1630 = vmatpush.bf16.msra.mxu0 %v1547
  %1631 = vmatmul.bf16.gmra.mxu0 %v1407
  %v1632 = vpop.f32.mrf.mxu0
  %v1633 = vadd.f32 %v1443, %v1632
  %v1634 = vpop.f32.mrf.mxu0
  %1635 = vdwg.mxu0
  %1636 = vmatpush.bf16.msra.mxu0 %v1576
  %1637 = vmatpush.bf16.msra.mxu0 %v1572
  %1638 = vmatpush.bf16.msra.mxu0 %v1568
  %1639 = vmatpush.bf16.msra.mxu0 %v1564
  %1640 = vmatpush.bf16.msra.mxu0 %v1560
  %1641 = vmatpush.bf16.msra.mxu0 %v1556
  %1642 = vmatpush.bf16.msra.mxu0 %v1552
  %1643 = vmatpush.bf16.msra.mxu0 %v1548
  %1644 = vmatmul.bf16.gmra.mxu0 %v1407
  %v1645 = vpop.f32.mrf.mxu0
  %v1646 = vadd.f32 %v1444, %v1645
  %v1647 = vpop.f32.mrf.mxu0
  %1648 = vdwg.mxu0
  %1649 = vmatpush.bf16.msra.mxu0 %v1577
  %1650 = vmatpush.bf16.msra.mxu0 %v1573
  %1651 = vmatpush.bf16.msra.mxu0 %v1569
  %1652 = vmatpush.bf16.msra.mxu0 %v1565
  %1653 = vmatpush.bf16.msra.mxu0 %v1561
  %1654 = vmatpush.bf16.msra.mxu0 %v1557
  %1655 = vmatpush.bf16.msra.mxu0 %v1553
  %1656 = vmatpush.bf16.msra.mxu0 %v1549
  %1657 = vmatmul.bf16.gmra.mxu0 %v1407
  %v1658 = vpop.f32.mrf.mxu0
  %v1659 = vadd.f32 %v1445, %v1658
  %v1660 = vpop.f32.mrf.mxu0
  %1661 = vdwg.mxu0
  %v1694 = vunpack.c.l.b16 %v70
  %v1695 = vunpack.c.h.b16 %v70
  %v1696 = vunpack.c.l.b16 %v71
  %v1697 = vunpack.c.h.b16 %v71
  %v1698 = vunpack.c.l.b16 %v72
  %v1699 = vunpack.c.h.b16 %v72
  %v1700 = vunpack.c.l.b16 %v73
  %v1701 = vunpack.c.h.b16 %v73
  %v1702 = vunpack.c.l.b16 %v74
  %v1703 = vunpack.c.h.b16 %v74
  %v1704 = vunpack.c.l.b16 %v75
  %v1705 = vunpack.c.h.b16 %v75
  %v1706 = vunpack.c.l.b16 %v76
  %v1707 = vunpack.c.h.b16 %v76
  %v1708 = vunpack.c.l.b16 %v77
  %v1709 = vunpack.c.h.b16 %v77
  %v1710 = vunpack.c.l.b16 %v78
  %v1711 = vunpack.c.h.b16 %v78
  %v1712 = vunpack.c.l.b16 %v79
  %v1713 = vunpack.c.h.b16 %v79
  %v1714 = vunpack.c.l.b16 %v80
  %v1715 = vunpack.c.h.b16 %v80
  %v1716 = vunpack.c.l.b16 %v81
  %v1717 = vunpack.c.h.b16 %v81
  %v1718 = vunpack.c.l.b16 %v82
  %v1719 = vunpack.c.h.b16 %v82
  %v1720 = vunpack.c.l.b16 %v83
  %v1721 = vunpack.c.h.b16 %v83
  %v1722 = vunpack.c.l.b16 %v84
  %v1723 = vunpack.c.h.b16 %v84
  %v1724 = vunpack.c.l.b16 %v85
  %v1725 = vunpack.c.h.b16 %v85
  %v1726 = vunpack.c.l.b16 %v86
  %v1727 = vunpack.c.h.b16 %v86
  %v1728 = vunpack.c.l.b16 %v87
  %v1729 = vunpack.c.h.b16 %v87
  %v1730 = vunpack.c.l.b16 %v88
  %v1731 = vunpack.c.h.b16 %v88
  %v1732 = vunpack.c.l.b16 %v89
  %v1733 = vunpack.c.h.b16 %v89
  %v1734 = vunpack.c.l.b16 %v90
  %v1735 = vunpack.c.h.b16 %v90
  %v1736 = vunpack.c.l.b16 %v91
  %v1737 = vunpack.c.h.b16 %v91
  %v1738 = vunpack.c.l.b16 %v92
  %v1739 = vunpack.c.h.b16 %v92
  %v1740 = vunpack.c.l.b16 %v93
  %v1741 = vunpack.c.h.b16 %v93
  %v1742 = vunpack.c.l.b16 %v94
  %v1743 = vunpack.c.h.b16 %v94
  %v1744 = vunpack.c.l.b16 %v95
  %v1745 = vunpack.c.h.b16 %v95
  %v1746 = vunpack.c.l.b16 %v96
  %v1747 = vunpack.c.h.b16 %v96
  %v1748 = vunpack.c.l.b16 %v97
  %v1749 = vunpack.c.h.b16 %v97
  %v1750 = vunpack.c.l.b16 %v98
  %v1751 = vunpack.c.h.b16 %v98
  %v1752 = vunpack.c.l.b16 %v99
  %v1753 = vunpack.c.h.b16 %v99
  %v1754 = vunpack.c.l.b16 %v100
  %v1755 = vunpack.c.h.b16 %v100
  %v1756 = vunpack.c.l.b16 %v101
  %v1757 = vunpack.c.h.b16 %v101
  %v1758 = vpack.c.b16 %v1698, %v1694
  %v1759 = vpack.c.b16 %v1699, %v1695
  %v1760 = vpack.c.b16 %v1700, %v1696
  %v1761 = vpack.c.b16 %v1701, %v1697
  %v1762 = vpack.c.b16 %v1706, %v1702
  %v1763 = vpack.c.b16 %v1707, %v1703
  %v1764 = vpack.c.b16 %v1708, %v1704
  %v1765 = vpack.c.b16 %v1709, %v1705
  %v1766 = vpack.c.b16 %v1714, %v1710
  %v1767 = vpack.c.b16 %v1715, %v1711
  %v1768 = vpack.c.b16 %v1716, %v1712
  %v1769 = vpack.c.b16 %v1717, %v1713
  %v1770 = vpack.c.b16 %v1722, %v1718
  %v1771 = vpack.c.b16 %v1723, %v1719
  %v1772 = vpack.c.b16 %v1724, %v1720
  %v1773 = vpack.c.b16 %v1725, %v1721
  %v1774 = vpack.c.b16 %v1730, %v1726
  %v1775 = vpack.c.b16 %v1731, %v1727
  %v1776 = vpack.c.b16 %v1732, %v1728
  %v1777 = vpack.c.b16 %v1733, %v1729
  %v1778 = vpack.c.b16 %v1738, %v1734
  %v1779 = vpack.c.b16 %v1739, %v1735
  %v1780 = vpack.c.b16 %v1740, %v1736
  %v1781 = vpack.c.b16 %v1741, %v1737
  %v1782 = vpack.c.b16 %v1746, %v1742
  %v1783 = vpack.c.b16 %v1747, %v1743
  %v1784 = vpack.c.b16 %v1748, %v1744
  %v1785 = vpack.c.b16 %v1749, %v1745
  %v1786 = vpack.c.b16 %v1754, %v1750
  %v1787 = vpack.c.b16 %v1755, %v1751
  %v1788 = vpack.c.b16 %v1756, %v1752
  %v1789 = vpack.c.b16 %v1757, %v1753
  %1822 = vmatpush.bf16.msra.mxu0 %v1786
  %1823 = vmatpush.bf16.msra.mxu0 %v1782
  %1824 = vmatpush.bf16.msra.mxu0 %v1778
  %1825 = vmatpush.bf16.msra.mxu0 %v1774
  %1826 = vmatpush.bf16.msra.mxu0 %v1770
  %1827 = vmatpush.bf16.msra.mxu0 %v1766
  %1828 = vmatpush.bf16.msra.mxu0 %v1762
  %1829 = vmatpush.bf16.msra.mxu0 %v1758
  %1830 = vmatmul.bf16.gmra.mxu0 0
  %v1831 = vpop.f32.mrf.mxu0
  %v1832 = vadd.f32 0.0, %v1831
  %v1833 = vpop.f32.mrf.mxu0
  %1834 = vdwg.mxu0
  %1835 = vmatpush.bf16.msra.mxu0 %v1787
  %1836 = vmatpush.bf16.msra.mxu0 %v1783
  %1837 = vmatpush.bf16.msra.mxu0 %v1779
  %1838 = vmatpush.bf16.msra.mxu0 %v1775
  %1839 = vmatpush.bf16.msra.mxu0 %v1771
  %1840 = vmatpush.bf16.msra.mxu0 %v1767
  %1841 = vmatpush.bf16.msra.mxu0 %v1763
  %1842 = vmatpush.bf16.msra.mxu0 %v1759
  %1843 = vmatmul.bf16.gmra.mxu0 0
  %v1844 = vpop.f32.mrf.mxu0
  %v1845 = vadd.f32 0.0, %v1844
  %v1846 = vpop.f32.mrf.mxu0
  %1847 = vdwg.mxu0
  %1848 = vmatpush.bf16.msra.mxu0 %v1788
  %1849 = vmatpush.bf16.msra.mxu0 %v1784
  %1850 = vmatpush.bf16.msra.mxu0 %v1780
  %1851 = vmatpush.bf16.msra.mxu0 %v1776
  %1852 = vmatpush.bf16.msra.mxu0 %v1772
  %1853 = vmatpush.bf16.msra.mxu0 %v1768
  %1854 = vmatpush.bf16.msra.mxu0 %v1764
  %1855 = vmatpush.bf16.msra.mxu0 %v1760
  %1856 = vmatmul.bf16.gmra.mxu0 0
  %v1857 = vpop.f32.mrf.mxu0
  %v1858 = vadd.f32 0.0, %v1857
  %v1859 = vpop.f32.mrf.mxu0
  %1860 = vdwg.mxu0
  %1861 = vmatpush.bf16.msra.mxu0 %v1789
  %1862 = vmatpush.bf16.msra.mxu0 %v1785
  %1863 = vmatpush.bf16.msra.mxu0 %v1781
  %1864 = vmatpush.bf16.msra.mxu0 %v1777
  %1865 = vmatpush.bf16.msra.mxu0 %v1773
  %1866 = vmatpush.bf16.msra.mxu0 %v1769
  %1867 = vmatpush.bf16.msra.mxu0 %v1765
  %1868 = vmatpush.bf16.msra.mxu0 %v1761
  %1869 = vmatmul.bf16.gmra.mxu0 0
  %v1870 = vpop.f32.mrf.mxu0
  %v1871 = vadd.f32 0.0, %v1870
  %v1872 = vpop.f32.mrf.mxu0
  %1873 = vdwg.mxu0
  %v1874 = vadd.f32 %v1620, %v1832
  %v1875 = vadd.f32 %v1633, %v1845
  %v1876 = vadd.f32 %v1646, %v1858
  %v1877 = vadd.f32 %v1659, %v1871
  %v1878 = vxor.u32 %v1874, 2147483648
  %v1879 = vmul.f32 %v1878, 1.442695
  %v1880 = vpow.pop %v1879
  %v1881 = vadd.f32 %v1880, 1.0
  %v1882 = vrcp.pop %v1881
  %v1883 = vmul.f32 %v1881, %v1882
  %v1884 = vsub.f32 1.0, %v1883
  %v1885 = vmul.f32 %v1882, %v1884
  %v1886 = vadd.f32 %v1882, %v1885
  %vm1887 = vweird.f32 %v1881
  %vm1888 = vweird.f32 %v1882
  %vm1889 = vmor %vm1887, %vm1888
  %v1890 = vsel %vm1889, %v1882, %v1886
  %v1891 = vand.u32 2147483647, %v1881
  %vm1892 = vcmp.eq.f32.partialorder %v1891, 8.507059e+37
  %v1893 = vand.u32 %v1881, 2147483648
  %v1894 = vor.u32 1.1754944e-38, %v1893
  %v1895 = vsel %vm1892, %v1894, %v1890
  %v1896 = vmul.f32 1.0, %v1895
  %v1897 = vxor.u32 %v1875, 2147483648
  %v1898 = vmul.f32 %v1897, 1.442695
  %v1899 = vpow.pop %v1898
  %v1900 = vadd.f32 %v1899, 1.0
  %v1901 = vrcp.pop %v1900
  %v1902 = vmul.f32 %v1900, %v1901
  %v1903 = vsub.f32 1.0, %v1902
  %v1904 = vmul.f32 %v1901, %v1903
  %v1905 = vadd.f32 %v1901, %v1904
  %vm1906 = vweird.f32 %v1900
  %vm1907 = vweird.f32 %v1901
  %vm1908 = vmor %vm1906, %vm1907
  %v1909 = vsel %vm1908, %v1901, %v1905
  %v1910 = vand.u32 2147483647, %v1900
  %vm1911 = vcmp.eq.f32.partialorder %v1910, 8.507059e+37
  %v1912 = vand.u32 %v1900, 2147483648
  %v1913 = vor.u32 1.1754944e-38, %v1912
  %v1914 = vsel %vm1911, %v1913, %v1909
  %v1915 = vmul.f32 1.0, %v1914
  %v1916 = vtanh.pop %v1876
  %v1917 = vxor.u32 %v1877, 2147483648
  %v1918 = vmul.f32 %v1917, 1.442695
  %v1919 = vpow.pop %v1918
  %v1920 = vadd.f32 %v1919, 1.0
  %v1921 = vrcp.pop %v1920
  %v1922 = vmul.f32 %v1920, %v1921
  %v1923 = vsub.f32 1.0, %v1922
  %v1924 = vmul.f32 %v1921, %v1923
  %v1925 = vadd.f32 %v1921, %v1924
  %vm1926 = vweird.f32 %v1920
  %vm1927 = vweird.f32 %v1921
  %vm1928 = vmor %vm1926, %vm1927
  %v1929 = vsel %vm1928, %v1921, %v1925
  %v1930 = vand.u32 2147483647, %v1920
  %vm1931 = vcmp.eq.f32.partialorder %v1930, 8.507059e+37
  %v1932 = vand.u32 %v1920, 2147483648
  %v1933 = vor.u32 1.1754944e-38, %v1932
  %v1934 = vsel %vm1931, %v1933, %v1929
  %v1935 = vmul.f32 1.0, %v1934
  %v1936 = vmul.f32 %v1915, 0.0
  %v1937 = vmul.f32 %v1896, %v1916
  %v1938 = vadd.f32 %v1936, %v1937
  %v1939 = vtanh.pop %v1938
  %v1940 = vmul.f32 %v1935, %v1939
  %v1941 = vpack.c.bf16 %v1940, %v1940
  %1942 = vst [vmem:[#allocation2] sm:$0xf] %v1941
  %1943 = vmatpush.bf16.msra.mxu0 %v1786
  %1944 = vmatpush.bf16.msra.mxu0 %v1782
  %1945 = vmatpush.bf16.msra.mxu0 %v1778
  %1946 = vmatpush.bf16.msra.mxu0 %v1774
  %1947 = vmatpush.bf16.msra.mxu0 %v1770
  %1948 = vmatpush.bf16.msra.mxu0 %v1766
  %1949 = vmatpush.bf16.msra.mxu0 %v1762
  %1950 = vmatpush.bf16.msra.mxu0 %v1758
  %1951 = vmatmul.bf16.gmra.mxu0 %v1941
  %v1952 = vpop.f32.mrf.mxu0
  %v1953 = vadd.f32 0.0, %v1952
  %v1954 = vpop.f32.mrf.mxu0
  %1955 = vdwg.mxu0
  %1956 = vmatpush.bf16.msra.mxu0 %v1787
  %1957 = vmatpush.bf16.msra.mxu0 %v1783
  %1958 = vmatpush.bf16.msra.mxu0 %v1779
  %1959 = vmatpush.bf16.msra.mxu0 %v1775
  %1960 = vmatpush.bf16.msra.mxu0 %v1771
  %1961 = vmatpush.bf16.msra.mxu0 %v1767
  %1962 = vmatpush.bf16.msra.mxu0 %v1763
  %1963 = vmatpush.bf16.msra.mxu0 %v1759
  %1964 = vmatmul.bf16.gmra.mxu0 %v1941
  %v1965 = vpop.f32.mrf.mxu0
  %v1966 = vadd.f32 0.0, %v1965
  %v1967 = vpop.f32.mrf.mxu0
  %1968 = vdwg.mxu0
  %1969 = vmatpush.bf16.msra.mxu0 %v1788
  %1970 = vmatpush.bf16.msra.mxu0 %v1784
  %1971 = vmatpush.bf16.msra.mxu0 %v1780
  %1972 = vmatpush.bf16.msra.mxu0 %v1776
  %1973 = vmatpush.bf16.msra.mxu0 %v1772
  %1974 = vmatpush.bf16.msra.mxu0 %v1768
  %1975 = vmatpush.bf16.msra.mxu0 %v1764
  %1976 = vmatpush.bf16.msra.mxu0 %v1760
  %1977 = vmatmul.bf16.gmra.mxu0 %v1941
  %v1978 = vpop.f32.mrf.mxu0
  %v1979 = vadd.f32 0.0, %v1978
  %v1980 = vpop.f32.mrf.mxu0
  %1981 = vdwg.mxu0
  %1982 = vmatpush.bf16.msra.mxu0 %v1789
  %1983 = vmatpush.bf16.msra.mxu0 %v1785
  %1984 = vmatpush.bf16.msra.mxu0 %v1781
  %1985 = vmatpush.bf16.msra.mxu0 %v1777
  %1986 = vmatpush.bf16.msra.mxu0 %v1773
  %1987 = vmatpush.bf16.msra.mxu0 %v1769
  %1988 = vmatpush.bf16.msra.mxu0 %v1765
  %1989 = vmatpush.bf16.msra.mxu0 %v1761
  %1990 = vmatmul.bf16.gmra.mxu0 %v1941
  %v1991 = vpop.f32.mrf.mxu0
  %v1992 = vadd.f32 0.0, %v1991
  %v1993 = vpop.f32.mrf.mxu0
  %1994 = vdwg.mxu0
  %v1995 = vadd.f32 %v1620, %v1953
  %v1996 = vadd.f32 %v1633, %v1966
  %v1997 = vadd.f32 %v1646, %v1979
  %v1998 = vadd.f32 %v1659, %v1992
  %v1999 = vxor.u32 %v1995, 2147483648
  %v2000 = vmul.f32 %v1999, 1.442695
  %v2001 = vpow.pop %v2000
  %v2002 = vadd.f32 %v2001, 1.0
  %v2003 = vrcp.pop %v2002
  %v2004 = vmul.f32 %v2002, %v2003
  %v2005 = vsub.f32 1.0, %v2004
  %v2006 = vmul.f32 %v2003, %v2005
  %v2007 = vadd.f32 %v2003, %v2006
  %vm2008 = vweird.f32 %v2002
  %vm2009 = vweird.f32 %v2003
  %vm2010 = vmor %vm2008, %vm2009
  %v2011 = vsel %vm2010, %v2003, %v2007
  %v2012 = vand.u32 2147483647, %v2002
  %vm2013 = vcmp.eq.f32.partialorder %v2012, 8.507059e+37
  %v2014 = vand.u32 %v2002, 2147483648
  %v2015 = vor.u32 1.1754944e-38, %v2014
  %v2016 = vsel %vm2013, %v2015, %v2011
  %v2017 = vmul.f32 1.0, %v2016
  %v2018 = vxor.u32 %v1996, 2147483648
  %v2019 = vmul.f32 %v2018, 1.442695
  %v2020 = vpow.pop %v2019
  %v2021 = vadd.f32 %v2020, 1.0
  %v2022 = vrcp.pop %v2021
  %v2023 = vmul.f32 %v2021, %v2022
  %v2024 = vsub.f32 1.0, %v2023
  %v2025 = vmul.f32 %v2022, %v2024
  %v2026 = vadd.f32 %v2022, %v2025
  %vm2027 = vweird.f32 %v2021
  %vm2028 = vweird.f32 %v2022
  %vm2029 = vmor %vm2027, %vm2028
  %v2030 = vsel %vm2029, %v2022, %v2026
  %v2031 = vand.u32 2147483647, %v2021
  %vm2032 = vcmp.eq.f32.partialorder %v2031, 8.507059e+37
  %v2033 = vand.u32 %v2021, 2147483648
  %v2034 = vor.u32 1.1754944e-38, %v2033
  %v2035 = vsel %vm2032, %v2034, %v2030
  %v2036 = vmul.f32 1.0, %v2035
  %v2037 = vtanh.pop %v1997
  %v2038 = vxor.u32 %v1998, 2147483648
  %v2039 = vmul.f32 %v2038, 1.442695
  %v2040 = vpow.pop %v2039
  %v2041 = vadd.f32 %v2040, 1.0
  %v2042 = vrcp.pop %v2041
  %v2043 = vmul.f32 %v2041, %v2042
  %v2044 = vsub.f32 1.0, %v2043
  %v2045 = vmul.f32 %v2042, %v2044
  %v2046 = vadd.f32 %v2042, %v2045
  %vm2047 = vweird.f32 %v2041
  %vm2048 = vweird.f32 %v2042
  %vm2049 = vmor %vm2047, %vm2048
  %v2050 = vsel %vm2049, %v2042, %v2046
  %v2051 = vand.u32 2147483647, %v2041
  %vm2052 = vcmp.eq.f32.partialorder %v2051, 8.507059e+37
  %v2053 = vand.u32 %v2041, 2147483648
  %v2054 = vor.u32 1.1754944e-38, %v2053
  %v2055 = vsel %vm2052, %v2054, %v2050
  %v2056 = vmul.f32 1.0, %v2055
  %v2057 = vmul.f32 %v2036, %v1938
  %v2058 = vmul.f32 %v2017, %v2037
  %v2059 = vadd.f32 %v2057, %v2058
  %v2060 = vtanh.pop %v2059
  %v2061 = vmul.f32 %v2056, %v2060
  %v2062 = vpack.c.bf16 %v2061, %v2061
  %s2063 = scalar_lea.vmem [#allocation2], 4
  %2064 = vst [vmem:[%s2063] sm:$0xf] %v2062
  %2065 = vmatpush.bf16.msra.mxu0 %v1786
  %2066 = vmatpush.bf16.msra.mxu0 %v1782
  %2067 = vmatpush.bf16.msra.mxu0 %v1778
  %2068 = vmatpush.bf16.msra.mxu0 %v1774
  %2069 = vmatpush.bf16.msra.mxu0 %v1770
  %2070 = vmatpush.bf16.msra.mxu0 %v1766
  %2071 = vmatpush.bf16.msra.mxu0 %v1762
  %2072 = vmatpush.bf16.msra.mxu0 %v1758
  %2073 = vmatmul.bf16.gmra.mxu0 %v2062
  %v2074 = vpop.f32.mrf.mxu0
  %v2075 = vadd.f32 0.0, %v2074
  %v2076 = vpop.f32.mrf.mxu0
  %2077 = vdwg.mxu0
  %2078 = vmatpush.bf16.msra.mxu0 %v1787
  %2079 = vmatpush.bf16.msra.mxu0 %v1783
  %2080 = vmatpush.bf16.msra.mxu0 %v1779
  %2081 = vmatpush.bf16.msra.mxu0 %v1775
  %2082 = vmatpush.bf16.msra.mxu0 %v1771
  %2083 = vmatpush.bf16.msra.mxu0 %v1767
  %2084 = vmatpush.bf16.msra.mxu0 %v1763
  %2085 = vmatpush.bf16.msra.mxu0 %v1759
  %2086 = vmatmul.bf16.gmra.mxu0 %v2062
  %v2087 = vpop.f32.mrf.mxu0
  %v2088 = vadd.f32 0.0, %v2087
  %v2089 = vpop.f32.mrf.mxu0
  %2090 = vdwg.mxu0
  %2091 = vmatpush.bf16.msra.mxu0 %v1788
  %2092 = vmatpush.bf16.msra.mxu0 %v1784
  %2093 = vmatpush.bf16.msra.mxu0 %v1780
  %2094 = vmatpush.bf16.msra.mxu0 %v1776
  %2095 = vmatpush.bf16.msra.mxu0 %v1772
  %2096 = vmatpush.bf16.msra.mxu0 %v1768
  %2097 = vmatpush.bf16.msra.mxu0 %v1764
  %2098 = vmatpush.bf16.msra.mxu0 %v1760
  %2099 = vmatmul.bf16.gmra.mxu0 %v2062
  %v2100 = vpop.f32.mrf.mxu0
  %v2101 = vadd.f32 0.0, %v2100
  %v2102 = vpop.f32.mrf.mxu0
  %2103 = vdwg.mxu0
  %2104 = vmatpush.bf16.msra.mxu0 %v1789
  %2105 = vmatpush.bf16.msra.mxu0 %v1785
  %2106 = vmatpush.bf16.msra.mxu0 %v1781
  %2107 = vmatpush.bf16.msra.mxu0 %v1777
  %2108 = vmatpush.bf16.msra.mxu0 %v1773
  %2109 = vmatpush.bf16.msra.mxu0 %v1769
  %2110 = vmatpush.bf16.msra.mxu0 %v1765
  %2111 = vmatpush.bf16.msra.mxu0 %v1761
  %2112 = vmatmul.bf16.gmra.mxu0 %v2062
  %v2113 = vpop.f32.mrf.mxu0
  %v2114 = vadd.f32 0.0, %v2113
  %v2115 = vpop.f32.mrf.mxu0
  %2116 = vdwg.mxu0
  %v2117 = vadd.f32 %v1620, %v2075
  %v2118 = vadd.f32 %v1633, %v2088
  %v2119 = vadd.f32 %v1646, %v2101
  %v2120 = vadd.f32 %v1659, %v2114
  %v2121 = vxor.u32 %v2117, 2147483648
  %v2122 = vmul.f32 %v2121, 1.442695
  %v2123 = vpow.pop %v2122
  %v2124 = vadd.f32 %v2123, 1.0
  %v2125 = vrcp.pop %v2124
  %v2126 = vmul.f32 %v2124, %v2125
  %v2127 = vsub.f32 1.0, %v2126
  %v2128 = vmul.f32 %v2125, %v2127
  %v2129 = vadd.f32 %v2125, %v2128
  %vm2130 = vweird.f32 %v2124
  %vm2131 = vweird.f32 %v2125
  %vm2132 = vmor %vm2130, %vm2131
  %v2133 = vsel %vm2132, %v2125, %v2129
  %v2134 = vand.u32 2147483647, %v2124
  %vm2135 = vcmp.eq.f32.partialorder %v2134, 8.507059e+37
  %v2136 = vand.u32 %v2124, 2147483648
  %v2137 = vor.u32 1.1754944e-38, %v2136
  %v2138 = vsel %vm2135, %v2137, %v2133
  %v2139 = vmul.f32 1.0, %v2138
  %v2140 = vxor.u32 %v2118, 2147483648
  %v2141 = vmul.f32 %v2140, 1.442695
  %v2142 = vpow.pop %v2141
  %v2143 = vadd.f32 %v2142, 1.0
  %v2144 = vrcp.pop %v2143
  %v2145 = vmul.f32 %v2143, %v2144
  %v2146 = vsub.f32 1.0, %v2145
  %v2147 = vmul.f32 %v2144, %v2146
  %v2148 = vadd.f32 %v2144, %v2147
  %vm2149 = vweird.f32 %v2143
  %vm2150 = vweird.f32 %v2144
  %vm2151 = vmor %vm2149, %vm2150
  %v2152 = vsel %vm2151, %v2144, %v2148
  %v2153 = vand.u32 2147483647, %v2143
  %vm2154 = vcmp.eq.f32.partialorder %v2153, 8.507059e+37
  %v2155 = vand.u32 %v2143, 2147483648
  %v2156 = vor.u32 1.1754944e-38, %v2155
  %v2157 = vsel %vm2154, %v2156, %v2152
  %v2158 = vmul.f32 1.0, %v2157
  %v2159 = vtanh.pop %v2119
  %v2160 = vxor.u32 %v2120, 2147483648
  %v2161 = vmul.f32 %v2160, 1.442695
  %v2162 = vpow.pop %v2161
  %v2163 = vadd.f32 %v2162, 1.0
  %v2164 = vrcp.pop %v2163
  %v2165 = vmul.f32 %v2163, %v2164
  %v2166 = vsub.f32 1.0, %v2165
  %v2167 = vmul.f32 %v2164, %v2166
  %v2168 = vadd.f32 %v2164, %v2167
  %vm2169 = vweird.f32 %v2163
  %vm2170 = vweird.f32 %v2164
  %vm2171 = vmor %vm2169, %vm2170
  %v2172 = vsel %vm2171, %v2164, %v2168
  %v2173 = vand.u32 2147483647, %v2163
  %vm2174 = vcmp.eq.f32.partialorder %v2173, 8.507059e+37
  %v2175 = vand.u32 %v2163, 2147483648
  %v2176 = vor.u32 1.1754944e-38, %v2175
  %v2177 = vsel %vm2174, %v2176, %v2172
  %v2178 = vmul.f32 1.0, %v2177
  %v2179 = vmul.f32 %v2158, %v2059
  %v2180 = vmul.f32 %v2139, %v2159
  %v2181 = vadd.f32 %v2179, %v2180
  %v2182 = vtanh.pop %v2181
  %v2183 = vmul.f32 %v2178, %v2182
  %v2184 = vpack.c.bf16 %v2183, %v2183
  %s2185 = scalar_lea.vmem [#allocation2], 8
  %2186 = vst [vmem:[%s2185] sm:$0xf] %v2184
  %2187 = vmatpush.bf16.msra.mxu0 %v1786
  %2188 = vmatpush.bf16.msra.mxu0 %v1782
  %2189 = vmatpush.bf16.msra.mxu0 %v1778
  %2190 = vmatpush.bf16.msra.mxu0 %v1774
  %2191 = vmatpush.bf16.msra.mxu0 %v1770
  %2192 = vmatpush.bf16.msra.mxu0 %v1766
  %2193 = vmatpush.bf16.msra.mxu0 %v1762
  %2194 = vmatpush.bf16.msra.mxu0 %v1758
  %2195 = vmatmul.bf16.gmra.mxu0 %v2184
  %v2196 = vpop.f32.mrf.mxu0
  %v2197 = vadd.f32 0.0, %v2196
  %v2198 = vpop.f32.mrf.mxu0
  %2199 = vdwg.mxu0
  %2200 = vmatpush.bf16.msra.mxu0 %v1787
  %2201 = vmatpush.bf16.msra.mxu0 %v1783
  %2202 = vmatpush.bf16.msra.mxu0 %v1779
  %2203 = vmatpush.bf16.msra.mxu0 %v1775
  %2204 = vmatpush.bf16.msra.mxu0 %v1771
  %2205 = vmatpush.bf16.msra.mxu0 %v1767
  %2206 = vmatpush.bf16.msra.mxu0 %v1763
  %2207 = vmatpush.bf16.msra.mxu0 %v1759
  %2208 = vmatmul.bf16.gmra.mxu0 %v2184
  %v2209 = vpop.f32.mrf.mxu0
  %v2210 = vadd.f32 0.0, %v2209
  %v2211 = vpop.f32.mrf.mxu0
  %2212 = vdwg.mxu0
  %2213 = vmatpush.bf16.msra.mxu0 %v1788
  %2214 = vmatpush.bf16.msra.mxu0 %v1784
  %2215 = vmatpush.bf16.msra.mxu0 %v1780
  %2216 = vmatpush.bf16.msra.mxu0 %v1776
  %2217 = vmatpush.bf16.msra.mxu0 %v1772
  %2218 = vmatpush.bf16.msra.mxu0 %v1768
  %2219 = vmatpush.bf16.msra.mxu0 %v1764
  %2220 = vmatpush.bf16.msra.mxu0 %v1760
  %2221 = vmatmul.bf16.gmra.mxu0 %v2184
  %v2222 = vpop.f32.mrf.mxu0
  %v2223 = vadd.f32 0.0, %v2222
  %v2224 = vpop.f32.mrf.mxu0
  %2225 = vdwg.mxu0
  %2226 = vmatpush.bf16.msra.mxu0 %v1789
  %2227 = vmatpush.bf16.msra.mxu0 %v1785
  %2228 = vmatpush.bf16.msra.mxu0 %v1781
  %2229 = vmatpush.bf16.msra.mxu0 %v1777
  %2230 = vmatpush.bf16.msra.mxu0 %v1773
  %2231 = vmatpush.bf16.msra.mxu0 %v1769
  %2232 = vmatpush.bf16.msra.mxu0 %v1765
  %2233 = vmatpush.bf16.msra.mxu0 %v1761
  %2234 = vmatmul.bf16.gmra.mxu0 %v2184
  %v2235 = vpop.f32.mrf.mxu0
  %v2236 = vadd.f32 0.0, %v2235
  %v2237 = vpop.f32.mrf.mxu0
  %2238 = vdwg.mxu0
  %v2239 = vadd.f32 %v1620, %v2197
  %v2240 = vadd.f32 %v1633, %v2210
  %v2241 = vadd.f32 %v1646, %v2223
  %v2242 = vadd.f32 %v1659, %v2236
  %v2243 = vxor.u32 %v2239, 2147483648
  %v2244 = vmul.f32 %v2243, 1.442695
  %v2245 = vpow.pop %v2244
  %v2246 = vadd.f32 %v2245, 1.0
  %v2247 = vrcp.pop %v2246
  %v2248 = vmul.f32 %v2246, %v2247
  %v2249 = vsub.f32 1.0, %v2248
  %v2250 = vmul.f32 %v2247, %v2249
  %v2251 = vadd.f32 %v2247, %v2250
  %vm2252 = vweird.f32 %v2246
  %vm2253 = vweird.f32 %v2247
  %vm2254 = vmor %vm2252, %vm2253
  %v2255 = vsel %vm2254, %v2247, %v2251
  %v2256 = vand.u32 2147483647, %v2246
  %vm2257 = vcmp.eq.f32.partialorder %v2256, 8.507059e+37
  %v2258 = vand.u32 %v2246, 2147483648
  %v2259 = vor.u32 1.1754944e-38, %v2258
  %v2260 = vsel %vm2257, %v2259, %v2255
  %v2261 = vmul.f32 1.0, %v2260
  %v2262 = vxor.u32 %v2240, 2147483648
  %v2263 = vmul.f32 %v2262, 1.442695
  %v2264 = vpow.pop %v2263
  %v2265 = vadd.f32 %v2264, 1.0
  %v2266 = vrcp.pop %v2265
  %v2267 = vmul.f32 %v2265, %v2266
  %v2268 = vsub.f32 1.0, %v2267
  %v2269 = vmul.f32 %v2266, %v2268
  %v2270 = vadd.f32 %v2266, %v2269
  %vm2271 = vweird.f32 %v2265
  %vm2272 = vweird.f32 %v2266
  %vm2273 = vmor %vm2271, %vm2272
  %v2274 = vsel %vm2273, %v2266, %v2270
  %v2275 = vand.u32 2147483647, %v2265
  %vm2276 = vcmp.eq.f32.partialorder %v2275, 8.507059e+37
  %v2277 = vand.u32 %v2265, 2147483648
  %v2278 = vor.u32 1.1754944e-38, %v2277
  %v2279 = vsel %vm2276, %v2278, %v2274
  %v2280 = vmul.f32 1.0, %v2279
  %v2281 = vtanh.pop %v2241
  %v2282 = vxor.u32 %v2242, 2147483648
  %v2283 = vmul.f32 %v2282, 1.442695
  %v2284 = vpow.pop %v2283
  %v2285 = vadd.f32 %v2284, 1.0
  %v2286 = vrcp.pop %v2285
  %v2287 = vmul.f32 %v2285, %v2286
  %v2288 = vsub.f32 1.0, %v2287
  %v2289 = vmul.f32 %v2286, %v2288
  %v2290 = vadd.f32 %v2286, %v2289
  %vm2291 = vweird.f32 %v2285
  %vm2292 = vweird.f32 %v2286
  %vm2293 = vmor %vm2291, %vm2292
  %v2294 = vsel %vm2293, %v2286, %v2290
  %v2295 = vand.u32 2147483647, %v2285
  %vm2296 = vcmp.eq.f32.partialorder %v2295, 8.507059e+37
  %v2297 = vand.u32 %v2285, 2147483648
  %v2298 = vor.u32 1.1754944e-38, %v2297
  %v2299 = vsel %vm2296, %v2298, %v2294
  %v2300 = vmul.f32 1.0, %v2299
  %v2301 = vmul.f32 %v2280, %v2181
  %v2302 = vmul.f32 %v2261, %v2281
  %v2303 = vadd.f32 %v2301, %v2302
  %v2304 = vtanh.pop %v2303
  %v2305 = vmul.f32 %v2300, %v2304
  %v2306 = vpack.c.bf16 %v2305, %v2305
  %s2307 = scalar_lea.vmem [#allocation2], 12
  %2308 = vst [vmem:[%s2307] sm:$0xf] %v2306
  %2309 = vmatpush.bf16.msra.mxu0 %v1786
  %2310 = vmatpush.bf16.msra.mxu0 %v1782
  %2311 = vmatpush.bf16.msra.mxu0 %v1778
  %2312 = vmatpush.bf16.msra.mxu0 %v1774
  %2313 = vmatpush.bf16.msra.mxu0 %v1770
  %2314 = vmatpush.bf16.msra.mxu0 %v1766
  %2315 = vmatpush.bf16.msra.mxu0 %v1762
  %2316 = vmatpush.bf16.msra.mxu0 %v1758
  %2317 = vmatmul.bf16.gmra.mxu0 %v2306
  %v2318 = vpop.f32.mrf.mxu0
  %v2319 = vadd.f32 0.0, %v2318
  %v2320 = vpop.f32.mrf.mxu0
  %2321 = vdwg.mxu0
  %2322 = vmatpush.bf16.msra.mxu0 %v1787
  %2323 = vmatpush.bf16.msra.mxu0 %v1783
  %2324 = vmatpush.bf16.msra.mxu0 %v1779
  %2325 = vmatpush.bf16.msra.mxu0 %v1775
  %2326 = vmatpush.bf16.msra.mxu0 %v1771
  %2327 = vmatpush.bf16.msra.mxu0 %v1767
  %2328 = vmatpush.bf16.msra.mxu0 %v1763
  %2329 = vmatpush.bf16.msra.mxu0 %v1759
  %2330 = vmatmul.bf16.gmra.mxu0 %v2306
  %v2331 = vpop.f32.mrf.mxu0
  %v2332 = vadd.f32 0.0, %v2331
  %v2333 = vpop.f32.mrf.mxu0
  %2334 = vdwg.mxu0
  %2335 = vmatpush.bf16.msra.mxu0 %v1788
  %2336 = vmatpush.bf16.msra.mxu0 %v1784
  %2337 = vmatpush.bf16.msra.mxu0 %v1780
  %2338 = vmatpush.bf16.msra.mxu0 %v1776
  %2339 = vmatpush.bf16.msra.mxu0 %v1772
  %2340 = vmatpush.bf16.msra.mxu0 %v1768
  %2341 = vmatpush.bf16.msra.mxu0 %v1764
  %2342 = vmatpush.bf16.msra.mxu0 %v1760
  %2343 = vmatmul.bf16.gmra.mxu0 %v2306
  %v2344 = vpop.f32.mrf.mxu0
  %v2345 = vadd.f32 0.0, %v2344
  %v2346 = vpop.f32.mrf.mxu0
  %2347 = vdwg.mxu0
  %2348 = vmatpush.bf16.msra.mxu0 %v1789
  %2349 = vmatpush.bf16.msra.mxu0 %v1785
  %2350 = vmatpush.bf16.msra.mxu0 %v1781
  %2351 = vmatpush.bf16.msra.mxu0 %v1777
  %2352 = vmatpush.bf16.msra.mxu0 %v1773
  %2353 = vmatpush.bf16.msra.mxu0 %v1769
  %2354 = vmatpush.bf16.msra.mxu0 %v1765
  %2355 = vmatpush.bf16.msra.mxu0 %v1761
  %2356 = vmatmul.bf16.gmra.mxu0 %v2306
  %v2357 = vpop.f32.mrf.mxu0
  %v2358 = vadd.f32 0.0, %v2357
  %v2359 = vpop.f32.mrf.mxu0
  %2360 = vdwg.mxu0
  %v2361 = vadd.f32 %v1620, %v2319
  %v2362 = vadd.f32 %v1633, %v2332
  %v2363 = vadd.f32 %v1646, %v2345
  %v2364 = vadd.f32 %v1659, %v2358
  %v2365 = vxor.u32 %v2361, 2147483648
  %v2366 = vmul.f32 %v2365, 1.442695
  %v2367 = vpow.pop %v2366
  %v2368 = vadd.f32 %v2367, 1.0
  %v2369 = vrcp.pop %v2368
  %v2370 = vmul.f32 %v2368, %v2369
  %v2371 = vsub.f32 1.0, %v2370
  %v2372 = vmul.f32 %v2369, %v2371
  %v2373 = vadd.f32 %v2369, %v2372
  %vm2374 = vweird.f32 %v2368
  %vm2375 = vweird.f32 %v2369
  %vm2376 = vmor %vm2374, %vm2375
  %v2377 = vsel %vm2376, %v2369, %v2373
  %v2378 = vand.u32 2147483647, %v2368
  %vm2379 = vcmp.eq.f32.partialorder %v2378, 8.507059e+37
  %v2380 = vand.u32 %v2368, 2147483648
  %v2381 = vor.u32 1.1754944e-38, %v2380
  %v2382 = vsel %vm2379, %v2381, %v2377
  %v2383 = vmul.f32 1.0, %v2382
  %v2384 = vxor.u32 %v2362, 2147483648
  %v2385 = vmul.f32 %v2384, 1.442695
  %v2386 = vpow.pop %v2385
  %v2387 = vadd.f32 %v2386, 1.0
  %v2388 = vrcp.pop %v2387
  %v2389 = vmul.f32 %v2387, %v2388
  %v2390 = vsub.f32 1.0, %v2389
  %v2391 = vmul.f32 %v2388, %v2390
  %v2392 = vadd.f32 %v2388, %v2391
  %vm2393 = vweird.f32 %v2387
  %vm2394 = vweird.f32 %v2388
  %vm2395 = vmor %vm2393, %vm2394
  %v2396 = vsel %vm2395, %v2388, %v2392
  %v2397 = vand.u32 2147483647, %v2387
  %vm2398 = vcmp.eq.f32.partialorder %v2397, 8.507059e+37
  %v2399 = vand.u32 %v2387, 2147483648
  %v2400 = vor.u32 1.1754944e-38, %v2399
  %v2401 = vsel %vm2398, %v2400, %v2396
  %v2402 = vmul.f32 1.0, %v2401
  %v2403 = vtanh.pop %v2363
  %v2404 = vxor.u32 %v2364, 2147483648
  %v2405 = vmul.f32 %v2404, 1.442695
  %v2406 = vpow.pop %v2405
  %v2407 = vadd.f32 %v2406, 1.0
  %v2408 = vrcp.pop %v2407
  %v2409 = vmul.f32 %v2407, %v2408
  %v2410 = vsub.f32 1.0, %v2409
  %v2411 = vmul.f32 %v2408, %v2410
  %v2412 = vadd.f32 %v2408, %v2411
  %vm2413 = vweird.f32 %v2407
  %vm2414 = vweird.f32 %v2408
  %vm2415 = vmor %vm2413, %vm2414
  %v2416 = vsel %vm2415, %v2408, %v2412
  %v2417 = vand.u32 2147483647, %v2407
  %vm2418 = vcmp.eq.f32.partialorder %v2417, 8.507059e+37
  %v2419 = vand.u32 %v2407, 2147483648
  %v2420 = vor.u32 1.1754944e-38, %v2419
  %v2421 = vsel %vm2418, %v2420, %v2416
  %v2422 = vmul.f32 1.0, %v2421
  %v2423 = vmul.f32 %v2402, %v2303
  %v2424 = vmul.f32 %v2383, %v2403
  %v2425 = vadd.f32 %v2423, %v2424
  %v2426 = vtanh.pop %v2425
  %v2427 = vmul.f32 %v2422, %v2426
  %v2428 = vpack.c.bf16 %v2427, %v2427
  %s2429 = scalar_lea.vmem [#allocation2], 16
  %2430 = vst [vmem:[%s2429] sm:$0xf] %v2428
  %2431 = vmatpush.bf16.msra.mxu0 %v1786
  %2432 = vmatpush.bf16.msra.mxu0 %v1782
  %2433 = vmatpush.bf16.msra.mxu0 %v1778
  %2434 = vmatpush.bf16.msra.mxu0 %v1774
  %2435 = vmatpush.bf16.msra.mxu0 %v1770
  %2436 = vmatpush.bf16.msra.mxu0 %v1766
  %2437 = vmatpush.bf16.msra.mxu0 %v1762
  %2438 = vmatpush.bf16.msra.mxu0 %v1758
  %2439 = vmatmul.bf16.gmra.mxu0 %v2428
  %v2440 = vpop.f32.mrf.mxu0
  %v2441 = vadd.f32 0.0, %v2440
  %v2442 = vpop.f32.mrf.mxu0
  %2443 = vdwg.mxu0
  %2444 = vmatpush.bf16.msra.mxu0 %v1787
  %2445 = vmatpush.bf16.msra.mxu0 %v1783
  %2446 = vmatpush.bf16.msra.mxu0 %v1779
  %2447 = vmatpush.bf16.msra.mxu0 %v1775
  %2448 = vmatpush.bf16.msra.mxu0 %v1771
  %2449 = vmatpush.bf16.msra.mxu0 %v1767
  %2450 = vmatpush.bf16.msra.mxu0 %v1763
  %2451 = vmatpush.bf16.msra.mxu0 %v1759
  %2452 = vmatmul.bf16.gmra.mxu0 %v2428
  %v2453 = vpop.f32.mrf.mxu0
  %v2454 = vadd.f32 0.0, %v2453
  %v2455 = vpop.f32.mrf.mxu0
  %2456 = vdwg.mxu0
  %2457 = vmatpush.bf16.msra.mxu0 %v1788
  %2458 = vmatpush.bf16.msra.mxu0 %v1784
  %2459 = vmatpush.bf16.msra.mxu0 %v1780
  %2460 = vmatpush.bf16.msra.mxu0 %v1776
  %2461 = vmatpush.bf16.msra.mxu0 %v1772
  %2462 = vmatpush.bf16.msra.mxu0 %v1768
  %2463 = vmatpush.bf16.msra.mxu0 %v1764
  %2464 = vmatpush.bf16.msra.mxu0 %v1760
  %2465 = vmatmul.bf16.gmra.mxu0 %v2428
  %v2466 = vpop.f32.mrf.mxu0
  %v2467 = vadd.f32 0.0, %v2466
  %v2468 = vpop.f32.mrf.mxu0
  %2469 = vdwg.mxu0
  %2470 = vmatpush.bf16.msra.mxu0 %v1789
  %2471 = vmatpush.bf16.msra.mxu0 %v1785
  %2472 = vmatpush.bf16.msra.mxu0 %v1781
  %2473 = vmatpush.bf16.msra.mxu0 %v1777
  %2474 = vmatpush.bf16.msra.mxu0 %v1773
  %2475 = vmatpush.bf16.msra.mxu0 %v1769
  %2476 = vmatpush.bf16.msra.mxu0 %v1765
  %2477 = vmatpush.bf16.msra.mxu0 %v1761
  %2478 = vmatmul.bf16.gmra.mxu0 %v2428
  %v2479 = vpop.f32.mrf.mxu0
  %v2480 = vadd.f32 0.0, %v2479
  %v2481 = vpop.f32.mrf.mxu0
  %2482 = vdwg.mxu0
  %v2483 = vadd.f32 %v1620, %v2441
  %v2484 = vadd.f32 %v1633, %v2454
  %v2485 = vadd.f32 %v1646, %v2467
  %v2486 = vadd.f32 %v1659, %v2480
  %v2487 = vxor.u32 %v2483, 2147483648
  %v2488 = vmul.f32 %v2487, 1.442695
  %v2489 = vpow.pop %v2488
  %v2490 = vadd.f32 %v2489, 1.0
  %v2491 = vrcp.pop %v2490
  %v2492 = vmul.f32 %v2490, %v2491
  %v2493 = vsub.f32 1.0, %v2492
  %v2494 = vmul.f32 %v2491, %v2493
  %v2495 = vadd.f32 %v2491, %v2494
  %vm2496 = vweird.f32 %v2490
  %vm2497 = vweird.f32 %v2491
  %vm2498 = vmor %vm2496, %vm2497
  %v2499 = vsel %vm2498, %v2491, %v2495
  %v2500 = vand.u32 2147483647, %v2490
  %vm2501 = vcmp.eq.f32.partialorder %v2500, 8.507059e+37
  %v2502 = vand.u32 %v2490, 2147483648
  %v2503 = vor.u32 1.1754944e-38, %v2502
  %v2504 = vsel %vm2501, %v2503, %v2499
  %v2505 = vmul.f32 1.0, %v2504
  %v2506 = vxor.u32 %v2484, 2147483648
  %v2507 = vmul.f32 %v2506, 1.442695
  %v2508 = vpow.pop %v2507
  %v2509 = vadd.f32 %v2508, 1.0
  %v2510 = vrcp.pop %v2509
  %v2511 = vmul.f32 %v2509, %v2510
  %v2512 = vsub.f32 1.0, %v2511
  %v2513 = vmul.f32 %v2510, %v2512
  %v2514 = vadd.f32 %v2510, %v2513
  %vm2515 = vweird.f32 %v2509
  %vm2516 = vweird.f32 %v2510
  %vm2517 = vmor %vm2515, %vm2516
  %v2518 = vsel %vm2517, %v2510, %v2514
  %v2519 = vand.u32 2147483647, %v2509
  %vm2520 = vcmp.eq.f32.partialorder %v2519, 8.507059e+37
  %v2521 = vand.u32 %v2509, 2147483648
  %v2522 = vor.u32 1.1754944e-38, %v2521
  %v2523 = vsel %vm2520, %v2522, %v2518
  %v2524 = vmul.f32 1.0, %v2523
  %v2525 = vtanh.pop %v2485
  %v2526 = vxor.u32 %v2486, 2147483648
  %v2527 = vmul.f32 %v2526, 1.442695
  %v2528 = vpow.pop %v2527
  %v2529 = vadd.f32 %v2528, 1.0
  %v2530 = vrcp.pop %v2529
  %v2531 = vmul.f32 %v2529, %v2530
  %v2532 = vsub.f32 1.0, %v2531
  %v2533 = vmul.f32 %v2530, %v2532
  %v2534 = vadd.f32 %v2530, %v2533
  %vm2535 = vweird.f32 %v2529
  %vm2536 = vweird.f32 %v2530
  %vm2537 = vmor %vm2535, %vm2536
  %v2538 = vsel %vm2537, %v2530, %v2534
  %v2539 = vand.u32 2147483647, %v2529
  %vm2540 = vcmp.eq.f32.partialorder %v2539, 8.507059e+37
  %v2541 = vand.u32 %v2529, 2147483648
  %v2542 = vor.u32 1.1754944e-38, %v2541
  %v2543 = vsel %vm2540, %v2542, %v2538
  %v2544 = vmul.f32 1.0, %v2543
  %v2545 = vmul.f32 %v2524, %v2425
  %v2546 = vmul.f32 %v2505, %v2525
  %v2547 = vadd.f32 %v2545, %v2546
  %v2548 = vtanh.pop %v2547
  %v2549 = vmul.f32 %v2544, %v2548
  %v2550 = vpack.c.bf16 %v2549, %v2549
  %s2551 = scalar_lea.vmem [#allocation2], 20
  %2552 = vst [vmem:[%s2551] sm:$0xf] %v2550
  %2553 = vmatpush.bf16.msra.mxu0 %v1786
  %2554 = vmatpush.bf16.msra.mxu0 %v1782
  %2555 = vmatpush.bf16.msra.mxu0 %v1778
  %2556 = vmatpush.bf16.msra.mxu0 %v1774
  %2557 = vmatpush.bf16.msra.mxu0 %v1770
  %2558 = vmatpush.bf16.msra.mxu0 %v1766
  %2559 = vmatpush.bf16.msra.mxu0 %v1762
  %2560 = vmatpush.bf16.msra.mxu0 %v1758
  %2561 = vmatmul.bf16.gmra.mxu0 %v2550
  %v2562 = vpop.f32.mrf.mxu0
  %v2563 = vadd.f32 0.0, %v2562
  %v2564 = vpop.f32.mrf.mxu0
  %2565 = vdwg.mxu0
  %2566 = vmatpush.bf16.msra.mxu0 %v1787
  %2567 = vmatpush.bf16.msra.mxu0 %v1783
  %2568 = vmatpush.bf16.msra.mxu0 %v1779
  %2569 = vmatpush.bf16.msra.mxu0 %v1775
  %2570 = vmatpush.bf16.msra.mxu0 %v1771
  %2571 = vmatpush.bf16.msra.mxu0 %v1767
  %2572 = vmatpush.bf16.msra.mxu0 %v1763
  %2573 = vmatpush.bf16.msra.mxu0 %v1759
  %2574 = vmatmul.bf16.gmra.mxu0 %v2550
  %v2575 = vpop.f32.mrf.mxu0
  %v2576 = vadd.f32 0.0, %v2575
  %v2577 = vpop.f32.mrf.mxu0
  %2578 = vdwg.mxu0
  %2579 = vmatpush.bf16.msra.mxu0 %v1788
  %2580 = vmatpush.bf16.msra.mxu0 %v1784
  %2581 = vmatpush.bf16.msra.mxu0 %v1780
  %2582 = vmatpush.bf16.msra.mxu0 %v1776
  %2583 = vmatpush.bf16.msra.mxu0 %v1772
  %2584 = vmatpush.bf16.msra.mxu0 %v1768
  %2585 = vmatpush.bf16.msra.mxu0 %v1764
  %2586 = vmatpush.bf16.msra.mxu0 %v1760
  %2587 = vmatmul.bf16.gmra.mxu0 %v2550
  %v2588 = vpop.f32.mrf.mxu0
  %v2589 = vadd.f32 0.0, %v2588
  %v2590 = vpop.f32.mrf.mxu0
  %2591 = vdwg.mxu0
  %2592 = vmatpush.bf16.msra.mxu0 %v1789
  %2593 = vmatpush.bf16.msra.mxu0 %v1785
  %2594 = vmatpush.bf16.msra.mxu0 %v1781
  %2595 = vmatpush.bf16.msra.mxu0 %v1777
  %2596 = vmatpush.bf16.msra.mxu0 %v1773
  %2597 = vmatpush.bf16.msra.mxu0 %v1769
  %2598 = vmatpush.bf16.msra.mxu0 %v1765
  %2599 = vmatpush.bf16.msra.mxu0 %v1761
  %2600 = vmatmul.bf16.gmra.mxu0 %v2550
  %v2601 = vpop.f32.mrf.mxu0
  %v2602 = vadd.f32 0.0, %v2601
  %v2603 = vpop.f32.mrf.mxu0
  %2604 = vdwg.mxu0
  %v2605 = vadd.f32 %v1620, %v2563
  %v2606 = vadd.f32 %v1633, %v2576
  %v2607 = vadd.f32 %v1646, %v2589
  %v2608 = vadd.f32 %v1659, %v2602
  %v2609 = vxor.u32 %v2605, 2147483648
  %v2610 = vmul.f32 %v2609, 1.442695
  %v2611 = vpow.pop %v2610
  %v2612 = vadd.f32 %v2611, 1.0
  %v2613 = vrcp.pop %v2612
  %v2614 = vmul.f32 %v2612, %v2613
  %v2615 = vsub.f32 1.0, %v2614
  %v2616 = vmul.f32 %v2613, %v2615
  %v2617 = vadd.f32 %v2613, %v2616
  %vm2618 = vweird.f32 %v2612
  %vm2619 = vweird.f32 %v2613
  %vm2620 = vmor %vm2618, %vm2619
  %v2621 = vsel %vm2620, %v2613, %v2617
  %v2622 = vand.u32 2147483647, %v2612
  %vm2623 = vcmp.eq.f32.partialorder %v2622, 8.507059e+37
  %v2624 = vand.u32 %v2612, 2147483648
  %v2625 = vor.u32 1.1754944e-38, %v2624
  %v2626 = vsel %vm2623, %v2625, %v2621
  %v2627 = vmul.f32 1.0, %v2626
  %v2628 = vxor.u32 %v2606, 2147483648
  %v2629 = vmul.f32 %v2628, 1.442695
  %v2630 = vpow.pop %v2629
  %v2631 = vadd.f32 %v2630, 1.0
  %v2632 = vrcp.pop %v2631
  %v2633 = vmul.f32 %v2631, %v2632
  %v2634 = vsub.f32 1.0, %v2633
  %v2635 = vmul.f32 %v2632, %v2634
  %v2636 = vadd.f32 %v2632, %v2635
  %vm2637 = vweird.f32 %v2631
  %vm2638 = vweird.f32 %v2632
  %vm2639 = vmor %vm2637, %vm2638
  %v2640 = vsel %vm2639, %v2632, %v2636
  %v2641 = vand.u32 2147483647, %v2631
  %vm2642 = vcmp.eq.f32.partialorder %v2641, 8.507059e+37
  %v2643 = vand.u32 %v2631, 2147483648
  %v2644 = vor.u32 1.1754944e-38, %v2643
  %v2645 = vsel %vm2642, %v2644, %v2640
  %v2646 = vmul.f32 1.0, %v2645
  %v2647 = vtanh.pop %v2607
  %v2648 = vxor.u32 %v2608, 2147483648
  %v2649 = vmul.f32 %v2648, 1.442695
  %v2650 = vpow.pop %v2649
  %v2651 = vadd.f32 %v2650, 1.0
  %v2652 = vrcp.pop %v2651
  %v2653 = vmul.f32 %v2651, %v2652
  %v2654 = vsub.f32 1.0, %v2653
  %v2655 = vmul.f32 %v2652, %v2654
  %v2656 = vadd.f32 %v2652, %v2655
  %vm2657 = vweird.f32 %v2651
  %vm2658 = vweird.f32 %v2652
  %vm2659 = vmor %vm2657, %vm2658
  %v2660 = vsel %vm2659, %v2652, %v2656
  %v2661 = vand.u32 2147483647, %v2651
  %vm2662 = vcmp.eq.f32.partialorder %v2661, 8.507059e+37
  %v2663 = vand.u32 %v2651, 2147483648
  %v2664 = vor.u32 1.1754944e-38, %v2663
  %v2665 = vsel %vm2662, %v2664, %v2660
  %v2666 = vmul.f32 1.0, %v2665
  %v2667 = vmul.f32 %v2646, %v2547
  %v2668 = vmul.f32 %v2627, %v2647
  %v2669 = vadd.f32 %v2667, %v2668
  %v2670 = vtanh.pop %v2669
  %v2671 = vmul.f32 %v2666, %v2670
  %v2672 = vpack.c.bf16 %v2671, %v2671
  %s2673 = scalar_lea.vmem [#allocation2], 24
  %2674 = vst [vmem:[%s2673] sm:$0xf] %v2672
  %2675 = vmatpush.bf16.msra.mxu0 %v1786
  %2676 = vmatpush.bf16.msra.mxu0 %v1782
  %2677 = vmatpush.bf16.msra.mxu0 %v1778
  %2678 = vmatpush.bf16.msra.mxu0 %v1774
  %2679 = vmatpush.bf16.msra.mxu0 %v1770
  %2680 = vmatpush.bf16.msra.mxu0 %v1766
  %2681 = vmatpush.bf16.msra.mxu0 %v1762
  %2682 = vmatpush.bf16.msra.mxu0 %v1758
  %2683 = vmatmul.bf16.gmra.mxu0 %v2672
  %v2684 = vpop.f32.mrf.mxu0
  %v2685 = vadd.f32 0.0, %v2684
  %v2686 = vpop.f32.mrf.mxu0
  %2687 = vdwg.mxu0
  %2688 = vmatpush.bf16.msra.mxu0 %v1787
  %2689 = vmatpush.bf16.msra.mxu0 %v1783
  %2690 = vmatpush.bf16.msra.mxu0 %v1779
  %2691 = vmatpush.bf16.msra.mxu0 %v1775
  %2692 = vmatpush.bf16.msra.mxu0 %v1771
  %2693 = vmatpush.bf16.msra.mxu0 %v1767
  %2694 = vmatpush.bf16.msra.mxu0 %v1763
  %2695 = vmatpush.bf16.msra.mxu0 %v1759
  %2696 = vmatmul.bf16.gmra.mxu0 %v2672
  %v2697 = vpop.f32.mrf.mxu0
  %v2698 = vadd.f32 0.0, %v2697
  %v2699 = vpop.f32.mrf.mxu0
  %2700 = vdwg.mxu0
  %2701 = vmatpush.bf16.msra.mxu0 %v1788
  %2702 = vmatpush.bf16.msra.mxu0 %v1784
  %2703 = vmatpush.bf16.msra.mxu0 %v1780
  %2704 = vmatpush.bf16.msra.mxu0 %v1776
  %2705 = vmatpush.bf16.msra.mxu0 %v1772
  %2706 = vmatpush.bf16.msra.mxu0 %v1768
  %2707 = vmatpush.bf16.msra.mxu0 %v1764
  %2708 = vmatpush.bf16.msra.mxu0 %v1760
  %2709 = vmatmul.bf16.gmra.mxu0 %v2672
  %v2710 = vpop.f32.mrf.mxu0
  %v2711 = vadd.f32 0.0, %v2710
  %v2712 = vpop.f32.mrf.mxu0
  %2713 = vdwg.mxu0
  %2714 = vmatpush.bf16.msra.mxu0 %v1789
  %2715 = vmatpush.bf16.msra.mxu0 %v1785
  %2716 = vmatpush.bf16.msra.mxu0 %v1781
  %2717 = vmatpush.bf16.msra.mxu0 %v1777
  %2718 = vmatpush.bf16.msra.mxu0 %v1773
  %2719 = vmatpush.bf16.msra.mxu0 %v1769
  %2720 = vmatpush.bf16.msra.mxu0 %v1765
  %2721 = vmatpush.bf16.msra.mxu0 %v1761
  %2722 = vmatmul.bf16.gmra.mxu0 %v2672
  %v2723 = vpop.f32.mrf.mxu0
  %v2724 = vadd.f32 0.0, %v2723
  %v2725 = vpop.f32.mrf.mxu0
  %2726 = vdwg.mxu0
  %v2727 = vadd.f32 %v1620, %v2685
  %v2728 = vadd.f32 %v1633, %v2698
  %v2729 = vadd.f32 %v1646, %v2711
  %v2730 = vadd.f32 %v1659, %v2724
  %v2731 = vxor.u32 %v2727, 2147483648
  %v2732 = vmul.f32 %v2731, 1.442695
  %v2733 = vpow.pop %v2732
  %v2734 = vadd.f32 %v2733, 1.0
  %v2735 = vrcp.pop %v2734
  %v2736 = vmul.f32 %v2734, %v2735
  %v2737 = vsub.f32 1.0, %v2736
  %v2738 = vmul.f32 %v2735, %v2737
  %v2739 = vadd.f32 %v2735, %v2738
  %vm2740 = vweird.f32 %v2734
  %vm2741 = vweird.f32 %v2735
  %vm2742 = vmor %vm2740, %vm2741
  %v2743 = vsel %vm2742, %v2735, %v2739
  %v2744 = vand.u32 2147483647, %v2734
  %vm2745 = vcmp.eq.f32.partialorder %v2744, 8.507059e+37
  %v2746 = vand.u32 %v2734, 2147483648
  %v2747 = vor.u32 1.1754944e-38, %v2746
  %v2748 = vsel %vm2745, %v2747, %v2743
  %v2749 = vmul.f32 1.0, %v2748
  %v2750 = vxor.u32 %v2728, 2147483648
  %v2751 = vmul.f32 %v2750, 1.442695
  %v2752 = vpow.pop %v2751
  %v2753 = vadd.f32 %v2752, 1.0
  %v2754 = vrcp.pop %v2753
  %v2755 = vmul.f32 %v2753, %v2754
  %v2756 = vsub.f32 1.0, %v2755
  %v2757 = vmul.f32 %v2754, %v2756
  %v2758 = vadd.f32 %v2754, %v2757
  %vm2759 = vweird.f32 %v2753
  %vm2760 = vweird.f32 %v2754
  %vm2761 = vmor %vm2759, %vm2760
  %v2762 = vsel %vm2761, %v2754, %v2758
  %v2763 = vand.u32 2147483647, %v2753
  %vm2764 = vcmp.eq.f32.partialorder %v2763, 8.507059e+37
  %v2765 = vand.u32 %v2753, 2147483648
  %v2766 = vor.u32 1.1754944e-38, %v2765
  %v2767 = vsel %vm2764, %v2766, %v2762
  %v2768 = vmul.f32 1.0, %v2767
  %v2769 = vtanh.pop %v2729
  %v2770 = vxor.u32 %v2730, 2147483648
  %v2771 = vmul.f32 %v2770, 1.442695
  %v2772 = vpow.pop %v2771
  %v2773 = vadd.f32 %v2772, 1.0
  %v2774 = vrcp.pop %v2773
  %v2775 = vmul.f32 %v2773, %v2774
  %v2776 = vsub.f32 1.0, %v2775
  %v2777 = vmul.f32 %v2774, %v2776
  %v2778 = vadd.f32 %v2774, %v2777
  %vm2779 = vweird.f32 %v2773
  %vm2780 = vweird.f32 %v2774
  %vm2781 = vmor %vm2779, %vm2780
  %v2782 = vsel %vm2781, %v2774, %v2778
  %v2783 = vand.u32 2147483647, %v2773
  %vm2784 = vcmp.eq.f32.partialorder %v2783, 8.507059e+37
  %v2785 = vand.u32 %v2773, 2147483648
  %v2786 = vor.u32 1.1754944e-38, %v2785
  %v2787 = vsel %vm2784, %v2786, %v2782
  %v2788 = vmul.f32 1.0, %v2787
  %v2789 = vmul.f32 %v2768, %v2669
  %v2790 = vmul.f32 %v2749, %v2769
  %v2791 = vadd.f32 %v2789, %v2790
  %v2792 = vtanh.pop %v2791
  %v2793 = vmul.f32 %v2788, %v2792
  %v2794 = vpack.c.bf16 %v2793, %v2793
  %s2795 = scalar_lea.vmem [#allocation2], 28
  %2796 = vst [vmem:[%s2795] sm:$0xf] %v2794
  %v2797 = vld [vmem:[#allocation2] sm:$0xf]
  %v2798 = vld [vmem:[#allocation2 + $0x4] sm:$0xf]
  %v2799 = vld [vmem:[#allocation2 + $0x8] sm:$0xf]
  %v2800 = vld [vmem:[#allocation2 + $0xc] sm:$0xf]
  %v2801 = vld [vmem:[#allocation2 + $0x10] sm:$0xf]
  %v2802 = vld [vmem:[#allocation2 + $0x14] sm:$0xf]
  %v2803 = vld [vmem:[#allocation2 + $0x18] sm:$0xf]
  %v2804 = vld [vmem:[#allocation2 + $0x1c] sm:$0xf]
  %v2805 = vld [vmem:[%s7] sm:$0xf]
  %v2806 = vld [vmem:[%s7 + $0x4] sm:$0xf]
  %v2807 = vld [vmem:[%s7 + $0x8] sm:$0xf]
  %v2808 = vld [vmem:[%s7 + $0xc] sm:$0xf]
  %v2809 = vld [vmem:[%s7 + $0x10] sm:$0xf]
  %v2810 = vld [vmem:[%s7 + $0x14] sm:$0xf]
  %v2811 = vld [vmem:[%s7 + $0x18] sm:$0xf]
  %v2812 = vld [vmem:[%s7 + $0x1c] sm:$0xf]
  %v2813 = vld [vmem:[%s7 + $0x20] sm:$0xf]
  %v2814 = vld [vmem:[%s7 + $0x24] sm:$0xf]
  %v2815 = vld [vmem:[%s7 + $0x28] sm:$0xf]
  %v2816 = vld [vmem:[%s7 + $0x2c] sm:$0xf]
  %v2817 = vld [vmem:[%s7 + $0x30] sm:$0xf]
  %v2818 = vld [vmem:[%s7 + $0x34] sm:$0xf]
  %v2819 = vld [vmem:[%s7 + $0x38] sm:$0xf]
  %v2820 = vld [vmem:[%s7 + $0x3c] sm:$0xf]
  %v2821 = vld [vmem:[%s8] sm:$0x1]
  %v2823 = vperm.slane %v2821, 0
  %v2833 = vunpack.c.l.b16 %v2797
  %v2834 = vunpack.c.l.b16 %v2798
  %v2835 = vunpack.c.l.b16 %v2799
  %v2836 = vunpack.c.l.b16 %v2800
  %v2837 = vunpack.c.l.b16 %v2801
  %v2838 = vunpack.c.l.b16 %v2802
  %v2839 = vunpack.c.l.b16 %v2803
  %v2840 = vunpack.c.l.b16 %v2804
  %v2841 = vpack.c.b16 %v2834, %v2833
  %v2842 = vpack.c.b16 %v2836, %v2835
  %v2843 = vpack.c.b16 %v2838, %v2837
  %v2844 = vpack.c.b16 %v2840, %v2839
  %v2865 = vunpack.c.l.b16 %v2805
  %v2866 = vunpack.c.l.b16 %v2806
  %v2867 = vunpack.c.l.b16 %v2807
  %v2868 = vunpack.c.l.b16 %v2808
  %v2869 = vunpack.c.l.b16 %v2809
  %v2870 = vunpack.c.l.b16 %v2810
  %v2871 = vunpack.c.l.b16 %v2811
  %v2872 = vunpack.c.l.b16 %v2812
  %v2873 = vunpack.c.l.b16 %v2813
  %v2874 = vunpack.c.l.b16 %v2814
  %v2875 = vunpack.c.l.b16 %v2815
  %v2876 = vunpack.c.l.b16 %v2816
  %v2877 = vunpack.c.l.b16 %v2817
  %v2878 = vunpack.c.l.b16 %v2818
  %v2879 = vunpack.c.l.b16 %v2819
  %v2880 = vunpack.c.l.b16 %v2820
  %v2881 = vpack.c.b16 %v2866, %v2865
  %v2882 = vpack.c.b16 %v2868, %v2867
  %v2883 = vpack.c.b16 %v2870, %v2869
  %v2884 = vpack.c.b16 %v2872, %v2871
  %v2885 = vpack.c.b16 %v2874, %v2873
  %v2886 = vpack.c.b16 %v2876, %v2875
  %v2887 = vpack.c.b16 %v2878, %v2877
  %v2888 = vpack.c.b16 %v2880, %v2879
  %2897 = vmatpush.bf16.msra.mxu0 %v2888
  %2898 = vmatpush.bf16.msra.mxu0 %v2887
  %2899 = vmatpush.bf16.msra.mxu0 %v2886
  %2900 = vmatpush.bf16.msra.mxu0 %v2885
  %2901 = vmatpush.bf16.msra.mxu0 %v2884
  %2902 = vmatpush.bf16.msra.mxu0 %v2883
  %2903 = vmatpush.bf16.msra.mxu0 %v2882
  %2904 = vmatpush.bf16.msra.mxu0 %v2881
  %2905 = vmatmul.bf16.gmra.mxu0 %v2841
  %v2906 = vpop.f32.mrf.mxu0
  %v2907 = vadd.f32 %v2823, %v2906
  %v2908 = vpop.f32.mrf.mxu0
  %v2909 = vadd.f32 %v2823, %v2908
  %2910 = vmatmul.bf16.gmra.mxu0 %v2842
  %v2911 = vpop.f32.mrf.mxu0
  %v2912 = vadd.f32 %v2823, %v2911
  %v2913 = vpop.f32.mrf.mxu0
  %v2914 = vadd.f32 %v2823, %v2913
  %2915 = vmatmul.bf16.gmra.mxu0 %v2843
  %v2916 = vpop.f32.mrf.mxu0
  %v2917 = vadd.f32 %v2823, %v2916
  %v2918 = vpop.f32.mrf.mxu0
  %v2919 = vadd.f32 %v2823, %v2918
  %2920 = vmatmul.bf16.gmra.mxu0 %v2844
  %v2921 = vpop.f32.mrf.mxu0
  %v2922 = vadd.f32 %v2823, %v2921
  %v2923 = vpop.f32.mrf.mxu0
  %v2924 = vadd.f32 %v2823, %v2923
  %2925 = vdwg.mxu0
  %v2926 = vxor.u32 %v2907, 2147483648
  %v2927 = vxor.u32 %v2909, 2147483648
  %v2928 = vxor.u32 %v2912, 2147483648
  %v2929 = vxor.u32 %v2914, 2147483648
  %v2930 = vxor.u32 %v2917, 2147483648
  %v2931 = vxor.u32 %v2919, 2147483648
  %v2932 = vxor.u32 %v2922, 2147483648
  %v2933 = vxor.u32 %v2924, 2147483648
  %v2934 = vmul.f32 %v2926, 1.442695
  %v2935 = vpow.pop %v2934
  %v2936 = vmul.f32 %v2927, 1.442695
  %v2937 = vpow.pop %v2936
  %v2938 = vmul.f32 %v2928, 1.442695
  %v2939 = vpow.pop %v2938
  %v2940 = vmul.f32 %v2929, 1.442695
  %v2941 = vpow.pop %v2940
  %v2942 = vmul.f32 %v2930, 1.442695
  %v2943 = vpow.pop %v2942
  %v2944 = vmul.f32 %v2931, 1.442695
  %v2945 = vpow.pop %v2944
  %v2946 = vmul.f32 %v2932, 1.442695
  %v2947 = vpow.pop %v2946
  %v2948 = vmul.f32 %v2933, 1.442695
  %v2949 = vpow.pop %v2948
  %v2950 = vadd.f32 %v2935, 1.0
  %v2951 = vadd.f32 %v2937, 1.0
  %v2952 = vadd.f32 %v2939, 1.0
  %v2953 = vadd.f32 %v2941, 1.0
  %v2954 = vadd.f32 %v2943, 1.0
  %v2955 = vadd.f32 %v2945, 1.0
  %v2956 = vadd.f32 %v2947, 1.0
  %v2957 = vadd.f32 %v2949, 1.0
  %v2958 = vrcp.pop %v2950
  %v2959 = vmul.f32 %v2950, %v2958
  %v2960 = vsub.f32 1.0, %v2959
  %v2961 = vmul.f32 %v2958, %v2960
  %v2962 = vadd.f32 %v2958, %v2961
  %vm2963 = vweird.f32 %v2950
  %vm2964 = vweird.f32 %v2958
  %vm2965 = vmor %vm2963, %vm2964
  %v2966 = vsel %vm2965, %v2958, %v2962
  %v2967 = vand.u32 2147483647, %v2950
  %vm2968 = vcmp.eq.f32.partialorder %v2967, 8.507059e+37
  %v2969 = vand.u32 %v2950, 2147483648
  %v2970 = vor.u32 1.1754944e-38, %v2969
  %v2971 = vsel %vm2968, %v2970, %v2966
  %v2972 = vmul.f32 1.0, %v2971
  %v2973 = vrcp.pop %v2951
  %v2974 = vmul.f32 %v2951, %v2973
  %v2975 = vsub.f32 1.0, %v2974
  %v2976 = vmul.f32 %v2973, %v2975
  %v2977 = vadd.f32 %v2973, %v2976
  %vm2978 = vweird.f32 %v2951
  %vm2979 = vweird.f32 %v2973
  %vm2980 = vmor %vm2978, %vm2979
  %v2981 = vsel %vm2980, %v2973, %v2977
  %v2982 = vand.u32 2147483647, %v2951
  %vm2983 = vcmp.eq.f32.partialorder %v2982, 8.507059e+37
  %v2984 = vand.u32 %v2951, 2147483648
  %v2985 = vor.u32 1.1754944e-38, %v2984
  %v2986 = vsel %vm2983, %v2985, %v2981
  %v2987 = vmul.f32 1.0, %v2986
  %v2988 = vrcp.pop %v2952
  %v2989 = vmul.f32 %v2952, %v2988
  %v2990 = vsub.f32 1.0, %v2989
  %v2991 = vmul.f32 %v2988, %v2990
  %v2992 = vadd.f32 %v2988, %v2991
  %vm2993 = vweird.f32 %v2952
  %vm2994 = vweird.f32 %v2988
  %vm2995 = vmor %vm2993, %vm2994
  %v2996 = vsel %vm2995, %v2988, %v2992
  %v2997 = vand.u32 2147483647, %v2952
  %vm2998 = vcmp.eq.f32.partialorder %v2997, 8.507059e+37
  %v2999 = vand.u32 %v2952, 2147483648
  %v3000 = vor.u32 1.1754944e-38, %v2999
  %v3001 = vsel %vm2998, %v3000, %v2996
  %v3002 = vmul.f32 1.0, %v3001
  %v3003 = vrcp.pop %v2953
  %v3004 = vmul.f32 %v2953, %v3003
  %v3005 = vsub.f32 1.0, %v3004
  %v3006 = vmul.f32 %v3003, %v3005
  %v3007 = vadd.f32 %v3003, %v3006
  %vm3008 = vweird.f32 %v2953
  %vm3009 = vweird.f32 %v3003
  %vm3010 = vmor %vm3008, %vm3009
  %v3011 = vsel %vm3010, %v3003, %v3007
  %v3012 = vand.u32 2147483647, %v2953
  %vm3013 = vcmp.eq.f32.partialorder %v3012, 8.507059e+37
  %v3014 = vand.u32 %v2953, 2147483648
  %v3015 = vor.u32 1.1754944e-38, %v3014
  %v3016 = vsel %vm3013, %v3015, %v3011
  %v3017 = vmul.f32 1.0, %v3016
  %v3018 = vrcp.pop %v2954
  %v3019 = vmul.f32 %v2954, %v3018
  %v3020 = vsub.f32 1.0, %v3019
  %v3021 = vmul.f32 %v3018, %v3020
  %v3022 = vadd.f32 %v3018, %v3021
  %vm3023 = vweird.f32 %v2954
  %vm3024 = vweird.f32 %v3018
  %vm3025 = vmor %vm3023, %vm3024
  %v3026 = vsel %vm3025, %v3018, %v3022
  %v3027 = vand.u32 2147483647, %v2954
  %vm3028 = vcmp.eq.f32.partialorder %v3027, 8.507059e+37
  %v3029 = vand.u32 %v2954, 2147483648
  %v3030 = vor.u32 1.1754944e-38, %v3029
  %v3031 = vsel %vm3028, %v3030, %v3026
  %v3032 = vmul.f32 1.0, %v3031
  %v3033 = vrcp.pop %v2955
  %v3034 = vmul.f32 %v2955, %v3033
  %v3035 = vsub.f32 1.0, %v3034
  %v3036 = vmul.f32 %v3033, %v3035
  %v3037 = vadd.f32 %v3033, %v3036
  %vm3038 = vweird.f32 %v2955
  %vm3039 = vweird.f32 %v3033
  %vm3040 = vmor %vm3038, %vm3039
  %v3041 = vsel %vm3040, %v3033, %v3037
  %v3042 = vand.u32 2147483647, %v2955
  %vm3043 = vcmp.eq.f32.partialorder %v3042, 8.507059e+37
  %v3044 = vand.u32 %v2955, 2147483648
  %v3045 = vor.u32 1.1754944e-38, %v3044
  %v3046 = vsel %vm3043, %v3045, %v3041
  %v3047 = vmul.f32 1.0, %v3046
  %v3048 = vrcp.pop %v2956
  %v3049 = vmul.f32 %v2956, %v3048
  %v3050 = vsub.f32 1.0, %v3049
  %v3051 = vmul.f32 %v3048, %v3050
  %v3052 = vadd.f32 %v3048, %v3051
  %vm3053 = vweird.f32 %v2956
  %vm3054 = vweird.f32 %v3048
  %vm3055 = vmor %vm3053, %vm3054
  %v3056 = vsel %vm3055, %v3048, %v3052
  %v3057 = vand.u32 2147483647, %v2956
  %vm3058 = vcmp.eq.f32.partialorder %v3057, 8.507059e+37
  %v3059 = vand.u32 %v2956, 2147483648
  %v3060 = vor.u32 1.1754944e-38, %v3059
  %v3061 = vsel %vm3058, %v3060, %v3056
  %v3062 = vmul.f32 1.0, %v3061
  %v3063 = vrcp.pop %v2957
  %v3064 = vmul.f32 %v2957, %v3063
  %v3065 = vsub.f32 1.0, %v3064
  %v3066 = vmul.f32 %v3063, %v3065
  %v3067 = vadd.f32 %v3063, %v3066
  %vm3068 = vweird.f32 %v2957
  %vm3069 = vweird.f32 %v3063
  %vm3070 = vmor %vm3068, %vm3069
  %v3071 = vsel %vm3070, %v3063, %v3067
  %v3072 = vand.u32 2147483647, %v2957
  %vm3073 = vcmp.eq.f32.partialorder %v3072, 8.507059e+37
  %v3074 = vand.u32 %v2957, 2147483648
  %v3075 = vor.u32 1.1754944e-38, %v3074
  %v3076 = vsel %vm3073, %v3075, %v3071
  %v3077 = vmul.f32 1.0, %v3076
  %3078 = vst [vmem:[%s9] sm:$0xff] %v2972
  %3079 = vst [vmem:[%s9 + $0x8] sm:$0xff] %v2987
  %3080 = vst [vmem:[%s9 + $0x10] sm:$0xff] %v3002
  %3081 = vst [vmem:[%s9 + $0x18] sm:$0xff] %v3017
  %3082 = vst [vmem:[%s9 + $0x20] sm:$0xff] %v3032
  %3083 = vst [vmem:[%s9 + $0x28] sm:$0xff] %v3047
  %3084 = vst [vmem:[%s9 + $0x30] sm:$0xff] %v3062
  %3085 = vst [vmem:[%s9 + $0x38] sm:$0xff] %v3077
  // Predicated region
  $region38: #{lstm_ae_forward.1} parent=0 // pred_check
    _
  $region39: #{lstm_ae_forward.1} parent=0 // pred_check_branch
    %3087 = sbr.rel (0) target = $region41
  $region40: #{lstm_ae_forward.1} parent=0 // pred_region
    _
  $region41: #{lstm_ae_forward.1} parent=0 // pred_fallthru
    _
  // Predicated region
  $region42: #{lstm_ae_forward.1} parent=0 // pred_check
    _
  $region43: #{lstm_ae_forward.1} parent=0 // pred_check_branch
    %3089 = sbr.rel (0) target = $region45
  $region44: #{lstm_ae_forward.1} parent=0 // pred_region
    _
  $region45: #{lstm_ae_forward.1} parent=0 // pred_fallthru
    _

</llo_original>
